<compile_context>
chip_gen: v7x
topology: tpu7x:2x2x1
jax: 0.10.0
libtpu: 0.0.40
codegen_flags: <defaults>
</compile_context>

<pallas_src>
import functools
import numpy as np
import jax
import jax.numpy as jnp
from jax.experimental import pallas as pl
from jax.experimental.pallas import tpu as pltpu


def _round_up(a, b):
    return ((a + b - 1) // b) * b


def _conv_bias_elu_kernel(x_ref, w_ref, b_ref, o_ref, *,
                          toh, ow, kh_n, kw_n, stride, hi_precision):
    """One grid step: `toh` output rows of one image, conv + bias + ELU.

    x_ref : (1, Hp, Wp, C)         whole zero-padded NHWC image (reused across
                                   all row tiles of this image -- no re-DMA)
    w_ref : (KH, KW, C, Cout_pad)  full conv weight, resident in VMEM
    b_ref : (1, Cout_pad)          bias (f32); padded lanes are zero
    o_ref : (1, toh, ow, Cout_pad)
    """
    t = pl.program_id(1)
    bias = b_ref[...].astype(jnp.float32)            # (1, Cout_pad), hoisted
    cout_p = o_ref.shape[-1]

    for oh in range(toh):                             # static unroll (small)
        acc = jnp.zeros((ow, cout_p), jnp.float32)
        out_row = t * toh + oh
        for kh in range(kh_n):
            in_row = out_row * stride + kh            # dynamic scalar row index
            for kw in range(kw_n):
                if stride == 1:
                    cols = pl.ds(kw, ow)
                else:
                    cols = pl.ds(kw, ow, stride)
                lhs = x_ref[0, in_row, cols, :]       # (ow, C)
                rhs = w_ref[kh, kw]                   # (C, Cout_pad)
                if hi_precision:
                    acc += jnp.dot(lhs, rhs,
                                   preferred_element_type=jnp.float32,
                                   precision=jax.lax.Precision.HIGHEST)
                else:
                    acc += jnp.dot(lhs, rhs,
                                   preferred_element_type=jnp.float32)
        y = acc + bias                                # f32 epilogue
        # ELU(alpha=1): x if x > 0 else exp(x) - 1   (exp goes to the EUP slot)
        neg = jnp.exp(jnp.minimum(y, 0.0)) - 1.0
        o_ref[0, oh] = jnp.where(y > 0.0, y, neg).astype(o_ref.dtype)


def basic_conv2d(x, weight, bias, stride, padding, *,
                 rows_per_step=8, compute_dtype=jnp.bfloat16, out_dtype=None):
    """Conv2d(bias=True) + ELU matching nn.Conv2d/nn.ELU semantics (NCHW in/out)."""
    N, C, H, W = x.shape
    Cout, Cin, KH, KW = weight.shape
    assert Cin == C
    OH = (H + 2 * padding - KH) // stride + 1
    OW = (W + 2 * padding - KW) // stride + 1

    cdt = compute_dtype
    odt = out_dtype if out_dtype is not None else x.dtype
    hi_precision = np.dtype(cdt) == np.dtype(np.float32)

    # Pad only to small hardware granules (no tile-multiple padding).
    Cout_pad = _round_up(Cout, 128)                  # lane-dense, unmasked stores
    toh = max(1, min(rows_per_step, OH))
    OH_pad = _round_up(OH, toh)
    OW_pad = _round_up(OW, 8)
    # Padded-input extent so padded output rows/cols still read in-bounds zeros.
    Hp = max((OH_pad - 1) * stride + KH, H + 2 * padding)
    Wp = max((OW_pad - 1) * stride + KW, W + 2 * padding)

    # NCHW -> NHWC + spatial zero-pad (1x input pass; no im2col materialization).
    x_nhwc = jnp.transpose(x, (0, 2, 3, 1))
    xp = jnp.pad(x_nhwc, ((0, 0),
                          (padding, Hp - H - padding),
                          (padding, Wp - W - padding),
                          (0, 0))).astype(cdt)

    # PyTorch (Cout, Cin, KH, KW) -> (KH, KW, C, Cout_pad); padded channels zero.
    w4 = jnp.transpose(weight, (2, 3, 1, 0))
    w4 = jnp.pad(w4, ((0, 0), (0, 0), (0, 0), (0, Cout_pad - Cout))).astype(cdt)
    b2 = jnp.pad(bias.astype(jnp.float32).reshape(1, Cout),
                 ((0, 0), (0, Cout_pad - Cout)))

    grid = (N, OH_pad // toh)

    kernel = functools.partial(_conv_bias_elu_kernel, toh=toh, ow=OW_pad,
                               kh_n=KH, kw_n=KW, stride=stride,
                               hi_precision=hi_precision)

    in_bytes = int(np.dtype(cdt).itemsize)
    out_bytes = int(np.dtype(odt).itemsize)
    cost = pl.CostEstimate(
        flops=2 * N * OH_pad * OW_pad * Cout_pad * C * KH * KW,
        transcendentals=N * OH_pad * OW_pad * Cout_pad,
        bytes_accessed=(xp.size * in_bytes + w4.size * in_bytes + b2.size * 4
                        + N * OH_pad * OW_pad * Cout_pad * out_bytes),
    )

    # Double-buffered image + weight + bias + output tile.  Cap well below v7x's
    # 64 MiB physical VMEM; plenty of headroom on v5e/v6e (128 MiB).
    vmem_need = 2 * (Hp * Wp * C * in_bytes
                     + KH * KW * C * Cout_pad * in_bytes
                     + Cout_pad * 4
                     + toh * OW_pad * Cout_pad * out_bytes)
    vmem_limit = int(min(max(vmem_need + (8 << 20), 32 << 20), 56 << 20))

    out = pl.pallas_call(
        kernel,
        out_shape=jax.ShapeDtypeStruct((N, OH_pad, OW_pad, Cout_pad), odt),
        grid_spec=pltpu.PrefetchScalarGridSpec(
            num_scalar_prefetch=0,
            grid=grid,
            in_specs=[
                # Whole padded image; block index depends only on n, so it is
                # fetched once per image and reused across row tiles.
                pl.BlockSpec((1, Hp, Wp, C), lambda n, t: (n, 0, 0, 0)),
                # Full weight / bias resident in VMEM (constant index map).
                pl.BlockSpec((KH, KW, C, Cout_pad), lambda n, t: (0, 0, 0, 0)),
                pl.BlockSpec((1, Cout_pad), lambda n, t: (0, 0)),
            ],
            out_specs=pl.BlockSpec((1, toh, OW_pad, Cout_pad),
                                   lambda n, t: (n, t, 0, 0)),
        ),
        compiler_params=pltpu.CompilerParams(
            dimension_semantics=("parallel", "parallel"),
            vmem_limit_bytes=vmem_limit,
        ),
        cost_estimate=cost,
    )(xp, w4, b2)

    # Strip row/col/channel padding, NHWC -> NCHW to match the PyTorch module.
    return out[:, :OH, :OW, :Cout].transpose(0, 3, 1, 2)


if __name__ == "__main__":
    # BasicConv2d(in_planes=4, out_planes=8, kernel_size=3, stride=1, padding=1)
    in_planes, out_planes, kernel_size, stride, padding = 4, 8, 3, 1, 1
    N, H, W = 2, 16, 16

    key = jax.random.PRNGKey(0)
    kx, kw_, kb = jax.random.split(key, 3)

    x = jax.random.normal(kx, (N, in_planes, H, W), dtype=jnp.float32)
    fan_in = in_planes * kernel_size * kernel_size
    bound = 1.0 / (fan_in ** 0.5)
    weight = jax.random.uniform(
        kw_, (out_planes, in_planes, kernel_size, kernel_size),
        minval=-bound, maxval=bound, dtype=jnp.float32)
    bias = jax.random.uniform(
        kb, (out_planes,), minval=-bound, maxval=bound, dtype=jnp.float32)

    # Reference: XLA conv (HIGHEST precision) + bias + ELU, matching torch.nn.ELU.
    ref = jax.lax.conv_general_dilated(
        x, weight, window_strides=(stride, stride),
        padding=[(padding, padding), (padding, padding)],
        dimension_numbers=("NCHW", "OIHW", "NCHW"),
        precision=jax.lax.Precision.HIGHEST)
    ref = ref + bias.reshape(1, out_planes, 1, 1)
    ref = jnp.where(ref > 0.0, ref, jnp.expm1(ref))

    # Default perf configuration: bf16 operands, f32 accumulation + f32 epilogue.
    y = jax.block_until_ready(basic_conv2d(x, weight, bias, stride, padding))
    assert y.shape == (N, out_planes, H, W)
    assert jnp.max(jnp.abs(y - ref)) < 5e-2

    # Full-f32 path (precision=HIGHEST on the MXU) for a tight numerical check.
    y32 = jax.block_until_ready(
        basic_conv2d(x, weight, bias, stride, padding,
                     compute_dtype=jnp.float32))
    assert jnp.max(jnp.abs(y32 - ref)) < 1e-3

    print("KERNEL_OK")
</pallas_src>

<mosaic_0001>
module attributes {stable_mosaic.version = 11 : i64} {
  func.func @_conv_bias_elu_kernel(%arg0: i32, %arg1: i32, %arg2: memref<1x18x18x4xbf16, #tpu.memory_space<vmem>>, %arg3: memref<3x3x4x128xbf16, #tpu.memory_space<vmem>>, %arg4: memref<1x128xf32, #tpu.memory_space<vmem>>, %arg5: memref<1x8x16x128xf32, #tpu.memory_space<vmem>>) attributes {dimension_semantics = [#tpu.dimension_semantics<parallel>, #tpu.dimension_semantics<parallel>], iteration_bounds = array<i64: 2, 2>, scalar_prefetch = 0 : i64, scratch_operands = 0 : i64, tpu.core_type = #tpu.core_type<tc>, window_params = [{transform_indices = @transform_0, window_bounds = array<i64: 1, 18, 18, 4>}, {pipeline_mode = #tpu.pipeline_mode<synchronous>, transform_indices = @transform_1, window_bounds = array<i64: 3, 3, 4, 128>}, {pipeline_mode = #tpu.pipeline_mode<synchronous>, transform_indices = @transform_2, window_bounds = array<i64: 1, 128>}, {transform_indices = @transform_3, window_bounds = array<i64: 1, 8, 16, 128>}]} {
    %c0 = arith.constant 0 : index
    %c0_0 = arith.constant 0 : index
    %0 = vector.load %arg4[%c0, %c0_0] : memref<1x128xf32, #tpu.memory_space<vmem>>, vector<1x128xf32>
    %cst = arith.constant 0.000000e+00 : f32
    %1 = vector.broadcast %cst : f32 to vector<16x128xf32>
    %c8_i32 = arith.constant 8 : i32
    %2 = arith.muli %arg1, %c8_i32 : i32
    %c0_i32 = arith.constant 0 : i32
    %3 = arith.addi %2, %c0_i32 : i32
    %c1_i32 = arith.constant 1 : i32
    %4 = arith.muli %3, %c1_i32 : i32
    %c0_i32_1 = arith.constant 0 : i32
    %5 = arith.addi %4, %c0_i32_1 : i32
    %c0_2 = arith.constant 0 : index
    %6 = arith.index_cast %5 : i32 to index
    %c0_3 = arith.constant 0 : index
    %c0_4 = arith.constant 0 : index
    %7 = vector.load %arg2[%c0_2, %6, %c0_3, %c0_4] : memref<1x18x18x4xbf16, #tpu.memory_space<vmem>>, vector<1x1x16x4xbf16>
    %8 = vector.shape_cast %7 : vector<1x1x16x4xbf16> to vector<16x4xbf16>
    %c0_5 = arith.constant 0 : index
    %c0_6 = arith.constant 0 : index
    %c0_7 = arith.constant 0 : index
    %c0_8 = arith.constant 0 : index
    %9 = vector.load %arg3[%c0_5, %c0_6, %c0_7, %c0_8] : memref<3x3x4x128xbf16, #tpu.memory_space<vmem>>, vector<1x1x4x128xbf16>
    %10 = vector.shape_cast %9 : vector<1x1x4x128xbf16> to vector<4x128xbf16>
    %cst_9 = arith.constant dense<0.000000e+00> : vector<16x128xf32>
    %11 = tpu.matmul %8, %10, %cst_9 {dimension_numbers = #tpu.dot_dimension_numbers<[1], [0], [0], [1], [0, 0, 1, 1], [], []>} : vector<16x4xbf16>, vector<4x128xbf16>, vector<16x128xf32> -> vector<16x128xf32>
    %12 = arith.addf %1, %11 : vector<16x128xf32>
    %c0_10 = arith.constant 0 : index
    %13 = arith.index_cast %5 : i32 to index
    %c1 = arith.constant 1 : index
    %c0_11 = arith.constant 0 : index
    %14 = vector.load %arg2[%c0_10, %13, %c1, %c0_11] : memref<1x18x18x4xbf16, #tpu.memory_space<vmem>>, vector<1x1x16x4xbf16>
    %15 = vector.shape_cast %14 : vector<1x1x16x4xbf16> to vector<16x4xbf16>
    %c0_12 = arith.constant 0 : index
    %c1_13 = arith.constant 1 : index
    %c0_14 = arith.constant 0 : index
    %c0_15 = arith.constant 0 : index
    %16 = vector.load %arg3[%c0_12, %c1_13, %c0_14, %c0_15] : memref<3x3x4x128xbf16, #tpu.memory_space<vmem>>, vector<1x1x4x128xbf16>
    %17 = vector.shape_cast %16 : vector<1x1x4x128xbf16> to vector<4x128xbf16>
    %cst_16 = arith.constant dense<0.000000e+00> : vector<16x128xf32>
    %18 = tpu.matmul %15, %17, %cst_16 {dimension_numbers = #tpu.dot_dimension_numbers<[1], [0], [0], [1], [0, 0, 1, 1], [], []>} : vector<16x4xbf16>, vector<4x128xbf16>, vector<16x128xf32> -> vector<16x128xf32>
    %19 = arith.addf %12, %18 : vector<16x128xf32>
    %c0_17 = arith.constant 0 : index
    %20 = arith.index_cast %5 : i32 to index
    %c2 = arith.constant 2 : index
    %c0_18 = arith.constant 0 : index
    %21 = vector.load %arg2[%c0_17, %20, %c2, %c0_18] : memref<1x18x18x4xbf16, #tpu.memory_space<vmem>>, vector<1x1x16x4xbf16>
    %22 = vector.shape_cast %21 : vector<1x1x16x4xbf16> to vector<16x4xbf16>
    %c0_19 = arith.constant 0 : index
    %c2_20 = arith.constant 2 : index
    %c0_21 = arith.constant 0 : index
    %c0_22 = arith.constant 0 : index
    %23 = vector.load %arg3[%c0_19, %c2_20, %c0_21, %c0_22] : memref<3x3x4x128xbf16, #tpu.memory_space<vmem>>, vector<1x1x4x128xbf16>
    %24 = vector.shape_cast %23 : vector<1x1x4x128xbf16> to vector<4x128xbf16>
    %cst_23 = arith.constant dense<0.000000e+00> : vector<16x128xf32>
    %25 = tpu.matmul %22, %24, %cst_23 {dimension_numbers = #tpu.dot_dimension_numbers<[1], [0], [0], [1], [0, 0, 1, 1], [], []>} : vector<16x4xbf16>, vector<4x128xbf16>, vector<16x128xf32> -> vector<16x128xf32>
    %26 = arith.addf %19, %25 : vector<16x128xf32>
    %c1_i32_24 = arith.constant 1 : i32
    %27 = arith.muli %3, %c1_i32_24 : i32
    %c1_i32_25 = arith.constant 1 : i32
    %28 = arith.addi %27, %c1_i32_25 : i32
    %c0_26 = arith.constant 0 : index
    %29 = arith.index_cast %28 : i32 to index
    %c0_27 = arith.constant 0 : index
    %c0_28 = arith.constant 0 : index
    %30 = vector.load %arg2[%c0_26, %29, %c0_27, %c0_28] : memref<1x18x18x4xbf16, #tpu.memory_space<vmem>>, vector<1x1x16x4xbf16>
    %31 = vector.shape_cast %30 : vector<1x1x16x4xbf16> to vector<16x4xbf16>
    %c1_29 = arith.constant 1 : index
    %c0_30 = arith.constant 0 : index
    %c0_31 = arith.constant 0 : index
    %c0_32 = arith.constant 0 : index
    %32 = vector.load %arg3[%c1_29, %c0_30, %c0_31, %c0_32] : memref<3x3x4x128xbf16, #tpu.memory_space<vmem>>, vector<1x1x4x128xbf16>
    %33 = vector.shape_cast %32 : vector<1x1x4x128xbf16> to vector<4x128xbf16>
    %cst_33 = arith.constant dense<0.000000e+00> : vector<16x128xf32>
    %34 = tpu.matmul %31, %33, %cst_33 {dimension_numbers = #tpu.dot_dimension_numbers<[1], [0], [0], [1], [0, 0, 1, 1], [], []>} : vector<16x4xbf16>, vector<4x128xbf16>, vector<16x128xf32> -> vector<16x128xf32>
    %35 = arith.addf %26, %34 : vector<16x128xf32>
    %c0_34 = arith.constant 0 : index
    %36 = arith.index_cast %28 : i32 to index
    %c1_35 = arith.constant 1 : index
    %c0_36 = arith.constant 0 : index
    %37 = vector.load %arg2[%c0_34, %36, %c1_35, %c0_36] : memref<1x18x18x4xbf16, #tpu.memory_space<vmem>>, vector<1x1x16x4xbf16>
    %38 = vector.shape_cast %37 : vector<1x1x16x4xbf16> to vector<16x4xbf16>
    %c1_37 = arith.constant 1 : index
    %c1_38 = arith.constant 1 : index
    %c0_39 = arith.constant 0 : index
    %c0_40 = arith.constant 0 : index
    %39 = vector.load %arg3[%c1_37, %c1_38, %c0_39, %c0_40] : memref<3x3x4x128xbf16, #tpu.memory_space<vmem>>, vector<1x1x4x128xbf16>
    %40 = vector.shape_cast %39 : vector<1x1x4x128xbf16> to vector<4x128xbf16>
    %cst_41 = arith.constant dense<0.000000e+00> : vector<16x128xf32>
    %41 = tpu.matmul %38, %40, %cst_41 {dimension_numbers = #tpu.dot_dimension_numbers<[1], [0], [0], [1], [0, 0, 1, 1], [], []>} : vector<16x4xbf16>, vector<4x128xbf16>, vector<16x128xf32> -> vector<16x128xf32>
    %42 = arith.addf %35, %41 : vector<16x128xf32>
    %c0_42 = arith.constant 0 : index
    %43 = arith.index_cast %28 : i32 to index
    %c2_43 = arith.constant 2 : index
    %c0_44 = arith.constant 0 : index
    %44 = vector.load %arg2[%c0_42, %43, %c2_43, %c0_44] : memref<1x18x18x4xbf16, #tpu.memory_space<vmem>>, vector<1x1x16x4xbf16>
    %45 = vector.shape_cast %44 : vector<1x1x16x4xbf16> to vector<16x4xbf16>
    %c1_45 = arith.constant 1 : index
    %c2_46 = arith.constant 2 : index
    %c0_47 = arith.constant 0 : index
    %c0_48 = arith.constant 0 : index
    %46 = vector.load %arg3[%c1_45, %c2_46, %c0_47, %c0_48] : memref<3x3x4x128xbf16, #tpu.memory_space<vmem>>, vector<1x1x4x128xbf16>
    %47 = vector.shape_cast %46 : vector<1x1x4x128xbf16> to vector<4x128xbf16>
    %cst_49 = arith.constant dense<0.000000e+00> : vector<16x128xf32>
    %48 = tpu.matmul %45, %47, %cst_49 {dimension_numbers = #tpu.dot_dimension_numbers<[1], [0], [0], [1], [0, 0, 1, 1], [], []>} : vector<16x4xbf16>, vector<4x128xbf16>, vector<16x128xf32> -> vector<16x128xf32>
    %49 = arith.addf %42, %48 : vector<16x128xf32>
    %c1_i32_50 = arith.constant 1 : i32
    %50 = arith.muli %3, %c1_i32_50 : i32
    %c2_i32 = arith.constant 2 : i32
    %51 = arith.addi %50, %c2_i32 : i32
    %c0_51 = arith.constant 0 : index
    %52 = arith.index_cast %51 : i32 to index
    %c0_52 = arith.constant 0 : index
    %c0_53 = arith.constant 0 : index
    %53 = vector.load %arg2[%c0_51, %52, %c0_52, %c0_53] : memref<1x18x18x4xbf16, #tpu.memory_space<vmem>>, vector<1x1x16x4xbf16>
    %54 = vector.shape_cast %53 : vector<1x1x16x4xbf16> to vector<16x4xbf16>
    %c2_54 = arith.constant 2 : index
    %c0_55 = arith.constant 0 : index
    %c0_56 = arith.constant 0 : index
    %c0_57 = arith.constant 0 : index
    %55 = vector.load %arg3[%c2_54, %c0_55, %c0_56, %c0_57] : memref<3x3x4x128xbf16, #tpu.memory_space<vmem>>, vector<1x1x4x128xbf16>
    %56 = vector.shape_cast %55 : vector<1x1x4x128xbf16> to vector<4x128xbf16>
    %cst_58 = arith.constant dense<0.000000e+00> : vector<16x128xf32>
    %57 = tpu.matmul %54, %56, %cst_58 {dimension_numbers = #tpu.dot_dimension_numbers<[1], [0], [0], [1], [0, 0, 1, 1], [], []>} : vector<16x4xbf16>, vector<4x128xbf16>, vector<16x128xf32> -> vector<16x128xf32>
    %58 = arith.addf %49, %57 : vector<16x128xf32>
    %c0_59 = arith.constant 0 : index
    %59 = arith.index_cast %51 : i32 to index
    %c1_60 = arith.constant 1 : index
    %c0_61 = arith.constant 0 : index
    %60 = vector.load %arg2[%c0_59, %59, %c1_60, %c0_61] : memref<1x18x18x4xbf16, #tpu.memory_space<vmem>>, vector<1x1x16x4xbf16>
    %61 = vector.shape_cast %60 : vector<1x1x16x4xbf16> to vector<16x4xbf16>
    %c2_62 = arith.constant 2 : index
    %c1_63 = arith.constant 1 : index
    %c0_64 = arith.constant 0 : index
    %c0_65 = arith.constant 0 : index
    %62 = vector.load %arg3[%c2_62, %c1_63, %c0_64, %c0_65] : memref<3x3x4x128xbf16, #tpu.memory_space<vmem>>, vector<1x1x4x128xbf16>
    %63 = vector.shape_cast %62 : vector<1x1x4x128xbf16> to vector<4x128xbf16>
    %cst_66 = arith.constant dense<0.000000e+00> : vector<16x128xf32>
    %64 = tpu.matmul %61, %63, %cst_66 {dimension_numbers = #tpu.dot_dimension_numbers<[1], [0], [0], [1], [0, 0, 1, 1], [], []>} : vector<16x4xbf16>, vector<4x128xbf16>, vector<16x128xf32> -> vector<16x128xf32>
    %65 = arith.addf %58, %64 : vector<16x128xf32>
    %c0_67 = arith.constant 0 : index
    %66 = arith.index_cast %51 : i32 to index
    %c2_68 = arith.constant 2 : index
    %c0_69 = arith.constant 0 : index
    %67 = vector.load %arg2[%c0_67, %66, %c2_68, %c0_69] : memref<1x18x18x4xbf16, #tpu.memory_space<vmem>>, vector<1x1x16x4xbf16>
    %68 = vector.shape_cast %67 : vector<1x1x16x4xbf16> to vector<16x4xbf16>
    %c2_70 = arith.constant 2 : index
    %c2_71 = arith.constant 2 : index
    %c0_72 = arith.constant 0 : index
    %c0_73 = arith.constant 0 : index
    %69 = vector.load %arg3[%c2_70, %c2_71, %c0_72, %c0_73] : memref<3x3x4x128xbf16, #tpu.memory_space<vmem>>, vector<1x1x4x128xbf16>
    %70 = vector.shape_cast %69 : vector<1x1x4x128xbf16> to vector<4x128xbf16>
    %cst_74 = arith.constant dense<0.000000e+00> : vector<16x128xf32>
    %71 = tpu.matmul %68, %70, %cst_74 {dimension_numbers = #tpu.dot_dimension_numbers<[1], [0], [0], [1], [0, 0, 1, 1], [], []>} : vector<16x4xbf16>, vector<4x128xbf16>, vector<16x128xf32> -> vector<16x128xf32>
    %72 = arith.addf %65, %71 : vector<16x128xf32>
    %73 = vector.broadcast %0 : vector<1x128xf32> to vector<16x128xf32>
    %74 = arith.addf %72, %73 : vector<16x128xf32>
    %cst_75 = arith.constant 0.000000e+00 : f32
    %75 = vector.broadcast %cst_75 : f32 to vector<16x128xf32>
    %76 = arith.minimumf %74, %75 : vector<16x128xf32>
    %77 = math.exp %76 : vector<16x128xf32>
    %cst_76 = arith.constant 1.000000e+00 : f32
    %78 = vector.broadcast %cst_76 : f32 to vector<16x128xf32>
    %79 = arith.subf %77, %78 : vector<16x128xf32>
    %cst_77 = arith.constant 0.000000e+00 : f32
    %80 = vector.broadcast %cst_77 : f32 to vector<16x128xf32>
    %81 = arith.cmpf ogt, %74, %80 : vector<16x128xf32>
    %82 = arith.select %81, %74, %79 : vector<16x128xi1>, vector<16x128xf32>
    %c0_78 = arith.constant 0 : index
    %c0_79 = arith.constant 0 : index
    %c0_80 = arith.constant 0 : index
    %c0_81 = arith.constant 0 : index
    %83 = vector.load %arg5[%c0_78, %c0_79, %c0_80, %c0_81] : memref<1x8x16x128xf32, #tpu.memory_space<vmem>>, vector<1x1x16x128xf32>
    %84 = vector.shape_cast %83 : vector<1x1x16x128xf32> to vector<16x128xf32>
    %85 = vector.shape_cast %82 : vector<16x128xf32> to vector<1x1x16x128xf32>
    tpu.vector_store %arg5[%c0_78, %c0_79, %c0_80, %c0_81], %85 {strides = array<i32>} : memref<1x8x16x128xf32, #tpu.memory_space<vmem>>, vector<1x1x16x128xf32>,
    %cst_82 = arith.constant 0.000000e+00 : f32
    %86 = vector.broadcast %cst_82 : f32 to vector<16x128xf32>
    %c8_i32_83 = arith.constant 8 : i32
    %87 = arith.muli %arg1, %c8_i32_83 : i32
    %c1_i32_84 = arith.constant 1 : i32
    %88 = arith.addi %87, %c1_i32_84 : i32
    %c1_i32_85 = arith.constant 1 : i32
    %89 = arith.muli %88, %c1_i32_85 : i32
    %c0_i32_86 = arith.constant 0 : i32
    %90 = arith.addi %89, %c0_i32_86 : i32
    %c0_87 = arith.constant 0 : index
    %91 = arith.index_cast %90 : i32 to index
    %c0_88 = arith.constant 0 : index
    %c0_89 = arith.constant 0 : index
    %92 = vector.load %arg2[%c0_87, %91, %c0_88, %c0_89] : memref<1x18x18x4xbf16, #tpu.memory_space<vmem>>, vector<1x1x16x4xbf16>
    %93 = vector.shape_cast %92 : vector<1x1x16x4xbf16> to vector<16x4xbf16>
    %c0_90 = arith.constant 0 : index
    %c0_91 = arith.constant 0 : index
    %c0_92 = arith.constant 0 : index
    %c0_93 = arith.constant 0 : index
    %94 = vector.load %arg3[%c0_90, %c0_91, %c0_92, %c0_93] : memref<3x3x4x128xbf16, #tpu.memory_space<vmem>>, vector<1x1x4x128xbf16>
    %95 = vector.shape_cast %94 : vector<1x1x4x128xbf16> to vector<4x128xbf16>
    %cst_94 = arith.constant dense<0.000000e+00> : vector<16x128xf32>
    %96 = tpu.matmul %93, %95, %cst_94 {dimension_numbers = #tpu.dot_dimension_numbers<[1], [0], [0], [1], [0, 0, 1, 1], [], []>} : vector<16x4xbf16>, vector<4x128xbf16>, vector<16x128xf32> -> vector<16x128xf32>
    %97 = arith.addf %86, %96 : vector<16x128xf32>
    %c0_95 = arith.constant 0 : index
    %98 = arith.index_cast %90 : i32 to index
    %c1_96 = arith.constant 1 : index
    %c0_97 = arith.constant 0 : index
    %99 = vector.load %arg2[%c0_95, %98, %c1_96, %c0_97] : memref<1x18x18x4xbf16, #tpu.memory_space<vmem>>, vector<1x1x16x4xbf16>
    %100 = vector.shape_cast %99 : vector<1x1x16x4xbf16> to vector<16x4xbf16>
    %c0_98 = arith.constant 0 : index
    %c1_99 = arith.constant 1 : index
    %c0_100 = arith.constant 0 : index
    %c0_101 = arith.constant 0 : index
    %101 = vector.load %arg3[%c0_98, %c1_99, %c0_100, %c0_101] : memref<3x3x4x128xbf16, #tpu.memory_space<vmem>>, vector<1x1x4x128xbf16>
    %102 = vector.shape_cast %101 : vector<1x1x4x128xbf16> to vector<4x128xbf16>
    %cst_102 = arith.constant dense<0.000000e+00> : vector<16x128xf32>
    %103 = tpu.matmul %100, %102, %cst_102 {dimension_numbers = #tpu.dot_dimension_numbers<[1], [0], [0], [1], [0, 0, 1, 1], [], []>} : vector<16x4xbf16>, vector<4x128xbf16>, vector<16x128xf32> -> vector<16x128xf32>
    %104 = arith.addf %97, %103 : vector<16x128xf32>
    %c0_103 = arith.constant 0 : index
    %105 = arith.index_cast %90 : i32 to index
    %c2_104 = arith.constant 2 : index
    %c0_105 = arith.constant 0 : index
    %106 = vector.load %arg2[%c0_103, %105, %c2_104, %c0_105] : memref<1x18x18x4xbf16, #tpu.memory_space<vmem>>, vector<1x1x16x4xbf16>
    %107 = vector.shape_cast %106 : vector<1x1x16x4xbf16> to vector<16x4xbf16>
    %c0_106 = arith.constant 0 : index
    %c2_107 = arith.constant 2 : index
    %c0_108 = arith.constant 0 : index
    %c0_109 = arith.constant 0 : index
    %108 = vector.load %arg3[%c0_106, %c2_107, %c0_108, %c0_109] : memref<3x3x4x128xbf16, #tpu.memory_space<vmem>>, vector<1x1x4x128xbf16>
    %109 = vector.shape_cast %108 : vector<1x1x4x128xbf16> to vector<4x128xbf16>
    %cst_110 = arith.constant dense<0.000000e+00> : vector<16x128xf32>
    %110 = tpu.matmul %107, %109, %cst_110 {dimension_numbers = #tpu.dot_dimension_numbers<[1], [0], [0], [1], [0, 0, 1, 1], [], []>} : vector<16x4xbf16>, vector<4x128xbf16>, vector<16x128xf32> -> vector<16x128xf32>
    %111 = arith.addf %104, %110 : vector<16x128xf32>
    %c1_i32_111 = arith.constant 1 : i32
    %112 = arith.muli %88, %c1_i32_111 : i32
    %c1_i32_112 = arith.constant 1 : i32
    %113 = arith.addi %112, %c1_i32_112 : i32
    %c0_113 = arith.constant 0 : index
    %114 = arith.index_cast %113 : i32 to index
    %c0_114 = arith.constant 0 : index
    %c0_115 = arith.constant 0 : index
    %115 = vector.load %arg2[%c0_113, %114, %c0_114, %c0_115] : memref<1x18x18x4xbf16, #tpu.memory_space<vmem>>, vector<1x1x16x4xbf16>
    %116 = vector.shape_cast %115 : vector<1x1x16x4xbf16> to vector<16x4xbf16>
    %c1_116 = arith.constant 1 : index
    %c0_117 = arith.constant 0 : index
    %c0_118 = arith.constant 0 : index
    %c0_119 = arith.constant 0 : index
    %117 = vector.load %arg3[%c1_116, %c0_117, %c0_118, %c0_119] : memref<3x3x4x128xbf16, #tpu.memory_space<vmem>>, vector<1x1x4x128xbf16>
    %118 = vector.shape_cast %117 : vector<1x1x4x128xbf16> to vector<4x128xbf16>
    %cst_120 = arith.constant dense<0.000000e+00> : vector<16x128xf32>
    %119 = tpu.matmul %116, %118, %cst_120 {dimension_numbers = #tpu.dot_dimension_numbers<[1], [0], [0], [1], [0, 0, 1, 1], [], []>} : vector<16x4xbf16>, vector<4x128xbf16>, vector<16x128xf32> -> vector<16x128xf32>
    %120 = arith.addf %111, %119 : vector<16x128xf32>
    %c0_121 = arith.constant 0 : index
    %121 = arith.index_cast %113 : i32 to index
    %c1_122 = arith.constant 1 : index
    %c0_123 = arith.constant 0 : index
    %122 = vector.load %arg2[%c0_121, %121, %c1_122, %c0_123] : memref<1x18x18x4xbf16, #tpu.memory_space<vmem>>, vector<1x1x16x4xbf16>
    %123 = vector.shape_cast %122 : vector<1x1x16x4xbf16> to vector<16x4xbf16>
    %c1_124 = arith.constant 1 : index
    %c1_125 = arith.constant 1 : index
    %c0_126 = arith.constant 0 : index
    %c0_127 = arith.constant 0 : index
    %124 = vector.load %arg3[%c1_124, %c1_125, %c0_126, %c0_127] : memref<3x3x4x128xbf16, #tpu.memory_space<vmem>>, vector<1x1x4x128xbf16>
    %125 = vector.shape_cast %124 : vector<1x1x4x128xbf16> to vector<4x128xbf16>
    %cst_128 = arith.constant dense<0.000000e+00> : vector<16x128xf32>
    %126 = tpu.matmul %123, %125, %cst_128 {dimension_numbers = #tpu.dot_dimension_numbers<[1], [0], [0], [1], [0, 0, 1, 1], [], []>} : vector<16x4xbf16>, vector<4x128xbf16>, vector<16x128xf32> -> vector<16x128xf32>
    %127 = arith.addf %120, %126 : vector<16x128xf32>
    %c0_129 = arith.constant 0 : index
    %128 = arith.index_cast %113 : i32 to index
    %c2_130 = arith.constant 2 : index
    %c0_131 = arith.constant 0 : index
    %129 = vector.load %arg2[%c0_129, %128, %c2_130, %c0_131] : memref<1x18x18x4xbf16, #tpu.memory_space<vmem>>, vector<1x1x16x4xbf16>
    %130 = vector.shape_cast %129 : vector<1x1x16x4xbf16> to vector<16x4xbf16>
    %c1_132 = arith.constant 1 : index
    %c2_133 = arith.constant 2 : index
    %c0_134 = arith.constant 0 : index
    %c0_135 = arith.constant 0 : index
    %131 = vector.load %arg3[%c1_132, %c2_133, %c0_134, %c0_135] : memref<3x3x4x128xbf16, #tpu.memory_space<vmem>>, vector<1x1x4x128xbf16>
    %132 = vector.shape_cast %131 : vector<1x1x4x128xbf16> to vector<4x128xbf16>
    %cst_136 = arith.constant dense<0.000000e+00> : vector<16x128xf32>
    %133 = tpu.matmul %130, %132, %cst_136 {dimension_numbers = #tpu.dot_dimension_numbers<[1], [0], [0], [1], [0, 0, 1, 1], [], []>} : vector<16x4xbf16>, vector<4x128xbf16>, vector<16x128xf32> -> vector<16x128xf32>
    %134 = arith.addf %127, %133 : vector<16x128xf32>
    %c1_i32_137 = arith.constant 1 : i32
    %135 = arith.muli %88, %c1_i32_137 : i32
    %c2_i32_138 = arith.constant 2 : i32
    %136 = arith.addi %135, %c2_i32_138 : i32
    %c0_139 = arith.constant 0 : index
    %137 = arith.index_cast %136 : i32 to index
    %c0_140 = arith.constant 0 : index
    %c0_141 = arith.constant 0 : index
    %138 = vector.load %arg2[%c0_139, %137, %c0_140, %c0_141] : memref<1x18x18x4xbf16, #tpu.memory_space<vmem>>, vector<1x1x16x4xbf16>
    %139 = vector.shape_cast %138 : vector<1x1x16x4xbf16> to vector<16x4xbf16>
    %c2_142 = arith.constant 2 : index
    %c0_143 = arith.constant 0 : index
    %c0_144 = arith.constant 0 : index
    %c0_145 = arith.constant 0 : index
    %140 = vector.load %arg3[%c2_142, %c0_143, %c0_144, %c0_145] : memref<3x3x4x128xbf16, #tpu.memory_space<vmem>>, vector<1x1x4x128xbf16>
    %141 = vector.shape_cast %140 : vector<1x1x4x128xbf16> to vector<4x128xbf16>
    %cst_146 = arith.constant dense<0.000000e+00> : vector<16x128xf32>
    %142 = tpu.matmul %139, %141, %cst_146 {dimension_numbers = #tpu.dot_dimension_numbers<[1], [0], [0], [1], [0, 0, 1, 1], [], []>} : vector<16x4xbf16>, vector<4x128xbf16>, vector<16x128xf32> -> vector<16x128xf32>
    %143 = arith.addf %134, %142 : vector<16x128xf32>
    %c0_147 = arith.constant 0 : index
    %144 = arith.index_cast %136 : i32 to index
    %c1_148 = arith.constant 1 : index
    %c0_149 = arith.constant 0 : index
    %145 = vector.load %arg2[%c0_147, %144, %c1_148, %c0_149] : memref<1x18x18x4xbf16, #tpu.memory_space<vmem>>, vector<1x1x16x4xbf16>
    %146 = vector.shape_cast %145 : vector<1x1x16x4xbf16> to vector<16x4xbf16>
    %c2_150 = arith.constant 2 : index
    %c1_151 = arith.constant 1 : index
    %c0_152 = arith.constant 0 : index
    %c0_153 = arith.constant 0 : index
    %147 = vector.load %arg3[%c2_150, %c1_151, %c0_152, %c0_153] : memref<3x3x4x128xbf16, #tpu.memory_space<vmem>>, vector<1x1x4x128xbf16>
    %148 = vector.shape_cast %147 : vector<1x1x4x128xbf16> to vector<4x128xbf16>
    %cst_154 = arith.constant dense<0.000000e+00> : vector<16x128xf32>
    %149 = tpu.matmul %146, %148, %cst_154 {dimension_numbers = #tpu.dot_dimension_numbers<[1], [0], [0], [1], [0, 0, 1, 1], [], []>} : vector<16x4xbf16>, vector<4x128xbf16>, vector<16x128xf32> -> vector<16x128xf32>
    %150 = arith.addf %143, %149 : vector<16x128xf32>
    %c0_155 = arith.constant 0 : index
    %151 = arith.index_cast %136 : i32 to index
    %c2_156 = arith.constant 2 : index
    %c0_157 = arith.constant 0 : index
    %152 = vector.load %arg2[%c0_155, %151, %c2_156, %c0_157] : memref<1x18x18x4xbf16, #tpu.memory_space<vmem>>, vector<1x1x16x4xbf16>
    %153 = vector.shape_cast %152 : vector<1x1x16x4xbf16> to vector<16x4xbf16>
    %c2_158 = arith.constant 2 : index
    %c2_159 = arith.constant 2 : index
    %c0_160 = arith.constant 0 : index
    %c0_161 = arith.constant 0 : index
    %154 = vector.load %arg3[%c2_158, %c2_159, %c0_160, %c0_161] : memref<3x3x4x128xbf16, #tpu.memory_space<vmem>>, vector<1x1x4x128xbf16>
    %155 = vector.shape_cast %154 : vector<1x1x4x128xbf16> to vector<4x128xbf16>
    %cst_162 = arith.constant dense<0.000000e+00> : vector<16x128xf32>
    %156 = tpu.matmul %153, %155, %cst_162 {dimension_numbers = #tpu.dot_dimension_numbers<[1], [0], [0], [1], [0, 0, 1, 1], [], []>} : vector<16x4xbf16>, vector<4x128xbf16>, vector<16x128xf32> -> vector<16x128xf32>
    %157 = arith.addf %150, %156 : vector<16x128xf32>
    %158 = vector.broadcast %0 : vector<1x128xf32> to vector<16x128xf32>
    %159 = arith.addf %157, %158 : vector<16x128xf32>
    %cst_163 = arith.constant 0.000000e+00 : f32
    %160 = vector.broadcast %cst_163 : f32 to vector<16x128xf32>
    %161 = arith.minimumf %159, %160 : vector<16x128xf32>
    %162 = math.exp %161 : vector<16x128xf32>
    %cst_164 = arith.constant 1.000000e+00 : f32
    %163 = vector.broadcast %cst_164 : f32 to vector<16x128xf32>
    %164 = arith.subf %162, %163 : vector<16x128xf32>
    %cst_165 = arith.constant 0.000000e+00 : f32
    %165 = vector.broadcast %cst_165 : f32 to vector<16x128xf32>
    %166 = arith.cmpf ogt, %159, %165 : vector<16x128xf32>
    %167 = arith.select %166, %159, %164 : vector<16x128xi1>, vector<16x128xf32>
    %c0_166 = arith.constant 0 : index
    %c1_167 = arith.constant 1 : index
    %c0_168 = arith.constant 0 : index
    %c0_169 = arith.constant 0 : index
    %168 = vector.load %arg5[%c0_166, %c1_167, %c0_168, %c0_169] : memref<1x8x16x128xf32, #tpu.memory_space<vmem>>, vector<1x1x16x128xf32>
    %169 = vector.shape_cast %168 : vector<1x1x16x128xf32> to vector<16x128xf32>
    %170 = vector.shape_cast %167 : vector<16x128xf32> to vector<1x1x16x128xf32>
    tpu.vector_store %arg5[%c0_166, %c1_167, %c0_168, %c0_169], %170 {strides = array<i32>} : memref<1x8x16x128xf32, #tpu.memory_space<vmem>>, vector<1x1x16x128xf32>,
    %cst_170 = arith.constant 0.000000e+00 : f32
    %171 = vector.broadcast %cst_170 : f32 to vector<16x128xf32>
    %c8_i32_171 = arith.constant 8 : i32
    %172 = arith.muli %arg1, %c8_i32_171 : i32
    %c2_i32_172 = arith.constant 2 : i32
    %173 = arith.addi %172, %c2_i32_172 : i32
    %c1_i32_173 = arith.constant 1 : i32
    %174 = arith.muli %173, %c1_i32_173 : i32
    %c0_i32_174 = arith.constant 0 : i32
    %175 = arith.addi %174, %c0_i32_174 : i32
    %c0_175 = arith.constant 0 : index
    %176 = arith.index_cast %175 : i32 to index
    %c0_176 = arith.constant 0 : index
    %c0_177 = arith.constant 0 : index
    %177 = vector.load %arg2[%c0_175, %176, %c0_176, %c0_177] : memref<1x18x18x4xbf16, #tpu.memory_space<vmem>>, vector<1x1x16x4xbf16>
    %178 = vector.shape_cast %177 : vector<1x1x16x4xbf16> to vector<16x4xbf16>
    %c0_178 = arith.constant 0 : index
    %c0_179 = arith.constant 0 : index
    %c0_180 = arith.constant 0 : index
    %c0_181 = arith.constant 0 : index
    %179 = vector.load %arg3[%c0_178, %c0_179, %c0_180, %c0_181] : memref<3x3x4x128xbf16, #tpu.memory_space<vmem>>, vector<1x1x4x128xbf16>
    %180 = vector.shape_cast %179 : vector<1x1x4x128xbf16> to vector<4x128xbf16>
    %cst_182 = arith.constant dense<0.000000e+00> : vector<16x128xf32>
    %181 = tpu.matmul %178, %180, %cst_182 {dimension_numbers = #tpu.dot_dimension_numbers<[1], [0], [0], [1], [0, 0, 1, 1], [], []>} : vector<16x4xbf16>, vector<4x128xbf16>, vector<16x128xf32> -> vector<16x128xf32>
    %182 = arith.addf %171, %181 : vector<16x128xf32>
    %c0_183 = arith.constant 0 : index
    %183 = arith.index_cast %175 : i32 to index
    %c1_184 = arith.constant 1 : index
    %c0_185 = arith.constant 0 : index
    %184 = vector.load %arg2[%c0_183, %183, %c1_184, %c0_185] : memref<1x18x18x4xbf16, #tpu.memory_space<vmem>>, vector<1x1x16x4xbf16>
    %185 = vector.shape_cast %184 : vector<1x1x16x4xbf16> to vector<16x4xbf16>
    %c0_186 = arith.constant 0 : index
    %c1_187 = arith.constant 1 : index
    %c0_188 = arith.constant 0 : index
    %c0_189 = arith.constant 0 : index
    %186 = vector.load %arg3[%c0_186, %c1_187, %c0_188, %c0_189] : memref<3x3x4x128xbf16, #tpu.memory_space<vmem>>, vector<1x1x4x128xbf16>
    %187 = vector.shape_cast %186 : vector<1x1x4x128xbf16> to vector<4x128xbf16>
    %cst_190 = arith.constant dense<0.000000e+00> : vector<16x128xf32>
    %188 = tpu.matmul %185, %187, %cst_190 {dimension_numbers = #tpu.dot_dimension_numbers<[1], [0], [0], [1], [0, 0, 1, 1], [], []>} : vector<16x4xbf16>, vector<4x128xbf16>, vector<16x128xf32> -> vector<16x128xf32>
    %189 = arith.addf %182, %188 : vector<16x128xf32>
    %c0_191 = arith.constant 0 : index
    %190 = arith.index_cast %175 : i32 to index
    %c2_192 = arith.constant 2 : index
    %c0_193 = arith.constant 0 : index
    %191 = vector.load %arg2[%c0_191, %190, %c2_192, %c0_193] : memref<1x18x18x4xbf16, #tpu.memory_space<vmem>>, vector<1x1x16x4xbf16>
    %192 = vector.shape_cast %191 : vector<1x1x16x4xbf16> to vector<16x4xbf16>
    %c0_194 = arith.constant 0 : index
    %c2_195 = arith.constant 2 : index
    %c0_196 = arith.constant 0 : index
    %c0_197 = arith.constant 0 : index
    %193 = vector.load %arg3[%c0_194, %c2_195, %c0_196, %c0_197] : memref<3x3x4x128xbf16, #tpu.memory_space<vmem>>, vector<1x1x4x128xbf16>
    %194 = vector.shape_cast %193 : vector<1x1x4x128xbf16> to vector<4x128xbf16>
    %cst_198 = arith.constant dense<0.000000e+00> : vector<16x128xf32>
    %195 = tpu.matmul %192, %194, %cst_198 {dimension_numbers = #tpu.dot_dimension_numbers<[1], [0], [0], [1], [0, 0, 1, 1], [], []>} : vector<16x4xbf16>, vector<4x128xbf16>, vector<16x128xf32> -> vector<16x128xf32>
    %196 = arith.addf %189, %195 : vector<16x128xf32>
    %c1_i32_199 = arith.constant 1 : i32
    %197 = arith.muli %173, %c1_i32_199 : i32
    %c1_i32_200 = arith.constant 1 : i32
    %198 = arith.addi %197, %c1_i32_200 : i32
    %c0_201 = arith.constant 0 : index
    %199 = arith.index_cast %198 : i32 to index
    %c0_202 = arith.constant 0 : index
    %c0_203 = arith.constant 0 : index
    %200 = vector.load %arg2[%c0_201, %199, %c0_202, %c0_203] : memref<1x18x18x4xbf16, #tpu.memory_space<vmem>>, vector<1x1x16x4xbf16>
    %201 = vector.shape_cast %200 : vector<1x1x16x4xbf16> to vector<16x4xbf16>
    %c1_204 = arith.constant 1 : index
    %c0_205 = arith.constant 0 : index
    %c0_206 = arith.constant 0 : index
    %c0_207 = arith.constant 0 : index
    %202 = vector.load %arg3[%c1_204, %c0_205, %c0_206, %c0_207] : memref<3x3x4x128xbf16, #tpu.memory_space<vmem>>, vector<1x1x4x128xbf16>
    %203 = vector.shape_cast %202 : vector<1x1x4x128xbf16> to vector<4x128xbf16>
    %cst_208 = arith.constant dense<0.000000e+00> : vector<16x128xf32>
    %204 = tpu.matmul %201, %203, %cst_208 {dimension_numbers = #tpu.dot_dimension_numbers<[1], [0], [0], [1], [0, 0, 1, 1], [], []>} : vector<16x4xbf16>, vector<4x128xbf16>, vector<16x128xf32> -> vector<16x128xf32>
    %205 = arith.addf %196, %204 : vector<16x128xf32>
    %c0_209 = arith.constant 0 : index
    %206 = arith.index_cast %198 : i32 to index
    %c1_210 = arith.constant 1 : index
    %c0_211 = arith.constant 0 : index
    %207 = vector.load %arg2[%c0_209, %206, %c1_210, %c0_211] : memref<1x18x18x4xbf16, #tpu.memory_space<vmem>>, vector<1x1x16x4xbf16>
    %208 = vector.shape_cast %207 : vector<1x1x16x4xbf16> to vector<16x4xbf16>
    %c1_212 = arith.constant 1 : index
    %c1_213 = arith.constant 1 : index
    %c0_214 = arith.constant 0 : index
    %c0_215 = arith.constant 0 : index
    %209 = vector.load %arg3[%c1_212, %c1_213, %c0_214, %c0_215] : memref<3x3x4x128xbf16, #tpu.memory_space<vmem>>, vector<1x1x4x128xbf16>
    %210 = vector.shape_cast %209 : vector<1x1x4x128xbf16> to vector<4x128xbf16>
    %cst_216 = arith.constant dense<0.000000e+00> : vector<16x128xf32>
    %211 = tpu.matmul %208, %210, %cst_216 {dimension_numbers = #tpu.dot_dimension_numbers<[1], [0], [0], [1], [0, 0, 1, 1], [], []>} : vector<16x4xbf16>, vector<4x128xbf16>, vector<16x128xf32> -> vector<16x128xf32>
    %212 = arith.addf %205, %211 : vector<16x128xf32>
    %c0_217 = arith.constant 0 : index
    %213 = arith.index_cast %198 : i32 to index
    %c2_218 = arith.constant 2 : index
    %c0_219 = arith.constant 0 : index
    %214 = vector.load %arg2[%c0_217, %213, %c2_218, %c0_219] : memref<1x18x18x4xbf16, #tpu.memory_space<vmem>>, vector<1x1x16x4xbf16>
    %215 = vector.shape_cast %214 : vector<1x1x16x4xbf16> to vector<16x4xbf16>
    %c1_220 = arith.constant 1 : index
    %c2_221 = arith.constant 2 : index
    %c0_222 = arith.constant 0 : index
    %c0_223 = arith.constant 0 : index
    %216 = vector.load %arg3[%c1_220, %c2_221, %c0_222, %c0_223] : memref<3x3x4x128xbf16, #tpu.memory_space<vmem>>, vector<1x1x4x128xbf16>
    %217 = vector.shape_cast %216 : vector<1x1x4x128xbf16> to vector<4x128xbf16>
    %cst_224 = arith.constant dense<0.000000e+00> : vector<16x128xf32>
    %218 = tpu.matmul %215, %217, %cst_224 {dimension_numbers = #tpu.dot_dimension_numbers<[1], [0], [0], [1], [0, 0, 1, 1], [], []>} : vector<16x4xbf16>, vector<4x128xbf16>, vector<16x128xf32> -> vector<16x128xf32>
    %219 = arith.addf %212, %218 : vector<16x128xf32>
    %c1_i32_225 = arith.constant 1 : i32
    %220 = arith.muli %173, %c1_i32_225 : i32
    %c2_i32_226 = arith.constant 2 : i32
    %221 = arith.addi %220, %c2_i32_226 : i32
    %c0_227 = arith.constant 0 : index
    %222 = arith.index_cast %221 : i32 to index
    %c0_228 = arith.constant 0 : index
    %c0_229 = arith.constant 0 : index
    %223 = vector.load %arg2[%c0_227, %222, %c0_228, %c0_229] : memref<1x18x18x4xbf16, #tpu.memory_space<vmem>>, vector<1x1x16x4xbf16>
    %224 = vector.shape_cast %223 : vector<1x1x16x4xbf16> to vector<16x4xbf16>
    %c2_230 = arith.constant 2 : index
    %c0_231 = arith.constant 0 : index
    %c0_232 = arith.constant 0 : index
    %c0_233 = arith.constant 0 : index
    %225 = vector.load %arg3[%c2_230, %c0_231, %c0_232, %c0_233] : memref<3x3x4x128xbf16, #tpu.memory_space<vmem>>, vector<1x1x4x128xbf16>
    %226 = vector.shape_cast %225 : vector<1x1x4x128xbf16> to vector<4x128xbf16>
    %cst_234 = arith.constant dense<0.000000e+00> : vector<16x128xf32>
    %227 = tpu.matmul %224, %226, %cst_234 {dimension_numbers = #tpu.dot_dimension_numbers<[1], [0], [0], [1], [0, 0, 1, 1], [], []>} : vector<16x4xbf16>, vector<4x128xbf16>, vector<16x128xf32> -> vector<16x128xf32>
    %228 = arith.addf %219, %227 : vector<16x128xf32>
    %c0_235 = arith.constant 0 : index
    %229 = arith.index_cast %221 : i32 to index
    %c1_236 = arith.constant 1 : index
    %c0_237 = arith.constant 0 : index
    %230 = vector.load %arg2[%c0_235, %229, %c1_236, %c0_237] : memref<1x18x18x4xbf16, #tpu.memory_space<vmem>>, vector<1x1x16x4xbf16>
    %231 = vector.shape_cast %230 : vector<1x1x16x4xbf16> to vector<16x4xbf16>
    %c2_238 = arith.constant 2 : index
    %c1_239 = arith.constant 1 : index
    %c0_240 = arith.constant 0 : index
    %c0_241 = arith.constant 0 : index
    %232 = vector.load %arg3[%c2_238, %c1_239, %c0_240, %c0_241] : memref<3x3x4x128xbf16, #tpu.memory_space<vmem>>, vector<1x1x4x128xbf16>
    %233 = vector.shape_cast %232 : vector<1x1x4x128xbf16> to vector<4x128xbf16>
    %cst_242 = arith.constant dense<0.000000e+00> : vector<16x128xf32>
    %234 = tpu.matmul %231, %233, %cst_242 {dimension_numbers = #tpu.dot_dimension_numbers<[1], [0], [0], [1], [0, 0, 1, 1], [], []>} : vector<16x4xbf16>, vector<4x128xbf16>, vector<16x128xf32> -> vector<16x128xf32>
    %235 = arith.addf %228, %234 : vector<16x128xf32>
    %c0_243 = arith.constant 0 : index
    %236 = arith.index_cast %221 : i32 to index
    %c2_244 = arith.constant 2 : index
    %c0_245 = arith.constant 0 : index
    %237 = vector.load %arg2[%c0_243, %236, %c2_244, %c0_245] : memref<1x18x18x4xbf16, #tpu.memory_space<vmem>>, vector<1x1x16x4xbf16>
    %238 = vector.shape_cast %237 : vector<1x1x16x4xbf16> to vector<16x4xbf16>
    %c2_246 = arith.constant 2 : index
    %c2_247 = arith.constant 2 : index
    %c0_248 = arith.constant 0 : index
    %c0_249 = arith.constant 0 : index
    %239 = vector.load %arg3[%c2_246, %c2_247, %c0_248, %c0_249] : memref<3x3x4x128xbf16, #tpu.memory_space<vmem>>, vector<1x1x4x128xbf16>
    %240 = vector.shape_cast %239 : vector<1x1x4x128xbf16> to vector<4x128xbf16>
    %cst_250 = arith.constant dense<0.000000e+00> : vector<16x128xf32>
    %241 = tpu.matmul %238, %240, %cst_250 {dimension_numbers = #tpu.dot_dimension_numbers<[1], [0], [0], [1], [0, 0, 1, 1], [], []>} : vector<16x4xbf16>, vector<4x128xbf16>, vector<16x128xf32> -> vector<16x128xf32>
    %242 = arith.addf %235, %241 : vector<16x128xf32>
    %243 = vector.broadcast %0 : vector<1x128xf32> to vector<16x128xf32>
    %244 = arith.addf %242, %243 : vector<16x128xf32>
    %cst_251 = arith.constant 0.000000e+00 : f32
    %245 = vector.broadcast %cst_251 : f32 to vector<16x128xf32>
    %246 = arith.minimumf %244, %245 : vector<16x128xf32>
    %247 = math.exp %246 : vector<16x128xf32>
    %cst_252 = arith.constant 1.000000e+00 : f32
    %248 = vector.broadcast %cst_252 : f32 to vector<16x128xf32>
    %249 = arith.subf %247, %248 : vector<16x128xf32>
    %cst_253 = arith.constant 0.000000e+00 : f32
    %250 = vector.broadcast %cst_253 : f32 to vector<16x128xf32>
    %251 = arith.cmpf ogt, %244, %250 : vector<16x128xf32>
    %252 = arith.select %251, %244, %249 : vector<16x128xi1>, vector<16x128xf32>
    %c0_254 = arith.constant 0 : index
    %c2_255 = arith.constant 2 : index
    %c0_256 = arith.constant 0 : index
    %c0_257 = arith.constant 0 : index
    %253 = vector.load %arg5[%c0_254, %c2_255, %c0_256, %c0_257] : memref<1x8x16x128xf32, #tpu.memory_space<vmem>>, vector<1x1x16x128xf32>
    %254 = vector.shape_cast %253 : vector<1x1x16x128xf32> to vector<16x128xf32>
    %255 = vector.shape_cast %252 : vector<16x128xf32> to vector<1x1x16x128xf32>
    tpu.vector_store %arg5[%c0_254, %c2_255, %c0_256, %c0_257], %255 {strides = array<i32>} : memref<1x8x16x128xf32, #tpu.memory_space<vmem>>, vector<1x1x16x128xf32>,
    %cst_258 = arith.constant 0.000000e+00 : f32
    %256 = vector.broadcast %cst_258 : f32 to vector<16x128xf32>
    %c8_i32_259 = arith.constant 8 : i32
    %257 = arith.muli %arg1, %c8_i32_259 : i32
    %c3_i32 = arith.constant 3 : i32
    %258 = arith.addi %257, %c3_i32 : i32
    %c1_i32_260 = arith.constant 1 : i32
    %259 = arith.muli %258, %c1_i32_260 : i32
    %c0_i32_261 = arith.constant 0 : i32
    %260 = arith.addi %259, %c0_i32_261 : i32
    %c0_262 = arith.constant 0 : index
    %261 = arith.index_cast %260 : i32 to index
    %c0_263 = arith.constant 0 : index
    %c0_264 = arith.constant 0 : index
    %262 = vector.load %arg2[%c0_262, %261, %c0_263, %c0_264] : memref<1x18x18x4xbf16, #tpu.memory_space<vmem>>, vector<1x1x16x4xbf16>
    %263 = vector.shape_cast %262 : vector<1x1x16x4xbf16> to vector<16x4xbf16>
    %c0_265 = arith.constant 0 : index
    %c0_266 = arith.constant 0 : index
    %c0_267 = arith.constant 0 : index
    %c0_268 = arith.constant 0 : index
    %264 = vector.load %arg3[%c0_265, %c0_266, %c0_267, %c0_268] : memref<3x3x4x128xbf16, #tpu.memory_space<vmem>>, vector<1x1x4x128xbf16>
    %265 = vector.shape_cast %264 : vector<1x1x4x128xbf16> to vector<4x128xbf16>
    %cst_269 = arith.constant dense<0.000000e+00> : vector<16x128xf32>
    %266 = tpu.matmul %263, %265, %cst_269 {dimension_numbers = #tpu.dot_dimension_numbers<[1], [0], [0], [1], [0, 0, 1, 1], [], []>} : vector<16x4xbf16>, vector<4x128xbf16>, vector<16x128xf32> -> vector<16x128xf32>
    %267 = arith.addf %256, %266 : vector<16x128xf32>
    %c0_270 = arith.constant 0 : index
    %268 = arith.index_cast %260 : i32 to index
    %c1_271 = arith.constant 1 : index
    %c0_272 = arith.constant 0 : index
    %269 = vector.load %arg2[%c0_270, %268, %c1_271, %c0_272] : memref<1x18x18x4xbf16, #tpu.memory_space<vmem>>, vector<1x1x16x4xbf16>
    %270 = vector.shape_cast %269 : vector<1x1x16x4xbf16> to vector<16x4xbf16>
    %c0_273 = arith.constant 0 : index
    %c1_274 = arith.constant 1 : index
    %c0_275 = arith.constant 0 : index
    %c0_276 = arith.constant 0 : index
    %271 = vector.load %arg3[%c0_273, %c1_274, %c0_275, %c0_276] : memref<3x3x4x128xbf16, #tpu.memory_space<vmem>>, vector<1x1x4x128xbf16>
    %272 = vector.shape_cast %271 : vector<1x1x4x128xbf16> to vector<4x128xbf16>
    %cst_277 = arith.constant dense<0.000000e+00> : vector<16x128xf32>
    %273 = tpu.matmul %270, %272, %cst_277 {dimension_numbers = #tpu.dot_dimension_numbers<[1], [0], [0], [1], [0, 0, 1, 1], [], []>} : vector<16x4xbf16>, vector<4x128xbf16>, vector<16x128xf32> -> vector<16x128xf32>
    %274 = arith.addf %267, %273 : vector<16x128xf32>
    %c0_278 = arith.constant 0 : index
    %275 = arith.index_cast %260 : i32 to index
    %c2_279 = arith.constant 2 : index
    %c0_280 = arith.constant 0 : index
    %276 = vector.load %arg2[%c0_278, %275, %c2_279, %c0_280] : memref<1x18x18x4xbf16, #tpu.memory_space<vmem>>, vector<1x1x16x4xbf16>
    %277 = vector.shape_cast %276 : vector<1x1x16x4xbf16> to vector<16x4xbf16>
    %c0_281 = arith.constant 0 : index
    %c2_282 = arith.constant 2 : index
    %c0_283 = arith.constant 0 : index
    %c0_284 = arith.constant 0 : index
    %278 = vector.load %arg3[%c0_281, %c2_282, %c0_283, %c0_284] : memref<3x3x4x128xbf16, #tpu.memory_space<vmem>>, vector<1x1x4x128xbf16>
    %279 = vector.shape_cast %278 : vector<1x1x4x128xbf16> to vector<4x128xbf16>
    %cst_285 = arith.constant dense<0.000000e+00> : vector<16x128xf32>
    %280 = tpu.matmul %277, %279, %cst_285 {dimension_numbers = #tpu.dot_dimension_numbers<[1], [0], [0], [1], [0, 0, 1, 1], [], []>} : vector<16x4xbf16>, vector<4x128xbf16>, vector<16x128xf32> -> vector<16x128xf32>
    %281 = arith.addf %274, %280 : vector<16x128xf32>
    %c1_i32_286 = arith.constant 1 : i32
    %282 = arith.muli %258, %c1_i32_286 : i32
    %c1_i32_287 = arith.constant 1 : i32
    %283 = arith.addi %282, %c1_i32_287 : i32
    %c0_288 = arith.constant 0 : index
    %284 = arith.index_cast %283 : i32 to index
    %c0_289 = arith.constant 0 : index
    %c0_290 = arith.constant 0 : index
    %285 = vector.load %arg2[%c0_288, %284, %c0_289, %c0_290] : memref<1x18x18x4xbf16, #tpu.memory_space<vmem>>, vector<1x1x16x4xbf16>
    %286 = vector.shape_cast %285 : vector<1x1x16x4xbf16> to vector<16x4xbf16>
    %c1_291 = arith.constant 1 : index
    %c0_292 = arith.constant 0 : index
    %c0_293 = arith.constant 0 : index
    %c0_294 = arith.constant 0 : index
    %287 = vector.load %arg3[%c1_291, %c0_292, %c0_293, %c0_294] : memref<3x3x4x128xbf16, #tpu.memory_space<vmem>>, vector<1x1x4x128xbf16>
    %288 = vector.shape_cast %287 : vector<1x1x4x128xbf16> to vector<4x128xbf16>
    %cst_295 = arith.constant dense<0.000000e+00> : vector<16x128xf32>
    %289 = tpu.matmul %286, %288, %cst_295 {dimension_numbers = #tpu.dot_dimension_numbers<[1], [0], [0], [1], [0, 0, 1, 1], [], []>} : vector<16x4xbf16>, vector<4x128xbf16>, vector<16x128xf32> -> vector<16x128xf32>
    %290 = arith.addf %281, %289 : vector<16x128xf32>
    %c0_296 = arith.constant 0 : index
    %291 = arith.index_cast %283 : i32 to index
    %c1_297 = arith.constant 1 : index
    %c0_298 = arith.constant 0 : index
    %292 = vector.load %arg2[%c0_296, %291, %c1_297, %c0_298] : memref<1x18x18x4xbf16, #tpu.memory_space<vmem>>, vector<1x1x16x4xbf16>
    %293 = vector.shape_cast %292 : vector<1x1x16x4xbf16> to vector<16x4xbf16>
    %c1_299 = arith.constant 1 : index
    %c1_300 = arith.constant 1 : index
    %c0_301 = arith.constant 0 : index
    %c0_302 = arith.constant 0 : index
    %294 = vector.load %arg3[%c1_299, %c1_300, %c0_301, %c0_302] : memref<3x3x4x128xbf16, #tpu.memory_space<vmem>>, vector<1x1x4x128xbf16>
    %295 = vector.shape_cast %294 : vector<1x1x4x128xbf16> to vector<4x128xbf16>
    %cst_303 = arith.constant dense<0.000000e+00> : vector<16x128xf32>
    %296 = tpu.matmul %293, %295, %cst_303 {dimension_numbers = #tpu.dot_dimension_numbers<[1], [0], [0], [1], [0, 0, 1, 1], [], []>} : vector<16x4xbf16>, vector<4x128xbf16>, vector<16x128xf32> -> vector<16x128xf32>
    %297 = arith.addf %290, %296 : vector<16x128xf32>
    %c0_304 = arith.constant 0 : index
    %298 = arith.index_cast %283 : i32 to index
    %c2_305 = arith.constant 2 : index
    %c0_306 = arith.constant 0 : index
    %299 = vector.load %arg2[%c0_304, %298, %c2_305, %c0_306] : memref<1x18x18x4xbf16, #tpu.memory_space<vmem>>, vector<1x1x16x4xbf16>
    %300 = vector.shape_cast %299 : vector<1x1x16x4xbf16> to vector<16x4xbf16>
    %c1_307 = arith.constant 1 : index
    %c2_308 = arith.constant 2 : index
    %c0_309 = arith.constant 0 : index
    %c0_310 = arith.constant 0 : index
    %301 = vector.load %arg3[%c1_307, %c2_308, %c0_309, %c0_310] : memref<3x3x4x128xbf16, #tpu.memory_space<vmem>>, vector<1x1x4x128xbf16>
    %302 = vector.shape_cast %301 : vector<1x1x4x128xbf16> to vector<4x128xbf16>
    %cst_311 = arith.constant dense<0.000000e+00> : vector<16x128xf32>
    %303 = tpu.matmul %300, %302, %cst_311 {dimension_numbers = #tpu.dot_dimension_numbers<[1], [0], [0], [1], [0, 0, 1, 1], [], []>} : vector<16x4xbf16>, vector<4x128xbf16>, vector<16x128xf32> -> vector<16x128xf32>
    %304 = arith.addf %297, %303 : vector<16x128xf32>
    %c1_i32_312 = arith.constant 1 : i32
    %305 = arith.muli %258, %c1_i32_312 : i32
    %c2_i32_313 = arith.constant 2 : i32
    %306 = arith.addi %305, %c2_i32_313 : i32
    %c0_314 = arith.constant 0 : index
    %307 = arith.index_cast %306 : i32 to index
    %c0_315 = arith.constant 0 : index
    %c0_316 = arith.constant 0 : index
    %308 = vector.load %arg2[%c0_314, %307, %c0_315, %c0_316] : memref<1x18x18x4xbf16, #tpu.memory_space<vmem>>, vector<1x1x16x4xbf16>
    %309 = vector.shape_cast %308 : vector<1x1x16x4xbf16> to vector<16x4xbf16>
    %c2_317 = arith.constant 2 : index
    %c0_318 = arith.constant 0 : index
    %c0_319 = arith.constant 0 : index
    %c0_320 = arith.constant 0 : index
    %310 = vector.load %arg3[%c2_317, %c0_318, %c0_319, %c0_320] : memref<3x3x4x128xbf16, #tpu.memory_space<vmem>>, vector<1x1x4x128xbf16>
    %311 = vector.shape_cast %310 : vector<1x1x4x128xbf16> to vector<4x128xbf16>
    %cst_321 = arith.constant dense<0.000000e+00> : vector<16x128xf32>
    %312 = tpu.matmul %309, %311, %cst_321 {dimension_numbers = #tpu.dot_dimension_numbers<[1], [0], [0], [1], [0, 0, 1, 1], [], []>} : vector<16x4xbf16>, vector<4x128xbf16>, vector<16x128xf32> -> vector<16x128xf32>
    %313 = arith.addf %304, %312 : vector<16x128xf32>
    %c0_322 = arith.constant 0 : index
    %314 = arith.index_cast %306 : i32 to index
    %c1_323 = arith.constant 1 : index
    %c0_324 = arith.constant 0 : index
    %315 = vector.load %arg2[%c0_322, %314, %c1_323, %c0_324] : memref<1x18x18x4xbf16, #tpu.memory_space<vmem>>, vector<1x1x16x4xbf16>
    %316 = vector.shape_cast %315 : vector<1x1x16x4xbf16> to vector<16x4xbf16>
    %c2_325 = arith.constant 2 : index
    %c1_326 = arith.constant 1 : index
    %c0_327 = arith.constant 0 : index
    %c0_328 = arith.constant 0 : index
    %317 = vector.load %arg3[%c2_325, %c1_326, %c0_327, %c0_328] : memref<3x3x4x128xbf16, #tpu.memory_space<vmem>>, vector<1x1x4x128xbf16>
    %318 = vector.shape_cast %317 : vector<1x1x4x128xbf16> to vector<4x128xbf16>
    %cst_329 = arith.constant dense<0.000000e+00> : vector<16x128xf32>
    %319 = tpu.matmul %316, %318, %cst_329 {dimension_numbers = #tpu.dot_dimension_numbers<[1], [0], [0], [1], [0, 0, 1, 1], [], []>} : vector<16x4xbf16>, vector<4x128xbf16>, vector<16x128xf32> -> vector<16x128xf32>
    %320 = arith.addf %313, %319 : vector<16x128xf32>
    %c0_330 = arith.constant 0 : index
    %321 = arith.index_cast %306 : i32 to index
    %c2_331 = arith.constant 2 : index
    %c0_332 = arith.constant 0 : index
    %322 = vector.load %arg2[%c0_330, %321, %c2_331, %c0_332] : memref<1x18x18x4xbf16, #tpu.memory_space<vmem>>, vector<1x1x16x4xbf16>
    %323 = vector.shape_cast %322 : vector<1x1x16x4xbf16> to vector<16x4xbf16>
    %c2_333 = arith.constant 2 : index
    %c2_334 = arith.constant 2 : index
    %c0_335 = arith.constant 0 : index
    %c0_336 = arith.constant 0 : index
    %324 = vector.load %arg3[%c2_333, %c2_334, %c0_335, %c0_336] : memref<3x3x4x128xbf16, #tpu.memory_space<vmem>>, vector<1x1x4x128xbf16>
    %325 = vector.shape_cast %324 : vector<1x1x4x128xbf16> to vector<4x128xbf16>
    %cst_337 = arith.constant dense<0.000000e+00> : vector<16x128xf32>
    %326 = tpu.matmul %323, %325, %cst_337 {dimension_numbers = #tpu.dot_dimension_numbers<[1], [0], [0], [1], [0, 0, 1, 1], [], []>} : vector<16x4xbf16>, vector<4x128xbf16>, vector<16x128xf32> -> vector<16x128xf32>
    %327 = arith.addf %320, %326 : vector<16x128xf32>
    %328 = vector.broadcast %0 : vector<1x128xf32> to vector<16x128xf32>
    %329 = arith.addf %327, %328 : vector<16x128xf32>
    %cst_338 = arith.constant 0.000000e+00 : f32
    %330 = vector.broadcast %cst_338 : f32 to vector<16x128xf32>
    %331 = arith.minimumf %329, %330 : vector<16x128xf32>
    %332 = math.exp %331 : vector<16x128xf32>
    %cst_339 = arith.constant 1.000000e+00 : f32
    %333 = vector.broadcast %cst_339 : f32 to vector<16x128xf32>
    %334 = arith.subf %332, %333 : vector<16x128xf32>
    %cst_340 = arith.constant 0.000000e+00 : f32
    %335 = vector.broadcast %cst_340 : f32 to vector<16x128xf32>
    %336 = arith.cmpf ogt, %329, %335 : vector<16x128xf32>
    %337 = arith.select %336, %329, %334 : vector<16x128xi1>, vector<16x128xf32>
    %c0_341 = arith.constant 0 : index
    %c3 = arith.constant 3 : index
    %c0_342 = arith.constant 0 : index
    %c0_343 = arith.constant 0 : index
    %338 = vector.load %arg5[%c0_341, %c3, %c0_342, %c0_343] : memref<1x8x16x128xf32, #tpu.memory_space<vmem>>, vector<1x1x16x128xf32>
    %339 = vector.shape_cast %338 : vector<1x1x16x128xf32> to vector<16x128xf32>
    %340 = vector.shape_cast %337 : vector<16x128xf32> to vector<1x1x16x128xf32>
    tpu.vector_store %arg5[%c0_341, %c3, %c0_342, %c0_343], %340 {strides = array<i32>} : memref<1x8x16x128xf32, #tpu.memory_space<vmem>>, vector<1x1x16x128xf32>,
    %cst_344 = arith.constant 0.000000e+00 : f32
    %341 = vector.broadcast %cst_344 : f32 to vector<16x128xf32>
    %c8_i32_345 = arith.constant 8 : i32
    %342 = arith.muli %arg1, %c8_i32_345 : i32
    %c4_i32 = arith.constant 4 : i32
    %343 = arith.addi %342, %c4_i32 : i32
    %c1_i32_346 = arith.constant 1 : i32
    %344 = arith.muli %343, %c1_i32_346 : i32
    %c0_i32_347 = arith.constant 0 : i32
    %345 = arith.addi %344, %c0_i32_347 : i32
    %c0_348 = arith.constant 0 : index
    %346 = arith.index_cast %345 : i32 to index
    %c0_349 = arith.constant 0 : index
    %c0_350 = arith.constant 0 : index
    %347 = vector.load %arg2[%c0_348, %346, %c0_349, %c0_350] : memref<1x18x18x4xbf16, #tpu.memory_space<vmem>>, vector<1x1x16x4xbf16>
    %348 = vector.shape_cast %347 : vector<1x1x16x4xbf16> to vector<16x4xbf16>
    %c0_351 = arith.constant 0 : index
    %c0_352 = arith.constant 0 : index
    %c0_353 = arith.constant 0 : index
    %c0_354 = arith.constant 0 : index
    %349 = vector.load %arg3[%c0_351, %c0_352, %c0_353, %c0_354] : memref<3x3x4x128xbf16, #tpu.memory_space<vmem>>, vector<1x1x4x128xbf16>
    %350 = vector.shape_cast %349 : vector<1x1x4x128xbf16> to vector<4x128xbf16>
    %cst_355 = arith.constant dense<0.000000e+00> : vector<16x128xf32>
    %351 = tpu.matmul %348, %350, %cst_355 {dimension_numbers = #tpu.dot_dimension_numbers<[1], [0], [0], [1], [0, 0, 1, 1], [], []>} : vector<16x4xbf16>, vector<4x128xbf16>, vector<16x128xf32> -> vector<16x128xf32>
    %352 = arith.addf %341, %351 : vector<16x128xf32>
    %c0_356 = arith.constant 0 : index
    %353 = arith.index_cast %345 : i32 to index
    %c1_357 = arith.constant 1 : index
    %c0_358 = arith.constant 0 : index
    %354 = vector.load %arg2[%c0_356, %353, %c1_357, %c0_358] : memref<1x18x18x4xbf16, #tpu.memory_space<vmem>>, vector<1x1x16x4xbf16>
    %355 = vector.shape_cast %354 : vector<1x1x16x4xbf16> to vector<16x4xbf16>
    %c0_359 = arith.constant 0 : index
    %c1_360 = arith.constant 1 : index
    %c0_361 = arith.constant 0 : index
    %c0_362 = arith.constant 0 : index
    %356 = vector.load %arg3[%c0_359, %c1_360, %c0_361, %c0_362] : memref<3x3x4x128xbf16, #tpu.memory_space<vmem>>, vector<1x1x4x128xbf16>
    %357 = vector.shape_cast %356 : vector<1x1x4x128xbf16> to vector<4x128xbf16>
    %cst_363 = arith.constant dense<0.000000e+00> : vector<16x128xf32>
    %358 = tpu.matmul %355, %357, %cst_363 {dimension_numbers = #tpu.dot_dimension_numbers<[1], [0], [0], [1], [0, 0, 1, 1], [], []>} : vector<16x4xbf16>, vector<4x128xbf16>, vector<16x128xf32> -> vector<16x128xf32>
    %359 = arith.addf %352, %358 : vector<16x128xf32>
    %c0_364 = arith.constant 0 : index
    %360 = arith.index_cast %345 : i32 to index
    %c2_365 = arith.constant 2 : index
    %c0_366 = arith.constant 0 : index
    %361 = vector.load %arg2[%c0_364, %360, %c2_365, %c0_366] : memref<1x18x18x4xbf16, #tpu.memory_space<vmem>>, vector<1x1x16x4xbf16>
    %362 = vector.shape_cast %361 : vector<1x1x16x4xbf16> to vector<16x4xbf16>
    %c0_367 = arith.constant 0 : index
    %c2_368 = arith.constant 2 : index
    %c0_369 = arith.constant 0 : index
    %c0_370 = arith.constant 0 : index
    %363 = vector.load %arg3[%c0_367, %c2_368, %c0_369, %c0_370] : memref<3x3x4x128xbf16, #tpu.memory_space<vmem>>, vector<1x1x4x128xbf16>
    %364 = vector.shape_cast %363 : vector<1x1x4x128xbf16> to vector<4x128xbf16>
    %cst_371 = arith.constant dense<0.000000e+00> : vector<16x128xf32>
    %365 = tpu.matmul %362, %364, %cst_371 {dimension_numbers = #tpu.dot_dimension_numbers<[1], [0], [0], [1], [0, 0, 1, 1], [], []>} : vector<16x4xbf16>, vector<4x128xbf16>, vector<16x128xf32> -> vector<16x128xf32>
    %366 = arith.addf %359, %365 : vector<16x128xf32>
    %c1_i32_372 = arith.constant 1 : i32
    %367 = arith.muli %343, %c1_i32_372 : i32
    %c1_i32_373 = arith.constant 1 : i32
    %368 = arith.addi %367, %c1_i32_373 : i32
    %c0_374 = arith.constant 0 : index
    %369 = arith.index_cast %368 : i32 to index
    %c0_375 = arith.constant 0 : index
    %c0_376 = arith.constant 0 : index
    %370 = vector.load %arg2[%c0_374, %369, %c0_375, %c0_376] : memref<1x18x18x4xbf16, #tpu.memory_space<vmem>>, vector<1x1x16x4xbf16>
    %371 = vector.shape_cast %370 : vector<1x1x16x4xbf16> to vector<16x4xbf16>
    %c1_377 = arith.constant 1 : index
    %c0_378 = arith.constant 0 : index
    %c0_379 = arith.constant 0 : index
    %c0_380 = arith.constant 0 : index
    %372 = vector.load %arg3[%c1_377, %c0_378, %c0_379, %c0_380] : memref<3x3x4x128xbf16, #tpu.memory_space<vmem>>, vector<1x1x4x128xbf16>
    %373 = vector.shape_cast %372 : vector<1x1x4x128xbf16> to vector<4x128xbf16>
    %cst_381 = arith.constant dense<0.000000e+00> : vector<16x128xf32>
    %374 = tpu.matmul %371, %373, %cst_381 {dimension_numbers = #tpu.dot_dimension_numbers<[1], [0], [0], [1], [0, 0, 1, 1], [], []>} : vector<16x4xbf16>, vector<4x128xbf16>, vector<16x128xf32> -> vector<16x128xf32>
    %375 = arith.addf %366, %374 : vector<16x128xf32>
    %c0_382 = arith.constant 0 : index
    %376 = arith.index_cast %368 : i32 to index
    %c1_383 = arith.constant 1 : index
    %c0_384 = arith.constant 0 : index
    %377 = vector.load %arg2[%c0_382, %376, %c1_383, %c0_384] : memref<1x18x18x4xbf16, #tpu.memory_space<vmem>>, vector<1x1x16x4xbf16>
    %378 = vector.shape_cast %377 : vector<1x1x16x4xbf16> to vector<16x4xbf16>
    %c1_385 = arith.constant 1 : index
    %c1_386 = arith.constant 1 : index
    %c0_387 = arith.constant 0 : index
    %c0_388 = arith.constant 0 : index
    %379 = vector.load %arg3[%c1_385, %c1_386, %c0_387, %c0_388] : memref<3x3x4x128xbf16, #tpu.memory_space<vmem>>, vector<1x1x4x128xbf16>
    %380 = vector.shape_cast %379 : vector<1x1x4x128xbf16> to vector<4x128xbf16>
    %cst_389 = arith.constant dense<0.000000e+00> : vector<16x128xf32>
    %381 = tpu.matmul %378, %380, %cst_389 {dimension_numbers = #tpu.dot_dimension_numbers<[1], [0], [0], [1], [0, 0, 1, 1], [], []>} : vector<16x4xbf16>, vector<4x128xbf16>, vector<16x128xf32> -> vector<16x128xf32>
    %382 = arith.addf %375, %381 : vector<16x128xf32>
    %c0_390 = arith.constant 0 : index
    %383 = arith.index_cast %368 : i32 to index
    %c2_391 = arith.constant 2 : index
    %c0_392 = arith.constant 0 : index
    %384 = vector.load %arg2[%c0_390, %383, %c2_391, %c0_392] : memref<1x18x18x4xbf16, #tpu.memory_space<vmem>>, vector<1x1x16x4xbf16>
    %385 = vector.shape_cast %384 : vector<1x1x16x4xbf16> to vector<16x4xbf16>
    %c1_393 = arith.constant 1 : index
    %c2_394 = arith.constant 2 : index
    %c0_395 = arith.constant 0 : index
    %c0_396 = arith.constant 0 : index
    %386 = vector.load %arg3[%c1_393, %c2_394, %c0_395, %c0_396] : memref<3x3x4x128xbf16, #tpu.memory_space<vmem>>, vector<1x1x4x128xbf16>
    %387 = vector.shape_cast %386 : vector<1x1x4x128xbf16> to vector<4x128xbf16>
    %cst_397 = arith.constant dense<0.000000e+00> : vector<16x128xf32>
    %388 = tpu.matmul %385, %387, %cst_397 {dimension_numbers = #tpu.dot_dimension_numbers<[1], [0], [0], [1], [0, 0, 1, 1], [], []>} : vector<16x4xbf16>, vector<4x128xbf16>, vector<16x128xf32> -> vector<16x128xf32>
    %389 = arith.addf %382, %388 : vector<16x128xf32>
    %c1_i32_398 = arith.constant 1 : i32
    %390 = arith.muli %343, %c1_i32_398 : i32
    %c2_i32_399 = arith.constant 2 : i32
    %391 = arith.addi %390, %c2_i32_399 : i32
    %c0_400 = arith.constant 0 : index
    %392 = arith.index_cast %391 : i32 to index
    %c0_401 = arith.constant 0 : index
    %c0_402 = arith.constant 0 : index
    %393 = vector.load %arg2[%c0_400, %392, %c0_401, %c0_402] : memref<1x18x18x4xbf16, #tpu.memory_space<vmem>>, vector<1x1x16x4xbf16>
    %394 = vector.shape_cast %393 : vector<1x1x16x4xbf16> to vector<16x4xbf16>
    %c2_403 = arith.constant 2 : index
    %c0_404 = arith.constant 0 : index
    %c0_405 = arith.constant 0 : index
    %c0_406 = arith.constant 0 : index
    %395 = vector.load %arg3[%c2_403, %c0_404, %c0_405, %c0_406] : memref<3x3x4x128xbf16, #tpu.memory_space<vmem>>, vector<1x1x4x128xbf16>
    %396 = vector.shape_cast %395 : vector<1x1x4x128xbf16> to vector<4x128xbf16>
    %cst_407 = arith.constant dense<0.000000e+00> : vector<16x128xf32>
    %397 = tpu.matmul %394, %396, %cst_407 {dimension_numbers = #tpu.dot_dimension_numbers<[1], [0], [0], [1], [0, 0, 1, 1], [], []>} : vector<16x4xbf16>, vector<4x128xbf16>, vector<16x128xf32> -> vector<16x128xf32>
    %398 = arith.addf %389, %397 : vector<16x128xf32>
    %c0_408 = arith.constant 0 : index
    %399 = arith.index_cast %391 : i32 to index
    %c1_409 = arith.constant 1 : index
    %c0_410 = arith.constant 0 : index
    %400 = vector.load %arg2[%c0_408, %399, %c1_409, %c0_410] : memref<1x18x18x4xbf16, #tpu.memory_space<vmem>>, vector<1x1x16x4xbf16>
    %401 = vector.shape_cast %400 : vector<1x1x16x4xbf16> to vector<16x4xbf16>
    %c2_411 = arith.constant 2 : index
    %c1_412 = arith.constant 1 : index
    %c0_413 = arith.constant 0 : index
    %c0_414 = arith.constant 0 : index
    %402 = vector.load %arg3[%c2_411, %c1_412, %c0_413, %c0_414] : memref<3x3x4x128xbf16, #tpu.memory_space<vmem>>, vector<1x1x4x128xbf16>
    %403 = vector.shape_cast %402 : vector<1x1x4x128xbf16> to vector<4x128xbf16>
    %cst_415 = arith.constant dense<0.000000e+00> : vector<16x128xf32>
    %404 = tpu.matmul %401, %403, %cst_415 {dimension_numbers = #tpu.dot_dimension_numbers<[1], [0], [0], [1], [0, 0, 1, 1], [], []>} : vector<16x4xbf16>, vector<4x128xbf16>, vector<16x128xf32> -> vector<16x128xf32>
    %405 = arith.addf %398, %404 : vector<16x128xf32>
    %c0_416 = arith.constant 0 : index
    %406 = arith.index_cast %391 : i32 to index
    %c2_417 = arith.constant 2 : index
    %c0_418 = arith.constant 0 : index
    %407 = vector.load %arg2[%c0_416, %406, %c2_417, %c0_418] : memref<1x18x18x4xbf16, #tpu.memory_space<vmem>>, vector<1x1x16x4xbf16>
    %408 = vector.shape_cast %407 : vector<1x1x16x4xbf16> to vector<16x4xbf16>
    %c2_419 = arith.constant 2 : index
    %c2_420 = arith.constant 2 : index
    %c0_421 = arith.constant 0 : index
    %c0_422 = arith.constant 0 : index
    %409 = vector.load %arg3[%c2_419, %c2_420, %c0_421, %c0_422] : memref<3x3x4x128xbf16, #tpu.memory_space<vmem>>, vector<1x1x4x128xbf16>
    %410 = vector.shape_cast %409 : vector<1x1x4x128xbf16> to vector<4x128xbf16>
    %cst_423 = arith.constant dense<0.000000e+00> : vector<16x128xf32>
    %411 = tpu.matmul %408, %410, %cst_423 {dimension_numbers = #tpu.dot_dimension_numbers<[1], [0], [0], [1], [0, 0, 1, 1], [], []>} : vector<16x4xbf16>, vector<4x128xbf16>, vector<16x128xf32> -> vector<16x128xf32>
    %412 = arith.addf %405, %411 : vector<16x128xf32>
    %413 = vector.broadcast %0 : vector<1x128xf32> to vector<16x128xf32>
    %414 = arith.addf %412, %413 : vector<16x128xf32>
    %cst_424 = arith.constant 0.000000e+00 : f32
    %415 = vector.broadcast %cst_424 : f32 to vector<16x128xf32>
    %416 = arith.minimumf %414, %415 : vector<16x128xf32>
    %417 = math.exp %416 : vector<16x128xf32>
    %cst_425 = arith.constant 1.000000e+00 : f32
    %418 = vector.broadcast %cst_425 : f32 to vector<16x128xf32>
    %419 = arith.subf %417, %418 : vector<16x128xf32>
    %cst_426 = arith.constant 0.000000e+00 : f32
    %420 = vector.broadcast %cst_426 : f32 to vector<16x128xf32>
    %421 = arith.cmpf ogt, %414, %420 : vector<16x128xf32>
    %422 = arith.select %421, %414, %419 : vector<16x128xi1>, vector<16x128xf32>
    %c0_427 = arith.constant 0 : index
    %c4 = arith.constant 4 : index
    %c0_428 = arith.constant 0 : index
    %c0_429 = arith.constant 0 : index
    %423 = vector.load %arg5[%c0_427, %c4, %c0_428, %c0_429] : memref<1x8x16x128xf32, #tpu.memory_space<vmem>>, vector<1x1x16x128xf32>
    %424 = vector.shape_cast %423 : vector<1x1x16x128xf32> to vector<16x128xf32>
    %425 = vector.shape_cast %422 : vector<16x128xf32> to vector<1x1x16x128xf32>
    tpu.vector_store %arg5[%c0_427, %c4, %c0_428, %c0_429], %425 {strides = array<i32>} : memref<1x8x16x128xf32, #tpu.memory_space<vmem>>, vector<1x1x16x128xf32>,
    %cst_430 = arith.constant 0.000000e+00 : f32
    %426 = vector.broadcast %cst_430 : f32 to vector<16x128xf32>
    %c8_i32_431 = arith.constant 8 : i32
    %427 = arith.muli %arg1, %c8_i32_431 : i32
    %c5_i32 = arith.constant 5 : i32
    %428 = arith.addi %427, %c5_i32 : i32
    %c1_i32_432 = arith.constant 1 : i32
    %429 = arith.muli %428, %c1_i32_432 : i32
    %c0_i32_433 = arith.constant 0 : i32
    %430 = arith.addi %429, %c0_i32_433 : i32
    %c0_434 = arith.constant 0 : index
    %431 = arith.index_cast %430 : i32 to index
    %c0_435 = arith.constant 0 : index
    %c0_436 = arith.constant 0 : index
    %432 = vector.load %arg2[%c0_434, %431, %c0_435, %c0_436] : memref<1x18x18x4xbf16, #tpu.memory_space<vmem>>, vector<1x1x16x4xbf16>
    %433 = vector.shape_cast %432 : vector<1x1x16x4xbf16> to vector<16x4xbf16>
    %c0_437 = arith.constant 0 : index
    %c0_438 = arith.constant 0 : index
    %c0_439 = arith.constant 0 : index
    %c0_440 = arith.constant 0 : index
    %434 = vector.load %arg3[%c0_437, %c0_438, %c0_439, %c0_440] : memref<3x3x4x128xbf16, #tpu.memory_space<vmem>>, vector<1x1x4x128xbf16>
    %435 = vector.shape_cast %434 : vector<1x1x4x128xbf16> to vector<4x128xbf16>
    %cst_441 = arith.constant dense<0.000000e+00> : vector<16x128xf32>
    %436 = tpu.matmul %433, %435, %cst_441 {dimension_numbers = #tpu.dot_dimension_numbers<[1], [0], [0], [1], [0, 0, 1, 1], [], []>} : vector<16x4xbf16>, vector<4x128xbf16>, vector<16x128xf32> -> vector<16x128xf32>
    %437 = arith.addf %426, %436 : vector<16x128xf32>
    %c0_442 = arith.constant 0 : index
    %438 = arith.index_cast %430 : i32 to index
    %c1_443 = arith.constant 1 : index
    %c0_444 = arith.constant 0 : index
    %439 = vector.load %arg2[%c0_442, %438, %c1_443, %c0_444] : memref<1x18x18x4xbf16, #tpu.memory_space<vmem>>, vector<1x1x16x4xbf16>
    %440 = vector.shape_cast %439 : vector<1x1x16x4xbf16> to vector<16x4xbf16>
    %c0_445 = arith.constant 0 : index
    %c1_446 = arith.constant 1 : index
    %c0_447 = arith.constant 0 : index
    %c0_448 = arith.constant 0 : index
    %441 = vector.load %arg3[%c0_445, %c1_446, %c0_447, %c0_448] : memref<3x3x4x128xbf16, #tpu.memory_space<vmem>>, vector<1x1x4x128xbf16>
    %442 = vector.shape_cast %441 : vector<1x1x4x128xbf16> to vector<4x128xbf16>
    %cst_449 = arith.constant dense<0.000000e+00> : vector<16x128xf32>
    %443 = tpu.matmul %440, %442, %cst_449 {dimension_numbers = #tpu.dot_dimension_numbers<[1], [0], [0], [1], [0, 0, 1, 1], [], []>} : vector<16x4xbf16>, vector<4x128xbf16>, vector<16x128xf32> -> vector<16x128xf32>
    %444 = arith.addf %437, %443 : vector<16x128xf32>
    %c0_450 = arith.constant 0 : index
    %445 = arith.index_cast %430 : i32 to index
    %c2_451 = arith.constant 2 : index
    %c0_452 = arith.constant 0 : index
    %446 = vector.load %arg2[%c0_450, %445, %c2_451, %c0_452] : memref<1x18x18x4xbf16, #tpu.memory_space<vmem>>, vector<1x1x16x4xbf16>
    %447 = vector.shape_cast %446 : vector<1x1x16x4xbf16> to vector<16x4xbf16>
    %c0_453 = arith.constant 0 : index
    %c2_454 = arith.constant 2 : index
    %c0_455 = arith.constant 0 : index
    %c0_456 = arith.constant 0 : index
    %448 = vector.load %arg3[%c0_453, %c2_454, %c0_455, %c0_456] : memref<3x3x4x128xbf16, #tpu.memory_space<vmem>>, vector<1x1x4x128xbf16>
    %449 = vector.shape_cast %448 : vector<1x1x4x128xbf16> to vector<4x128xbf16>
    %cst_457 = arith.constant dense<0.000000e+00> : vector<16x128xf32>
    %450 = tpu.matmul %447, %449, %cst_457 {dimension_numbers = #tpu.dot_dimension_numbers<[1], [0], [0], [1], [0, 0, 1, 1], [], []>} : vector<16x4xbf16>, vector<4x128xbf16>, vector<16x128xf32> -> vector<16x128xf32>
    %451 = arith.addf %444, %450 : vector<16x128xf32>
    %c1_i32_458 = arith.constant 1 : i32
    %452 = arith.muli %428, %c1_i32_458 : i32
    %c1_i32_459 = arith.constant 1 : i32
    %453 = arith.addi %452, %c1_i32_459 : i32
    %c0_460 = arith.constant 0 : index
    %454 = arith.index_cast %453 : i32 to index
    %c0_461 = arith.constant 0 : index
    %c0_462 = arith.constant 0 : index
    %455 = vector.load %arg2[%c0_460, %454, %c0_461, %c0_462] : memref<1x18x18x4xbf16, #tpu.memory_space<vmem>>, vector<1x1x16x4xbf16>
    %456 = vector.shape_cast %455 : vector<1x1x16x4xbf16> to vector<16x4xbf16>
    %c1_463 = arith.constant 1 : index
    %c0_464 = arith.constant 0 : index
    %c0_465 = arith.constant 0 : index
    %c0_466 = arith.constant 0 : index
    %457 = vector.load %arg3[%c1_463, %c0_464, %c0_465, %c0_466] : memref<3x3x4x128xbf16, #tpu.memory_space<vmem>>, vector<1x1x4x128xbf16>
    %458 = vector.shape_cast %457 : vector<1x1x4x128xbf16> to vector<4x128xbf16>
    %cst_467 = arith.constant dense<0.000000e+00> : vector<16x128xf32>
    %459 = tpu.matmul %456, %458, %cst_467 {dimension_numbers = #tpu.dot_dimension_numbers<[1], [0], [0], [1], [0, 0, 1, 1], [], []>} : vector<16x4xbf16>, vector<4x128xbf16>, vector<16x128xf32> -> vector<16x128xf32>
    %460 = arith.addf %451, %459 : vector<16x128xf32>
    %c0_468 = arith.constant 0 : index
    %461 = arith.index_cast %453 : i32 to index
    %c1_469 = arith.constant 1 : index
    %c0_470 = arith.constant 0 : index
    %462 = vector.load %arg2[%c0_468, %461, %c1_469, %c0_470] : memref<1x18x18x4xbf16, #tpu.memory_space<vmem>>, vector<1x1x16x4xbf16>
    %463 = vector.shape_cast %462 : vector<1x1x16x4xbf16> to vector<16x4xbf16>
    %c1_471 = arith.constant 1 : index
    %c1_472 = arith.constant 1 : index
    %c0_473 = arith.constant 0 : index
    %c0_474 = arith.constant 0 : index
    %464 = vector.load %arg3[%c1_471, %c1_472, %c0_473, %c0_474] : memref<3x3x4x128xbf16, #tpu.memory_space<vmem>>, vector<1x1x4x128xbf16>
    %465 = vector.shape_cast %464 : vector<1x1x4x128xbf16> to vector<4x128xbf16>
    %cst_475 = arith.constant dense<0.000000e+00> : vector<16x128xf32>
    %466 = tpu.matmul %463, %465, %cst_475 {dimension_numbers = #tpu.dot_dimension_numbers<[1], [0], [0], [1], [0, 0, 1, 1], [], []>} : vector<16x4xbf16>, vector<4x128xbf16>, vector<16x128xf32> -> vector<16x128xf32>
    %467 = arith.addf %460, %466 : vector<16x128xf32>
    %c0_476 = arith.constant 0 : index
    %468 = arith.index_cast %453 : i32 to index
    %c2_477 = arith.constant 2 : index
    %c0_478 = arith.constant 0 : index
    %469 = vector.load %arg2[%c0_476, %468, %c2_477, %c0_478] : memref<1x18x18x4xbf16, #tpu.memory_space<vmem>>, vector<1x1x16x4xbf16>
    %470 = vector.shape_cast %469 : vector<1x1x16x4xbf16> to vector<16x4xbf16>
    %c1_479 = arith.constant 1 : index
    %c2_480 = arith.constant 2 : index
    %c0_481 = arith.constant 0 : index
    %c0_482 = arith.constant 0 : index
    %471 = vector.load %arg3[%c1_479, %c2_480, %c0_481, %c0_482] : memref<3x3x4x128xbf16, #tpu.memory_space<vmem>>, vector<1x1x4x128xbf16>
    %472 = vector.shape_cast %471 : vector<1x1x4x128xbf16> to vector<4x128xbf16>
    %cst_483 = arith.constant dense<0.000000e+00> : vector<16x128xf32>
    %473 = tpu.matmul %470, %472, %cst_483 {dimension_numbers = #tpu.dot_dimension_numbers<[1], [0], [0], [1], [0, 0, 1, 1], [], []>} : vector<16x4xbf16>, vector<4x128xbf16>, vector<16x128xf32> -> vector<16x128xf32>
    %474 = arith.addf %467, %473 : vector<16x128xf32>
    %c1_i32_484 = arith.constant 1 : i32
    %475 = arith.muli %428, %c1_i32_484 : i32
    %c2_i32_485 = arith.constant 2 : i32
    %476 = arith.addi %475, %c2_i32_485 : i32
    %c0_486 = arith.constant 0 : index
    %477 = arith.index_cast %476 : i32 to index
    %c0_487 = arith.constant 0 : index
    %c0_488 = arith.constant 0 : index
    %478 = vector.load %arg2[%c0_486, %477, %c0_487, %c0_488] : memref<1x18x18x4xbf16, #tpu.memory_space<vmem>>, vector<1x1x16x4xbf16>
    %479 = vector.shape_cast %478 : vector<1x1x16x4xbf16> to vector<16x4xbf16>
    %c2_489 = arith.constant 2 : index
    %c0_490 = arith.constant 0 : index
    %c0_491 = arith.constant 0 : index
    %c0_492 = arith.constant 0 : index
    %480 = vector.load %arg3[%c2_489, %c0_490, %c0_491, %c0_492] : memref<3x3x4x128xbf16, #tpu.memory_space<vmem>>, vector<1x1x4x128xbf16>
    %481 = vector.shape_cast %480 : vector<1x1x4x128xbf16> to vector<4x128xbf16>
    %cst_493 = arith.constant dense<0.000000e+00> : vector<16x128xf32>
    %482 = tpu.matmul %479, %481, %cst_493 {dimension_numbers = #tpu.dot_dimension_numbers<[1], [0], [0], [1], [0, 0, 1, 1], [], []>} : vector<16x4xbf16>, vector<4x128xbf16>, vector<16x128xf32> -> vector<16x128xf32>
    %483 = arith.addf %474, %482 : vector<16x128xf32>
    %c0_494 = arith.constant 0 : index
    %484 = arith.index_cast %476 : i32 to index
    %c1_495 = arith.constant 1 : index
    %c0_496 = arith.constant 0 : index
    %485 = vector.load %arg2[%c0_494, %484, %c1_495, %c0_496] : memref<1x18x18x4xbf16, #tpu.memory_space<vmem>>, vector<1x1x16x4xbf16>
    %486 = vector.shape_cast %485 : vector<1x1x16x4xbf16> to vector<16x4xbf16>
    %c2_497 = arith.constant 2 : index
    %c1_498 = arith.constant 1 : index
    %c0_499 = arith.constant 0 : index
    %c0_500 = arith.constant 0 : index
    %487 = vector.load %arg3[%c2_497, %c1_498, %c0_499, %c0_500] : memref<3x3x4x128xbf16, #tpu.memory_space<vmem>>, vector<1x1x4x128xbf16>
    %488 = vector.shape_cast %487 : vector<1x1x4x128xbf16> to vector<4x128xbf16>
    %cst_501 = arith.constant dense<0.000000e+00> : vector<16x128xf32>
    %489 = tpu.matmul %486, %488, %cst_501 {dimension_numbers = #tpu.dot_dimension_numbers<[1], [0], [0], [1], [0, 0, 1, 1], [], []>} : vector<16x4xbf16>, vector<4x128xbf16>, vector<16x128xf32> -> vector<16x128xf32>
    %490 = arith.addf %483, %489 : vector<16x128xf32>
    %c0_502 = arith.constant 0 : index
    %491 = arith.index_cast %476 : i32 to index
    %c2_503 = arith.constant 2 : index
    %c0_504 = arith.constant 0 : index
    %492 = vector.load %arg2[%c0_502, %491, %c2_503, %c0_504] : memref<1x18x18x4xbf16, #tpu.memory_space<vmem>>, vector<1x1x16x4xbf16>
    %493 = vector.shape_cast %492 : vector<1x1x16x4xbf16> to vector<16x4xbf16>
    %c2_505 = arith.constant 2 : index
    %c2_506 = arith.constant 2 : index
    %c0_507 = arith.constant 0 : index
    %c0_508 = arith.constant 0 : index
    %494 = vector.load %arg3[%c2_505, %c2_506, %c0_507, %c0_508] : memref<3x3x4x128xbf16, #tpu.memory_space<vmem>>, vector<1x1x4x128xbf16>
    %495 = vector.shape_cast %494 : vector<1x1x4x128xbf16> to vector<4x128xbf16>
    %cst_509 = arith.constant dense<0.000000e+00> : vector<16x128xf32>
    %496 = tpu.matmul %493, %495, %cst_509 {dimension_numbers = #tpu.dot_dimension_numbers<[1], [0], [0], [1], [0, 0, 1, 1], [], []>} : vector<16x4xbf16>, vector<4x128xbf16>, vector<16x128xf32> -> vector<16x128xf32>
    %497 = arith.addf %490, %496 : vector<16x128xf32>
    %498 = vector.broadcast %0 : vector<1x128xf32> to vector<16x128xf32>
    %499 = arith.addf %497, %498 : vector<16x128xf32>
    %cst_510 = arith.constant 0.000000e+00 : f32
    %500 = vector.broadcast %cst_510 : f32 to vector<16x128xf32>
    %501 = arith.minimumf %499, %500 : vector<16x128xf32>
    %502 = math.exp %501 : vector<16x128xf32>
    %cst_511 = arith.constant 1.000000e+00 : f32
    %503 = vector.broadcast %cst_511 : f32 to vector<16x128xf32>
    %504 = arith.subf %502, %503 : vector<16x128xf32>
    %cst_512 = arith.constant 0.000000e+00 : f32
    %505 = vector.broadcast %cst_512 : f32 to vector<16x128xf32>
    %506 = arith.cmpf ogt, %499, %505 : vector<16x128xf32>
    %507 = arith.select %506, %499, %504 : vector<16x128xi1>, vector<16x128xf32>
    %c0_513 = arith.constant 0 : index
    %c5 = arith.constant 5 : index
    %c0_514 = arith.constant 0 : index
    %c0_515 = arith.constant 0 : index
    %508 = vector.load %arg5[%c0_513, %c5, %c0_514, %c0_515] : memref<1x8x16x128xf32, #tpu.memory_space<vmem>>, vector<1x1x16x128xf32>
    %509 = vector.shape_cast %508 : vector<1x1x16x128xf32> to vector<16x128xf32>
    %510 = vector.shape_cast %507 : vector<16x128xf32> to vector<1x1x16x128xf32>
    tpu.vector_store %arg5[%c0_513, %c5, %c0_514, %c0_515], %510 {strides = array<i32>} : memref<1x8x16x128xf32, #tpu.memory_space<vmem>>, vector<1x1x16x128xf32>,
    %cst_516 = arith.constant 0.000000e+00 : f32
    %511 = vector.broadcast %cst_516 : f32 to vector<16x128xf32>
    %c8_i32_517 = arith.constant 8 : i32
    %512 = arith.muli %arg1, %c8_i32_517 : i32
    %c6_i32 = arith.constant 6 : i32
    %513 = arith.addi %512, %c6_i32 : i32
    %c1_i32_518 = arith.constant 1 : i32
    %514 = arith.muli %513, %c1_i32_518 : i32
    %c0_i32_519 = arith.constant 0 : i32
    %515 = arith.addi %514, %c0_i32_519 : i32
    %c0_520 = arith.constant 0 : index
    %516 = arith.index_cast %515 : i32 to index
    %c0_521 = arith.constant 0 : index
    %c0_522 = arith.constant 0 : index
    %517 = vector.load %arg2[%c0_520, %516, %c0_521, %c0_522] : memref<1x18x18x4xbf16, #tpu.memory_space<vmem>>, vector<1x1x16x4xbf16>
    %518 = vector.shape_cast %517 : vector<1x1x16x4xbf16> to vector<16x4xbf16>
    %c0_523 = arith.constant 0 : index
    %c0_524 = arith.constant 0 : index
    %c0_525 = arith.constant 0 : index
    %c0_526 = arith.constant 0 : index
    %519 = vector.load %arg3[%c0_523, %c0_524, %c0_525, %c0_526] : memref<3x3x4x128xbf16, #tpu.memory_space<vmem>>, vector<1x1x4x128xbf16>
    %520 = vector.shape_cast %519 : vector<1x1x4x128xbf16> to vector<4x128xbf16>
    %cst_527 = arith.constant dense<0.000000e+00> : vector<16x128xf32>
    %521 = tpu.matmul %518, %520, %cst_527 {dimension_numbers = #tpu.dot_dimension_numbers<[1], [0], [0], [1], [0, 0, 1, 1], [], []>} : vector<16x4xbf16>, vector<4x128xbf16>, vector<16x128xf32> -> vector<16x128xf32>
    %522 = arith.addf %511, %521 : vector<16x128xf32>
    %c0_528 = arith.constant 0 : index
    %523 = arith.index_cast %515 : i32 to index
    %c1_529 = arith.constant 1 : index
    %c0_530 = arith.constant 0 : index
    %524 = vector.load %arg2[%c0_528, %523, %c1_529, %c0_530] : memref<1x18x18x4xbf16, #tpu.memory_space<vmem>>, vector<1x1x16x4xbf16>
    %525 = vector.shape_cast %524 : vector<1x1x16x4xbf16> to vector<16x4xbf16>
    %c0_531 = arith.constant 0 : index
    %c1_532 = arith.constant 1 : index
    %c0_533 = arith.constant 0 : index
    %c0_534 = arith.constant 0 : index
    %526 = vector.load %arg3[%c0_531, %c1_532, %c0_533, %c0_534] : memref<3x3x4x128xbf16, #tpu.memory_space<vmem>>, vector<1x1x4x128xbf16>
    %527 = vector.shape_cast %526 : vector<1x1x4x128xbf16> to vector<4x128xbf16>
    %cst_535 = arith.constant dense<0.000000e+00> : vector<16x128xf32>
    %528 = tpu.matmul %525, %527, %cst_535 {dimension_numbers = #tpu.dot_dimension_numbers<[1], [0], [0], [1], [0, 0, 1, 1], [], []>} : vector<16x4xbf16>, vector<4x128xbf16>, vector<16x128xf32> -> vector<16x128xf32>
    %529 = arith.addf %522, %528 : vector<16x128xf32>
    %c0_536 = arith.constant 0 : index
    %530 = arith.index_cast %515 : i32 to index
    %c2_537 = arith.constant 2 : index
    %c0_538 = arith.constant 0 : index
    %531 = vector.load %arg2[%c0_536, %530, %c2_537, %c0_538] : memref<1x18x18x4xbf16, #tpu.memory_space<vmem>>, vector<1x1x16x4xbf16>
    %532 = vector.shape_cast %531 : vector<1x1x16x4xbf16> to vector<16x4xbf16>
    %c0_539 = arith.constant 0 : index
    %c2_540 = arith.constant 2 : index
    %c0_541 = arith.constant 0 : index
    %c0_542 = arith.constant 0 : index
    %533 = vector.load %arg3[%c0_539, %c2_540, %c0_541, %c0_542] : memref<3x3x4x128xbf16, #tpu.memory_space<vmem>>, vector<1x1x4x128xbf16>
    %534 = vector.shape_cast %533 : vector<1x1x4x128xbf16> to vector<4x128xbf16>
    %cst_543 = arith.constant dense<0.000000e+00> : vector<16x128xf32>
    %535 = tpu.matmul %532, %534, %cst_543 {dimension_numbers = #tpu.dot_dimension_numbers<[1], [0], [0], [1], [0, 0, 1, 1], [], []>} : vector<16x4xbf16>, vector<4x128xbf16>, vector<16x128xf32> -> vector<16x128xf32>
    %536 = arith.addf %529, %535 : vector<16x128xf32>
    %c1_i32_544 = arith.constant 1 : i32
    %537 = arith.muli %513, %c1_i32_544 : i32
    %c1_i32_545 = arith.constant 1 : i32
    %538 = arith.addi %537, %c1_i32_545 : i32
    %c0_546 = arith.constant 0 : index
    %539 = arith.index_cast %538 : i32 to index
    %c0_547 = arith.constant 0 : index
    %c0_548 = arith.constant 0 : index
    %540 = vector.load %arg2[%c0_546, %539, %c0_547, %c0_548] : memref<1x18x18x4xbf16, #tpu.memory_space<vmem>>, vector<1x1x16x4xbf16>
    %541 = vector.shape_cast %540 : vector<1x1x16x4xbf16> to vector<16x4xbf16>
    %c1_549 = arith.constant 1 : index
    %c0_550 = arith.constant 0 : index
    %c0_551 = arith.constant 0 : index
    %c0_552 = arith.constant 0 : index
    %542 = vector.load %arg3[%c1_549, %c0_550, %c0_551, %c0_552] : memref<3x3x4x128xbf16, #tpu.memory_space<vmem>>, vector<1x1x4x128xbf16>
    %543 = vector.shape_cast %542 : vector<1x1x4x128xbf16> to vector<4x128xbf16>
    %cst_553 = arith.constant dense<0.000000e+00> : vector<16x128xf32>
    %544 = tpu.matmul %541, %543, %cst_553 {dimension_numbers = #tpu.dot_dimension_numbers<[1], [0], [0], [1], [0, 0, 1, 1], [], []>} : vector<16x4xbf16>, vector<4x128xbf16>, vector<16x128xf32> -> vector<16x128xf32>
    %545 = arith.addf %536, %544 : vector<16x128xf32>
    %c0_554 = arith.constant 0 : index
    %546 = arith.index_cast %538 : i32 to index
    %c1_555 = arith.constant 1 : index
    %c0_556 = arith.constant 0 : index
    %547 = vector.load %arg2[%c0_554, %546, %c1_555, %c0_556] : memref<1x18x18x4xbf16, #tpu.memory_space<vmem>>, vector<1x1x16x4xbf16>
    %548 = vector.shape_cast %547 : vector<1x1x16x4xbf16> to vector<16x4xbf16>
    %c1_557 = arith.constant 1 : index
    %c1_558 = arith.constant 1 : index
    %c0_559 = arith.constant 0 : index
    %c0_560 = arith.constant 0 : index
    %549 = vector.load %arg3[%c1_557, %c1_558, %c0_559, %c0_560] : memref<3x3x4x128xbf16, #tpu.memory_space<vmem>>, vector<1x1x4x128xbf16>
    %550 = vector.shape_cast %549 : vector<1x1x4x128xbf16> to vector<4x128xbf16>
    %cst_561 = arith.constant dense<0.000000e+00> : vector<16x128xf32>
    %551 = tpu.matmul %548, %550, %cst_561 {dimension_numbers = #tpu.dot_dimension_numbers<[1], [0], [0], [1], [0, 0, 1, 1], [], []>} : vector<16x4xbf16>, vector<4x128xbf16>, vector<16x128xf32> -> vector<16x128xf32>
    %552 = arith.addf %545, %551 : vector<16x128xf32>
    %c0_562 = arith.constant 0 : index
    %553 = arith.index_cast %538 : i32 to index
    %c2_563 = arith.constant 2 : index
    %c0_564 = arith.constant 0 : index
    %554 = vector.load %arg2[%c0_562, %553, %c2_563, %c0_564] : memref<1x18x18x4xbf16, #tpu.memory_space<vmem>>, vector<1x1x16x4xbf16>
    %555 = vector.shape_cast %554 : vector<1x1x16x4xbf16> to vector<16x4xbf16>
    %c1_565 = arith.constant 1 : index
    %c2_566 = arith.constant 2 : index
    %c0_567 = arith.constant 0 : index
    %c0_568 = arith.constant 0 : index
    %556 = vector.load %arg3[%c1_565, %c2_566, %c0_567, %c0_568] : memref<3x3x4x128xbf16, #tpu.memory_space<vmem>>, vector<1x1x4x128xbf16>
    %557 = vector.shape_cast %556 : vector<1x1x4x128xbf16> to vector<4x128xbf16>
    %cst_569 = arith.constant dense<0.000000e+00> : vector<16x128xf32>
    %558 = tpu.matmul %555, %557, %cst_569 {dimension_numbers = #tpu.dot_dimension_numbers<[1], [0], [0], [1], [0, 0, 1, 1], [], []>} : vector<16x4xbf16>, vector<4x128xbf16>, vector<16x128xf32> -> vector<16x128xf32>
    %559 = arith.addf %552, %558 : vector<16x128xf32>
    %c1_i32_570 = arith.constant 1 : i32
    %560 = arith.muli %513, %c1_i32_570 : i32
    %c2_i32_571 = arith.constant 2 : i32
    %561 = arith.addi %560, %c2_i32_571 : i32
    %c0_572 = arith.constant 0 : index
    %562 = arith.index_cast %561 : i32 to index
    %c0_573 = arith.constant 0 : index
    %c0_574 = arith.constant 0 : index
    %563 = vector.load %arg2[%c0_572, %562, %c0_573, %c0_574] : memref<1x18x18x4xbf16, #tpu.memory_space<vmem>>, vector<1x1x16x4xbf16>
    %564 = vector.shape_cast %563 : vector<1x1x16x4xbf16> to vector<16x4xbf16>
    %c2_575 = arith.constant 2 : index
    %c0_576 = arith.constant 0 : index
    %c0_577 = arith.constant 0 : index
    %c0_578 = arith.constant 0 : index
    %565 = vector.load %arg3[%c2_575, %c0_576, %c0_577, %c0_578] : memref<3x3x4x128xbf16, #tpu.memory_space<vmem>>, vector<1x1x4x128xbf16>
    %566 = vector.shape_cast %565 : vector<1x1x4x128xbf16> to vector<4x128xbf16>
    %cst_579 = arith.constant dense<0.000000e+00> : vector<16x128xf32>
    %567 = tpu.matmul %564, %566, %cst_579 {dimension_numbers = #tpu.dot_dimension_numbers<[1], [0], [0], [1], [0, 0, 1, 1], [], []>} : vector<16x4xbf16>, vector<4x128xbf16>, vector<16x128xf32> -> vector<16x128xf32>
    %568 = arith.addf %559, %567 : vector<16x128xf32>
    %c0_580 = arith.constant 0 : index
    %569 = arith.index_cast %561 : i32 to index
    %c1_581 = arith.constant 1 : index
    %c0_582 = arith.constant 0 : index
    %570 = vector.load %arg2[%c0_580, %569, %c1_581, %c0_582] : memref<1x18x18x4xbf16, #tpu.memory_space<vmem>>, vector<1x1x16x4xbf16>
    %571 = vector.shape_cast %570 : vector<1x1x16x4xbf16> to vector<16x4xbf16>
    %c2_583 = arith.constant 2 : index
    %c1_584 = arith.constant 1 : index
    %c0_585 = arith.constant 0 : index
    %c0_586 = arith.constant 0 : index
    %572 = vector.load %arg3[%c2_583, %c1_584, %c0_585, %c0_586] : memref<3x3x4x128xbf16, #tpu.memory_space<vmem>>, vector<1x1x4x128xbf16>
    %573 = vector.shape_cast %572 : vector<1x1x4x128xbf16> to vector<4x128xbf16>
    %cst_587 = arith.constant dense<0.000000e+00> : vector<16x128xf32>
    %574 = tpu.matmul %571, %573, %cst_587 {dimension_numbers = #tpu.dot_dimension_numbers<[1], [0], [0], [1], [0, 0, 1, 1], [], []>} : vector<16x4xbf16>, vector<4x128xbf16>, vector<16x128xf32> -> vector<16x128xf32>
    %575 = arith.addf %568, %574 : vector<16x128xf32>
    %c0_588 = arith.constant 0 : index
    %576 = arith.index_cast %561 : i32 to index
    %c2_589 = arith.constant 2 : index
    %c0_590 = arith.constant 0 : index
    %577 = vector.load %arg2[%c0_588, %576, %c2_589, %c0_590] : memref<1x18x18x4xbf16, #tpu.memory_space<vmem>>, vector<1x1x16x4xbf16>
    %578 = vector.shape_cast %577 : vector<1x1x16x4xbf16> to vector<16x4xbf16>
    %c2_591 = arith.constant 2 : index
    %c2_592 = arith.constant 2 : index
    %c0_593 = arith.constant 0 : index
    %c0_594 = arith.constant 0 : index
    %579 = vector.load %arg3[%c2_591, %c2_592, %c0_593, %c0_594] : memref<3x3x4x128xbf16, #tpu.memory_space<vmem>>, vector<1x1x4x128xbf16>
    %580 = vector.shape_cast %579 : vector<1x1x4x128xbf16> to vector<4x128xbf16>
    %cst_595 = arith.constant dense<0.000000e+00> : vector<16x128xf32>
    %581 = tpu.matmul %578, %580, %cst_595 {dimension_numbers = #tpu.dot_dimension_numbers<[1], [0], [0], [1], [0, 0, 1, 1], [], []>} : vector<16x4xbf16>, vector<4x128xbf16>, vector<16x128xf32> -> vector<16x128xf32>
    %582 = arith.addf %575, %581 : vector<16x128xf32>
    %583 = vector.broadcast %0 : vector<1x128xf32> to vector<16x128xf32>
    %584 = arith.addf %582, %583 : vector<16x128xf32>
    %cst_596 = arith.constant 0.000000e+00 : f32
    %585 = vector.broadcast %cst_596 : f32 to vector<16x128xf32>
    %586 = arith.minimumf %584, %585 : vector<16x128xf32>
    %587 = math.exp %586 : vector<16x128xf32>
    %cst_597 = arith.constant 1.000000e+00 : f32
    %588 = vector.broadcast %cst_597 : f32 to vector<16x128xf32>
    %589 = arith.subf %587, %588 : vector<16x128xf32>
    %cst_598 = arith.constant 0.000000e+00 : f32
    %590 = vector.broadcast %cst_598 : f32 to vector<16x128xf32>
    %591 = arith.cmpf ogt, %584, %590 : vector<16x128xf32>
    %592 = arith.select %591, %584, %589 : vector<16x128xi1>, vector<16x128xf32>
    %c0_599 = arith.constant 0 : index
    %c6 = arith.constant 6 : index
    %c0_600 = arith.constant 0 : index
    %c0_601 = arith.constant 0 : index
    %593 = vector.load %arg5[%c0_599, %c6, %c0_600, %c0_601] : memref<1x8x16x128xf32, #tpu.memory_space<vmem>>, vector<1x1x16x128xf32>
    %594 = vector.shape_cast %593 : vector<1x1x16x128xf32> to vector<16x128xf32>
    %595 = vector.shape_cast %592 : vector<16x128xf32> to vector<1x1x16x128xf32>
    tpu.vector_store %arg5[%c0_599, %c6, %c0_600, %c0_601], %595 {strides = array<i32>} : memref<1x8x16x128xf32, #tpu.memory_space<vmem>>, vector<1x1x16x128xf32>,
    %cst_602 = arith.constant 0.000000e+00 : f32
    %596 = vector.broadcast %cst_602 : f32 to vector<16x128xf32>
    %c8_i32_603 = arith.constant 8 : i32
    %597 = arith.muli %arg1, %c8_i32_603 : i32
    %c7_i32 = arith.constant 7 : i32
    %598 = arith.addi %597, %c7_i32 : i32
    %c1_i32_604 = arith.constant 1 : i32
    %599 = arith.muli %598, %c1_i32_604 : i32
    %c0_i32_605 = arith.constant 0 : i32
    %600 = arith.addi %599, %c0_i32_605 : i32
    %c0_606 = arith.constant 0 : index
    %601 = arith.index_cast %600 : i32 to index
    %c0_607 = arith.constant 0 : index
    %c0_608 = arith.constant 0 : index
    %602 = vector.load %arg2[%c0_606, %601, %c0_607, %c0_608] : memref<1x18x18x4xbf16, #tpu.memory_space<vmem>>, vector<1x1x16x4xbf16>
    %603 = vector.shape_cast %602 : vector<1x1x16x4xbf16> to vector<16x4xbf16>
    %c0_609 = arith.constant 0 : index
    %c0_610 = arith.constant 0 : index
    %c0_611 = arith.constant 0 : index
    %c0_612 = arith.constant 0 : index
    %604 = vector.load %arg3[%c0_609, %c0_610, %c0_611, %c0_612] : memref<3x3x4x128xbf16, #tpu.memory_space<vmem>>, vector<1x1x4x128xbf16>
    %605 = vector.shape_cast %604 : vector<1x1x4x128xbf16> to vector<4x128xbf16>
    %cst_613 = arith.constant dense<0.000000e+00> : vector<16x128xf32>
    %606 = tpu.matmul %603, %605, %cst_613 {dimension_numbers = #tpu.dot_dimension_numbers<[1], [0], [0], [1], [0, 0, 1, 1], [], []>} : vector<16x4xbf16>, vector<4x128xbf16>, vector<16x128xf32> -> vector<16x128xf32>
    %607 = arith.addf %596, %606 : vector<16x128xf32>
    %c0_614 = arith.constant 0 : index
    %608 = arith.index_cast %600 : i32 to index
    %c1_615 = arith.constant 1 : index
    %c0_616 = arith.constant 0 : index
    %609 = vector.load %arg2[%c0_614, %608, %c1_615, %c0_616] : memref<1x18x18x4xbf16, #tpu.memory_space<vmem>>, vector<1x1x16x4xbf16>
    %610 = vector.shape_cast %609 : vector<1x1x16x4xbf16> to vector<16x4xbf16>
    %c0_617 = arith.constant 0 : index
    %c1_618 = arith.constant 1 : index
    %c0_619 = arith.constant 0 : index
    %c0_620 = arith.constant 0 : index
    %611 = vector.load %arg3[%c0_617, %c1_618, %c0_619, %c0_620] : memref<3x3x4x128xbf16, #tpu.memory_space<vmem>>, vector<1x1x4x128xbf16>
    %612 = vector.shape_cast %611 : vector<1x1x4x128xbf16> to vector<4x128xbf16>
    %cst_621 = arith.constant dense<0.000000e+00> : vector<16x128xf32>
    %613 = tpu.matmul %610, %612, %cst_621 {dimension_numbers = #tpu.dot_dimension_numbers<[1], [0], [0], [1], [0, 0, 1, 1], [], []>} : vector<16x4xbf16>, vector<4x128xbf16>, vector<16x128xf32> -> vector<16x128xf32>
    %614 = arith.addf %607, %613 : vector<16x128xf32>
    %c0_622 = arith.constant 0 : index
    %615 = arith.index_cast %600 : i32 to index
    %c2_623 = arith.constant 2 : index
    %c0_624 = arith.constant 0 : index
    %616 = vector.load %arg2[%c0_622, %615, %c2_623, %c0_624] : memref<1x18x18x4xbf16, #tpu.memory_space<vmem>>, vector<1x1x16x4xbf16>
    %617 = vector.shape_cast %616 : vector<1x1x16x4xbf16> to vector<16x4xbf16>
    %c0_625 = arith.constant 0 : index
    %c2_626 = arith.constant 2 : index
    %c0_627 = arith.constant 0 : index
    %c0_628 = arith.constant 0 : index
    %618 = vector.load %arg3[%c0_625, %c2_626, %c0_627, %c0_628] : memref<3x3x4x128xbf16, #tpu.memory_space<vmem>>, vector<1x1x4x128xbf16>
    %619 = vector.shape_cast %618 : vector<1x1x4x128xbf16> to vector<4x128xbf16>
    %cst_629 = arith.constant dense<0.000000e+00> : vector<16x128xf32>
    %620 = tpu.matmul %617, %619, %cst_629 {dimension_numbers = #tpu.dot_dimension_numbers<[1], [0], [0], [1], [0, 0, 1, 1], [], []>} : vector<16x4xbf16>, vector<4x128xbf16>, vector<16x128xf32> -> vector<16x128xf32>
    %621 = arith.addf %614, %620 : vector<16x128xf32>
    %c1_i32_630 = arith.constant 1 : i32
    %622 = arith.muli %598, %c1_i32_630 : i32
    %c1_i32_631 = arith.constant 1 : i32
    %623 = arith.addi %622, %c1_i32_631 : i32
    %c0_632 = arith.constant 0 : index
    %624 = arith.index_cast %623 : i32 to index
    %c0_633 = arith.constant 0 : index
    %c0_634 = arith.constant 0 : index
    %625 = vector.load %arg2[%c0_632, %624, %c0_633, %c0_634] : memref<1x18x18x4xbf16, #tpu.memory_space<vmem>>, vector<1x1x16x4xbf16>
    %626 = vector.shape_cast %625 : vector<1x1x16x4xbf16> to vector<16x4xbf16>
    %c1_635 = arith.constant 1 : index
    %c0_636 = arith.constant 0 : index
    %c0_637 = arith.constant 0 : index
    %c0_638 = arith.constant 0 : index
    %627 = vector.load %arg3[%c1_635, %c0_636, %c0_637, %c0_638] : memref<3x3x4x128xbf16, #tpu.memory_space<vmem>>, vector<1x1x4x128xbf16>
    %628 = vector.shape_cast %627 : vector<1x1x4x128xbf16> to vector<4x128xbf16>
    %cst_639 = arith.constant dense<0.000000e+00> : vector<16x128xf32>
    %629 = tpu.matmul %626, %628, %cst_639 {dimension_numbers = #tpu.dot_dimension_numbers<[1], [0], [0], [1], [0, 0, 1, 1], [], []>} : vector<16x4xbf16>, vector<4x128xbf16>, vector<16x128xf32> -> vector<16x128xf32>
    %630 = arith.addf %621, %629 : vector<16x128xf32>
    %c0_640 = arith.constant 0 : index
    %631 = arith.index_cast %623 : i32 to index
    %c1_641 = arith.constant 1 : index
    %c0_642 = arith.constant 0 : index
    %632 = vector.load %arg2[%c0_640, %631, %c1_641, %c0_642] : memref<1x18x18x4xbf16, #tpu.memory_space<vmem>>, vector<1x1x16x4xbf16>
    %633 = vector.shape_cast %632 : vector<1x1x16x4xbf16> to vector<16x4xbf16>
    %c1_643 = arith.constant 1 : index
    %c1_644 = arith.constant 1 : index
    %c0_645 = arith.constant 0 : index
    %c0_646 = arith.constant 0 : index
    %634 = vector.load %arg3[%c1_643, %c1_644, %c0_645, %c0_646] : memref<3x3x4x128xbf16, #tpu.memory_space<vmem>>, vector<1x1x4x128xbf16>
    %635 = vector.shape_cast %634 : vector<1x1x4x128xbf16> to vector<4x128xbf16>
    %cst_647 = arith.constant dense<0.000000e+00> : vector<16x128xf32>
    %636 = tpu.matmul %633, %635, %cst_647 {dimension_numbers = #tpu.dot_dimension_numbers<[1], [0], [0], [1], [0, 0, 1, 1], [], []>} : vector<16x4xbf16>, vector<4x128xbf16>, vector<16x128xf32> -> vector<16x128xf32>
    %637 = arith.addf %630, %636 : vector<16x128xf32>
    %c0_648 = arith.constant 0 : index
    %638 = arith.index_cast %623 : i32 to index
    %c2_649 = arith.constant 2 : index
    %c0_650 = arith.constant 0 : index
    %639 = vector.load %arg2[%c0_648, %638, %c2_649, %c0_650] : memref<1x18x18x4xbf16, #tpu.memory_space<vmem>>, vector<1x1x16x4xbf16>
    %640 = vector.shape_cast %639 : vector<1x1x16x4xbf16> to vector<16x4xbf16>
    %c1_651 = arith.constant 1 : index
    %c2_652 = arith.constant 2 : index
    %c0_653 = arith.constant 0 : index
    %c0_654 = arith.constant 0 : index
    %641 = vector.load %arg3[%c1_651, %c2_652, %c0_653, %c0_654] : memref<3x3x4x128xbf16, #tpu.memory_space<vmem>>, vector<1x1x4x128xbf16>
    %642 = vector.shape_cast %641 : vector<1x1x4x128xbf16> to vector<4x128xbf16>
    %cst_655 = arith.constant dense<0.000000e+00> : vector<16x128xf32>
    %643 = tpu.matmul %640, %642, %cst_655 {dimension_numbers = #tpu.dot_dimension_numbers<[1], [0], [0], [1], [0, 0, 1, 1], [], []>} : vector<16x4xbf16>, vector<4x128xbf16>, vector<16x128xf32> -> vector<16x128xf32>
    %644 = arith.addf %637, %643 : vector<16x128xf32>
    %c1_i32_656 = arith.constant 1 : i32
    %645 = arith.muli %598, %c1_i32_656 : i32
    %c2_i32_657 = arith.constant 2 : i32
    %646 = arith.addi %645, %c2_i32_657 : i32
    %c0_658 = arith.constant 0 : index
    %647 = arith.index_cast %646 : i32 to index
    %c0_659 = arith.constant 0 : index
    %c0_660 = arith.constant 0 : index
    %648 = vector.load %arg2[%c0_658, %647, %c0_659, %c0_660] : memref<1x18x18x4xbf16, #tpu.memory_space<vmem>>, vector<1x1x16x4xbf16>
    %649 = vector.shape_cast %648 : vector<1x1x16x4xbf16> to vector<16x4xbf16>
    %c2_661 = arith.constant 2 : index
    %c0_662 = arith.constant 0 : index
    %c0_663 = arith.constant 0 : index
    %c0_664 = arith.constant 0 : index
    %650 = vector.load %arg3[%c2_661, %c0_662, %c0_663, %c0_664] : memref<3x3x4x128xbf16, #tpu.memory_space<vmem>>, vector<1x1x4x128xbf16>
    %651 = vector.shape_cast %650 : vector<1x1x4x128xbf16> to vector<4x128xbf16>
    %cst_665 = arith.constant dense<0.000000e+00> : vector<16x128xf32>
    %652 = tpu.matmul %649, %651, %cst_665 {dimension_numbers = #tpu.dot_dimension_numbers<[1], [0], [0], [1], [0, 0, 1, 1], [], []>} : vector<16x4xbf16>, vector<4x128xbf16>, vector<16x128xf32> -> vector<16x128xf32>
    %653 = arith.addf %644, %652 : vector<16x128xf32>
    %c0_666 = arith.constant 0 : index
    %654 = arith.index_cast %646 : i32 to index
    %c1_667 = arith.constant 1 : index
    %c0_668 = arith.constant 0 : index
    %655 = vector.load %arg2[%c0_666, %654, %c1_667, %c0_668] : memref<1x18x18x4xbf16, #tpu.memory_space<vmem>>, vector<1x1x16x4xbf16>
    %656 = vector.shape_cast %655 : vector<1x1x16x4xbf16> to vector<16x4xbf16>
    %c2_669 = arith.constant 2 : index
    %c1_670 = arith.constant 1 : index
    %c0_671 = arith.constant 0 : index
    %c0_672 = arith.constant 0 : index
    %657 = vector.load %arg3[%c2_669, %c1_670, %c0_671, %c0_672] : memref<3x3x4x128xbf16, #tpu.memory_space<vmem>>, vector<1x1x4x128xbf16>
    %658 = vector.shape_cast %657 : vector<1x1x4x128xbf16> to vector<4x128xbf16>
    %cst_673 = arith.constant dense<0.000000e+00> : vector<16x128xf32>
    %659 = tpu.matmul %656, %658, %cst_673 {dimension_numbers = #tpu.dot_dimension_numbers<[1], [0], [0], [1], [0, 0, 1, 1], [], []>} : vector<16x4xbf16>, vector<4x128xbf16>, vector<16x128xf32> -> vector<16x128xf32>
    %660 = arith.addf %653, %659 : vector<16x128xf32>
    %c0_674 = arith.constant 0 : index
    %661 = arith.index_cast %646 : i32 to index
    %c2_675 = arith.constant 2 : index
    %c0_676 = arith.constant 0 : index
    %662 = vector.load %arg2[%c0_674, %661, %c2_675, %c0_676] : memref<1x18x18x4xbf16, #tpu.memory_space<vmem>>, vector<1x1x16x4xbf16>
    %663 = vector.shape_cast %662 : vector<1x1x16x4xbf16> to vector<16x4xbf16>
    %c2_677 = arith.constant 2 : index
    %c2_678 = arith.constant 2 : index
    %c0_679 = arith.constant 0 : index
    %c0_680 = arith.constant 0 : index
    %664 = vector.load %arg3[%c2_677, %c2_678, %c0_679, %c0_680] : memref<3x3x4x128xbf16, #tpu.memory_space<vmem>>, vector<1x1x4x128xbf16>
    %665 = vector.shape_cast %664 : vector<1x1x4x128xbf16> to vector<4x128xbf16>
    %cst_681 = arith.constant dense<0.000000e+00> : vector<16x128xf32>
    %666 = tpu.matmul %663, %665, %cst_681 {dimension_numbers = #tpu.dot_dimension_numbers<[1], [0], [0], [1], [0, 0, 1, 1], [], []>} : vector<16x4xbf16>, vector<4x128xbf16>, vector<16x128xf32> -> vector<16x128xf32>
    %667 = arith.addf %660, %666 : vector<16x128xf32>
    %668 = vector.broadcast %0 : vector<1x128xf32> to vector<16x128xf32>
    %669 = arith.addf %667, %668 : vector<16x128xf32>
    %cst_682 = arith.constant 0.000000e+00 : f32
    %670 = vector.broadcast %cst_682 : f32 to vector<16x128xf32>
    %671 = arith.minimumf %669, %670 : vector<16x128xf32>
    %672 = math.exp %671 : vector<16x128xf32>
    %cst_683 = arith.constant 1.000000e+00 : f32
    %673 = vector.broadcast %cst_683 : f32 to vector<16x128xf32>
    %674 = arith.subf %672, %673 : vector<16x128xf32>
    %cst_684 = arith.constant 0.000000e+00 : f32
    %675 = vector.broadcast %cst_684 : f32 to vector<16x128xf32>
    %676 = arith.cmpf ogt, %669, %675 : vector<16x128xf32>
    %677 = arith.select %676, %669, %674 : vector<16x128xi1>, vector<16x128xf32>
    %c0_685 = arith.constant 0 : index
    %c7 = arith.constant 7 : index
    %c0_686 = arith.constant 0 : index
    %c0_687 = arith.constant 0 : index
    %678 = vector.load %arg5[%c0_685, %c7, %c0_686, %c0_687] : memref<1x8x16x128xf32, #tpu.memory_space<vmem>>, vector<1x1x16x128xf32>
    %679 = vector.shape_cast %678 : vector<1x1x16x128xf32> to vector<16x128xf32>
    %680 = vector.shape_cast %677 : vector<16x128xf32> to vector<1x1x16x128xf32>
    tpu.vector_store %arg5[%c0_685, %c7, %c0_686, %c0_687], %680 {strides = array<i32>} : memref<1x8x16x128xf32, #tpu.memory_space<vmem>>, vector<1x1x16x128xf32>,
    return
  }
  func.func @transform_0(%arg0: i32, %arg1: i32) -> (i32, i32, i32, i32) {
    %c0_i32 = arith.constant 0 : i32
    %c0_i32_0 = arith.constant 0 : i32
    %c0_i32_1 = arith.constant 0 : i32
    %c0_i32_2 = arith.constant 0 : i32
    return %arg0, %c0_i32, %c0_i32_0, %c0_i32_1 : i32, i32, i32, i32
  }
  func.func @transform_1(%arg0: i32, %arg1: i32) -> (i32, i32, i32, i32) {
    %c0_i32 = arith.constant 0 : i32
    %c0_i32_0 = arith.constant 0 : i32
    %c0_i32_1 = arith.constant 0 : i32
    %c0_i32_2 = arith.constant 0 : i32
    %c0_i32_3 = arith.constant 0 : i32
    return %c0_i32, %c0_i32_0, %c0_i32_1, %c0_i32_2 : i32, i32, i32, i32
  }
  func.func @transform_2(%arg0: i32, %arg1: i32) -> (i32, i32) {
    %c0_i32 = arith.constant 0 : i32
    %c0_i32_0 = arith.constant 0 : i32
    %c0_i32_1 = arith.constant 0 : i32
    return %c0_i32, %c0_i32_0 : i32, i32
  }
  func.func @transform_3(%arg0: i32, %arg1: i32) -> (i32, i32, i32, i32) {
    %c0_i32 = arith.constant 0 : i32
    %c0_i32_0 = arith.constant 0 : i32
    %c0_i32_1 = arith.constant 0 : i32
    return %arg0, %arg1, %c0_i32, %c0_i32_0 : i32, i32, i32, i32
  }
}

</mosaic_0001>

<llo_original>
// kernel: tpu_custom_call.1
$region0: #{tpu_custom_call.1}
  #allocation0 [shape = 'u32[]', space=smem, size = 0x4, offset = 0x4, fixed_abs, tag = 'smem constant byte address 0x4 - core index']
  #allocation1 [shape = 'u32[144,128]{1,0:T(1,128)}', space=vmem, size = 0x12000, scoped, tag = 'internal scratch']
  %s0 = inlined_call_operand.vmem [shape: bf16[2,18,18,4], index: 0, kind: input, shape index: {}]
  %s1 = inlined_call_operand.vmem [shape: bf16[3,3,4,128], index: 1, kind: input, shape index: {}]
  %s2 = inlined_call_operand.vmem [shape: f32[1,128], index: 2, kind: input, shape index: {}]
  %s3 = inlined_call_operand.hbm [shape: f32[2,16,16,128], index: 3, kind: output, shape index: {}]
  %s4 = sld [smem:[#allocation0]]
  $region45: #{tpu_custom_call.1} parent=0
    _
  %s6 = ssub.s32 1, %s4
  %s7 = scalar_select 0, %s6, %s4
  $region1: #{tpu_custom_call.1} parent=0
    #allocation2 [shape = 'u8[131072]{0}', space=vmem, size = 0x20000, scoped, tag = 'output window, operand 0']
    #allocation3 [shape = 's32[2]{0}', space=sflag, size = 0x8, scoped, tag = 'scoped memory for tpu_custom_call.1']
    %8 = vsyncpa [#allocation3], 0
    %s9 = scalar_lea.sflag [#allocation3], 1
    %10 = vsyncpa %s9, 0
    loop: start=0, step=1, limit=6
    $region2: #{tpu_custom_call.1} parent=1 // loop_pre_header
      _
    $region3: #{tpu_custom_call.1} parent=1 // loop_header
      %s12 = sphi 0, %s16
      %p13 = scmp.ge.s32.totalorder %s12, 6
      %s19 = sphi 0, %s31
      %s20 = sphi 0, %s27
      %s21 = sphi 0, %s19
      %s22 = sphi 0, %s20
      %s23 = sphi 0, %s21
      %s24 = sphi 0, %s22
      %s34 = sphi 0, %s36
      %s37 = sphi 0, %s34
      %s38 = sphi 0, %s37
      %s54 = sphi 0, %s38
      %s58 = sphi 0, %s58
      %s60 = sphi 0, %s58
      %s61 = sphi 0, %s60
      %s75 = sphi 0, %s61
      %s79 = sphi 0, %s79
      %s81 = sphi 0, %s79
      %s82 = sphi 0, %s81
      %s96 = sphi 0, %s82
      %s104 = sphi 0, %s106
      %s107 = sphi 0, %s104
      %s108 = sphi 0, %s107
      %s124 = sphi 0, %s108
    $region4: #{tpu_custom_call.1} parent=1 // loop_header_branch
      %15 = sbr.rel (%p13) target = $region8
    $region5: #{tpu_custom_call.1} parent=1 // loop_body
      %s17 = ssub.s32 %s12, 1
      %s18 = ssub.s32 %s12, 2
      %s25 = sadd.s32 1, %s20
      %p26 = scmp.ge.s32.totalorder %s25, 2
      %s27 = scalar_select %p26, 0, %s25
      %s28 = sadd.s32 1, %s19
      %s29 = scalar_select %p26, %s28, %s19
      %p30 = scmp.ge.s32.totalorder %s29, 2
      %s31 = scalar_select %p30, 0, %s29
      %s32 = ssub.s32 %s19, %s31
      %p33 = scmp.eq.s32.totalorder %s32, 0
      %s35 = sadd.s32 %s34, 1
      %s36 = scalar_select %p33, %s34, %s35
      %p39 = pneg %p33
      %p40 = scmp.eq.s32.totalorder %s12, 3
      %p41 = por %p39, %p40
      %p42 = scmp.ne.s32.totalorder %s34, %s37
      %p43 = scmp.eq.s32.totalorder %s12, 0
      %p44 = por %p42, %p43
      %p45 = scmp.ne.s32.totalorder %s34, %s37
      %p46 = scmp.eq.s32.totalorder %s17, 3
      %p47 = por %p45, %p46
      %p48 = scmp.ne.s32.totalorder %s37, %s38
      %p49 = scmp.eq.s32.totalorder %s17, 0
      %p50 = por %p48, %p49
      %p51 = scmp.ne.s32.totalorder %s37, %s38
      %p52 = scmp.eq.s32.totalorder %s18, 3
      %p53 = por %p51, %p52
      %p55 = scmp.ne.s32.totalorder %s38, %s54
      %p56 = scmp.eq.s32.totalorder %s18, 0
      %p57 = por %p55, %p56
      %s59 = sadd.s32 %s58, 1
      %p62 = scmp.eq.s32.totalorder %s12, 3
      %p63 = scmp.ne.s32.totalorder %s58, %s60
      %p64 = scmp.eq.s32.totalorder %s12, 0
      %p65 = por %p63, %p64
      %p66 = scmp.ne.s32.totalorder %s58, %s60
      %p67 = scmp.eq.s32.totalorder %s17, 3
      %p68 = por %p66, %p67
      %p69 = scmp.ne.s32.totalorder %s60, %s61
      %p70 = scmp.eq.s32.totalorder %s17, 0
      %p71 = por %p69, %p70
      %p72 = scmp.ne.s32.totalorder %s60, %s61
      %p73 = scmp.eq.s32.totalorder %s18, 3
      %p74 = por %p72, %p73
      %p76 = scmp.ne.s32.totalorder %s61, %s75
      %p77 = scmp.eq.s32.totalorder %s18, 0
      %p78 = por %p76, %p77
      %s80 = sadd.s32 %s79, 1
      %p83 = scmp.eq.s32.totalorder %s12, 3
      %p84 = scmp.ne.s32.totalorder %s79, %s81
      %p85 = scmp.eq.s32.totalorder %s12, 0
      %p86 = por %p84, %p85
      %p87 = scmp.ne.s32.totalorder %s79, %s81
      %p88 = scmp.eq.s32.totalorder %s17, 3
      %p89 = por %p87, %p88
      %p90 = scmp.ne.s32.totalorder %s81, %s82
      %p91 = scmp.eq.s32.totalorder %s17, 0
      %p92 = por %p90, %p91
      %p93 = scmp.ne.s32.totalorder %s81, %s82
      %p94 = scmp.eq.s32.totalorder %s18, 3
      %p95 = por %p93, %p94
      %p97 = scmp.ne.s32.totalorder %s82, %s96
      %p98 = scmp.eq.s32.totalorder %s18, 0
      %p99 = por %p97, %p98
      %s100 = ssub.s32 %s19, %s31
      %s101 = ssub.s32 %s20, %s27
      %s102 = sor.u32 %s100, %s101
      %p103 = scmp.eq.s32.totalorder %s102, 0
      %s105 = sadd.s32 %s104, 1
      %s106 = scalar_select %p103, %s104, %s105
      %p109 = pneg %p103
      %p110 = scmp.eq.s32.totalorder %s12, 3
      %p111 = por %p109, %p110
      %p112 = scmp.ne.s32.totalorder %s104, %s107
      %p113 = scmp.eq.s32.totalorder %s12, 0
      %p114 = por %p112, %p113
      %p115 = scmp.ne.s32.totalorder %s104, %s107
      %p116 = scmp.eq.s32.totalorder %s17, 3
      %p117 = por %p115, %p116
      %p118 = scmp.ne.s32.totalorder %s107, %s108
      %p119 = scmp.eq.s32.totalorder %s17, 0
      %p120 = por %p118, %p119
      %p121 = scmp.ne.s32.totalorder %s107, %s108
      %p122 = scmp.eq.s32.totalorder %s18, 3
      %p123 = por %p121, %p122
      %p125 = scmp.ne.s32.totalorder %s108, %s124
      %p126 = scmp.eq.s32.totalorder %s18, 0
      %p127 = por %p125, %p126
      %p128 = scmp.le.s32.totalorder 1, %s12
      %p129 = scmp.lt.s32.totalorder %s12, 5
      %p130 = pnand %p128, %p129
      %p131 = pneg %p130
      // Predicated region
      $region9: #{tpu_custom_call.1} parent=5 // pred_check
        _
      $region10: #{tpu_custom_call.1} parent=5 // pred_check_branch
        %133 = sbr.rel (%p130) target = $region12
      $region11: #{tpu_custom_call.1} parent=5 // pred_region
        %s134 = ssub.s32 %s12, 1
        // Predicated region
        $region13: #{tpu_custom_call.1} parent=11 // pred_check
          %p135 = pneg %p71
        $region14: #{tpu_custom_call.1} parent=11 // pred_check_branch
          %137 = sbr.rel (%p135) target = $region16
        $region15: #{tpu_custom_call.1} parent=11 // pred_region
          _
        $region16: #{tpu_custom_call.1} parent=11 // pred_fallthru
          _
        // Predicated region
        $region17: #{tpu_custom_call.1} parent=11 // pred_check
          %p138 = pneg %p92
        $region18: #{tpu_custom_call.1} parent=11 // pred_check_branch
          %140 = sbr.rel (%p138) target = $region20
        $region19: #{tpu_custom_call.1} parent=11 // pred_region
          _
        $region20: #{tpu_custom_call.1} parent=11 // pred_fallthru
          _
      $region12: #{tpu_custom_call.1} parent=5 // pred_fallthru
        _
      %p141 = scmp.lt.s32.totalorder %s12, 4
      // Predicated region
      $region21: #{tpu_custom_call.1} parent=5 // pred_check
        %p142 = pneg %p141
      $region22: #{tpu_custom_call.1} parent=5 // pred_check_branch
        %144 = sbr.rel (%p142) target = $region24
      $region23: #{tpu_custom_call.1} parent=5 // pred_region
        // Predicated region
        $region25: #{tpu_custom_call.1} parent=23 // pred_check
          %p145 = pneg %p44
        $region26: #{tpu_custom_call.1} parent=23 // pred_check_branch
          %147 = sbr.rel (%p145) target = $region28
        $region27: #{tpu_custom_call.1} parent=23 // pred_region
          %p148 = scmp.lt.s32.totalorder %s19, 1
          %s149 = scalar_select %p148, %s19, 1
          %s150 = smul.addr %s149, 54
          %s151 = smul.addr %s150, 4
          %s152 = scalar_lea.vmem %s0, %s151
        $region28: #{tpu_custom_call.1} parent=23 // pred_fallthru
          _
      $region24: #{tpu_custom_call.1} parent=5 // pred_fallthru
        _
      %p153 = scmp.le.s32.totalorder 1, %s12
      %p154 = scmp.lt.s32.totalorder %s12, 5
      %p155 = pnand %p153, %p154
      %p156 = pneg %p155
      // Predicated region
      $region29: #{tpu_custom_call.1} parent=5 // pred_check
        _
      $region30: #{tpu_custom_call.1} parent=5 // pred_check_branch
        %158 = sbr.rel (%p155) target = $region32
      $region31: #{tpu_custom_call.1} parent=5 // pred_region
        %s159 = ssub.s32 %s12, 1
        %p160 = scmp.lt.s32.totalorder %s21, 1
        %s161 = scalar_select %p160, %s21, 1
        %s162 = smul.addr %s161, 54
        %s163 = smul.addr %s162, 4
        %s164 = scalar_lea.vmem %s0, %s163
        %p165 = pneg %p50
        %p166 = pneg %p47
        %p167 = pneg %p71
        %p168 = pneg %p68
        %p169 = pneg %p92
        %p170 = pneg %p89
        %p171 = pneg %p120
        %p172 = pneg %p117
        %s173 = sand.u32 %s107, 1
        %s174 = scalar_lea.sflag [#allocation3], %s173
        %s175 = sand.u32 %s107, 1
        %s176 = smul.addr %s175, 128
        %s177 = scalar_lea.vmem [#allocation2], %s176
        %p178 = scmp.lt.s32.totalorder %s21, 1
        %s179 = scalar_select %p178, %s21, 1
        %s180 = smul.addr %s179, 54
        %s181 = smul.addr %s180, 4
        %s182 = scalar_lea.vmem %s0, %s181
        %s183 = smul.u32 8, %s22
        %v185 = vld [vmem:[%s2] sm:$0x1]
        %s186 = smul.u32 %s22, 8
        %s187 = smul.u32 %s186, 3
        %s188 = smul.addr %s187, 4
        %s189 = scalar_lea.vmem %s182, %s188
        %v190 = vld [vmem:[%s189] sm:$0xf]
        %v191 = vld [vmem:[%s189 + $0x4] sm:$0xf]
        %v192 = vld [vmem:[%s1] sm:$0x3]
        %v193 = vld [vmem:[%s189 + $0x8] sm:$0x1]
        %s194 = scalar_lea.vmem %s1, 2
        %v195 = vld [vmem:[%s194] sm:$0x3]
        %v199 = vunpack.c.l.b16 %v190
        %v200 = vunpack.c.l.b16 %v191
        %v201 = vunpack.c.l.b16 %v193
        %v202 = vpack.c.b16 %v200, %v199
        %v203 = vpack.c.b16 %v201, %v201
        %vm204 = vsmask.f32 7424
        %v206 = vshrl.u32 %v202, 16
        %v208 = vshll.u32 %v202, 16
        %v210 = vrot.slane %v208, 1
        %v211 = vor.u32 %v206, %v210
        %v213 = vshll.u32 %v203, 16
        %v215 = vrot.slane %v213, 1
        %v216 = vsel %vm204, %v211, %v215
        %vm217 = vcmask 31744
        %v219 = vsel %vm217, %v216, 0
        %vm221 = vcmask 1041408
        %v223 = vsel %vm221, %v195, 0
        %225 = vmatprep.subr.bf16.mxu0 0
        %226 = vmatpush1.bf16.msra.mxu0 %v223
        %227 = vmatprep.subr.bf16.mxu0 0
        %228 = vmatpush1.bf16.msra.mxu0 0
        %229 = vmatprep.subr.bf16.mxu0 0
        %230 = vmatpush1.bf16.msra.mxu0 0
        %231 = vmatprep.subr.bf16.mxu0 0
        %232 = vmatpush1.bf16.msra.mxu0 0
        %233 = vmatprep.subr.bf16.mxu0 0
        %234 = vmatpush1.bf16.msra.mxu0 0
        %235 = vmatprep.subr.bf16.mxu0 0
        %236 = vmatpush1.bf16.msra.mxu0 0
        %237 = vmatprep.subr.bf16.mxu0 0
        %238 = vmatpush1.bf16.msra.mxu0 0
        %239 = vmatprep.subr.bf16.mxu0 0
        %240 = vmatpush1.bf16.msra.mxu0 0
        %241 = vmatprep.subr.bf16.mxu0 0
        %242 = vmatpush1.bf16.msra.mxu0 0
        %243 = vmatprep.subr.bf16.mxu0 0
        %244 = vmatpush1.bf16.msra.mxu0 0
        %245 = vmatprep.subr.bf16.mxu0 0
        %246 = vmatpush1.bf16.msra.mxu0 0
        %247 = vmatprep.subr.bf16.mxu0 0
        %248 = vmatpush1.bf16.msra.mxu0 0
        %249 = vmatprep.subr.bf16.mxu0 0
        %250 = vmatpush1.bf16.msra.mxu0 0
        %251 = vmatprep.subr.bf16.mxu0 0
        %252 = vmatpush1.bf16.msra.mxu0 0
        %253 = vmatprep.subr.bf16.mxu0 0
        %254 = vmatpush1.bf16.msra.mxu0 0
        %255 = vmatprep.subr.bf16.mxu0 0
        %256 = vmatpush1.bf16.msra.mxu0 0
        %257 = vmatprep.mubr.bf16.mxu0 0
        %258 = vmatmul.mubr.bf16.gmra.mrb[0].mxu0 %v219
        %v259 = vpop.f32.mrb[0].mxu0
        %v260 = vadd.f32 0.0, %v259
        %v261 = vpop.f32.mrb[0].mxu0
        %v262 = vpop.f32.mrb[0].mxu0
        %v263 = vadd.f32 0.0, %v262
        %v264 = vpop.f32.mrb[0].mxu0
        %265 = vdwg.mxu0
        %v266 = vsel %vm217, %v202, 0
        %v269 = vsel %vm221, %v192, 0
        %271 = vmatprep.subr.bf16.mxu0 0
        %272 = vmatpush1.bf16.msra.mxu0 %v269
        %273 = vmatprep.subr.bf16.mxu0 0
        %274 = vmatpush1.bf16.msra.mxu0 0
        %275 = vmatprep.subr.bf16.mxu0 0
        %276 = vmatpush1.bf16.msra.mxu0 0
        %277 = vmatprep.subr.bf16.mxu0 0
        %278 = vmatpush1.bf16.msra.mxu0 0
        %279 = vmatprep.subr.bf16.mxu0 0
        %280 = vmatpush1.bf16.msra.mxu0 0
        %281 = vmatprep.subr.bf16.mxu0 0
        %282 = vmatpush1.bf16.msra.mxu0 0
        %283 = vmatprep.subr.bf16.mxu0 0
        %284 = vmatpush1.bf16.msra.mxu0 0
        %285 = vmatprep.subr.bf16.mxu0 0
        %286 = vmatpush1.bf16.msra.mxu0 0
        %287 = vmatprep.subr.bf16.mxu0 0
        %288 = vmatpush1.bf16.msra.mxu0 0
        %289 = vmatprep.subr.bf16.mxu0 0
        %290 = vmatpush1.bf16.msra.mxu0 0
        %291 = vmatprep.subr.bf16.mxu0 0
        %292 = vmatpush1.bf16.msra.mxu0 0
        %293 = vmatprep.subr.bf16.mxu0 0
        %294 = vmatpush1.bf16.msra.mxu0 0
        %295 = vmatprep.subr.bf16.mxu0 0
        %296 = vmatpush1.bf16.msra.mxu0 0
        %297 = vmatprep.subr.bf16.mxu0 0
        %298 = vmatpush1.bf16.msra.mxu0 0
        %299 = vmatprep.subr.bf16.mxu0 0
        %300 = vmatpush1.bf16.msra.mxu0 0
        %301 = vmatprep.subr.bf16.mxu0 0
        %302 = vmatpush1.bf16.msra.mxu0 0
        %303 = vmatprep.mubr.bf16.mxu0 0
        %304 = vmatmul.mubr.bf16.gmra.mrb[0].mxu0 %v266
        %v305 = vpop.f32.mrb[0].mxu0
        %v306 = vadd.f32 %v260, %v305
        %v307 = vpop.f32.mrb[0].mxu0
        %v308 = vpop.f32.mrb[0].mxu0
        %v309 = vadd.f32 %v263, %v308
        %v310 = vpop.f32.mrb[0].mxu0
        %311 = vdwg.mxu0
        %v312 = vld [vmem:[%s189] sm:$0xe]
        %s313 = scalar_lea.vmem %s1, 4
        %v314 = vld [vmem:[%s313] sm:$0x3]
        %v316 = vunpack.c.l.b16 %v312
        %v317 = vpack.c.b16 %v200, %v316
        %vm318 = vcmask 1046528
        %v319 = vrot.slane %v317, 1
        %v320 = vrot.slane %v203, 1
        %v321 = vsel %vm318, %v319, %v320
        %v323 = vsel %vm217, %v321, 0
        %v326 = vsel %vm221, %v314, 0
        %328 = vmatprep.subr.bf16.mxu0 0
        %329 = vmatpush1.bf16.msra.mxu0 %v326
        %330 = vmatprep.subr.bf16.mxu0 0
        %331 = vmatpush1.bf16.msra.mxu0 0
        %332 = vmatprep.subr.bf16.mxu0 0
        %333 = vmatpush1.bf16.msra.mxu0 0
        %334 = vmatprep.subr.bf16.mxu0 0
        %335 = vmatpush1.bf16.msra.mxu0 0
        %336 = vmatprep.subr.bf16.mxu0 0
        %337 = vmatpush1.bf16.msra.mxu0 0
        %338 = vmatprep.subr.bf16.mxu0 0
        %339 = vmatpush1.bf16.msra.mxu0 0
        %340 = vmatprep.subr.bf16.mxu0 0
        %341 = vmatpush1.bf16.msra.mxu0 0
        %342 = vmatprep.subr.bf16.mxu0 0
        %343 = vmatpush1.bf16.msra.mxu0 0
        %344 = vmatprep.subr.bf16.mxu0 0
        %345 = vmatpush1.bf16.msra.mxu0 0
        %346 = vmatprep.subr.bf16.mxu0 0
        %347 = vmatpush1.bf16.msra.mxu0 0
        %348 = vmatprep.subr.bf16.mxu0 0
        %349 = vmatpush1.bf16.msra.mxu0 0
        %350 = vmatprep.subr.bf16.mxu0 0
        %351 = vmatpush1.bf16.msra.mxu0 0
        %352 = vmatprep.subr.bf16.mxu0 0
        %353 = vmatpush1.bf16.msra.mxu0 0
        %354 = vmatprep.subr.bf16.mxu0 0
        %355 = vmatpush1.bf16.msra.mxu0 0
        %356 = vmatprep.subr.bf16.mxu0 0
        %357 = vmatpush1.bf16.msra.mxu0 0
        %358 = vmatprep.subr.bf16.mxu0 0
        %359 = vmatpush1.bf16.msra.mxu0 0
        %360 = vmatprep.mubr.bf16.mxu0 0
        %361 = vmatmul.mubr.bf16.gmra.mrb[0].mxu0 %v323
        %v362 = vpop.f32.mrb[0].mxu0
        %v363 = vadd.f32 0.0, %v362
        %v364 = vpop.f32.mrb[0].mxu0
        %v365 = vpop.f32.mrb[0].mxu0
        %v366 = vadd.f32 0.0, %v365
        %v367 = vpop.f32.mrb[0].mxu0
        %368 = vdwg.mxu0
        %v369 = vadd.f32 %v306, %v363
        %v370 = vadd.f32 %v309, %v366
        %s371 = sadd.s32 %s186, 1
        %s372 = smul.u32 %s371, 3
        %s373 = smul.addr %s372, 4
        %s374 = scalar_lea.vmem %s182, %s373
        %v375 = vld [vmem:[%s374] sm:$0xf]
        %v376 = vld [vmem:[%s374 + $0x4] sm:$0xf]
        %s377 = scalar_lea.vmem %s1, 6
        %v378 = vld [vmem:[%s377] sm:$0x3]
        %v381 = vunpack.c.l.b16 %v375
        %v382 = vunpack.c.l.b16 %v376
        %v383 = vpack.c.b16 %v382, %v381
        %v385 = vsel %vm217, %v383, 0
        %v388 = vsel %vm221, %v378, 0
        %390 = vmatprep.subr.bf16.mxu0 0
        %391 = vmatpush1.bf16.msra.mxu0 %v388
        %392 = vmatprep.subr.bf16.mxu0 0
        %393 = vmatpush1.bf16.msra.mxu0 0
        %394 = vmatprep.subr.bf16.mxu0 0
        %395 = vmatpush1.bf16.msra.mxu0 0
        %396 = vmatprep.subr.bf16.mxu0 0
        %397 = vmatpush1.bf16.msra.mxu0 0
        %398 = vmatprep.subr.bf16.mxu0 0
        %399 = vmatpush1.bf16.msra.mxu0 0
        %400 = vmatprep.subr.bf16.mxu0 0
        %401 = vmatpush1.bf16.msra.mxu0 0
        %402 = vmatprep.subr.bf16.mxu0 0
        %403 = vmatpush1.bf16.msra.mxu0 0
        %404 = vmatprep.subr.bf16.mxu0 0
        %405 = vmatpush1.bf16.msra.mxu0 0
        %406 = vmatprep.subr.bf16.mxu0 0
        %407 = vmatpush1.bf16.msra.mxu0 0
        %408 = vmatprep.subr.bf16.mxu0 0
        %409 = vmatpush1.bf16.msra.mxu0 0
        %410 = vmatprep.subr.bf16.mxu0 0
        %411 = vmatpush1.bf16.msra.mxu0 0
        %412 = vmatprep.subr.bf16.mxu0 0
        %413 = vmatpush1.bf16.msra.mxu0 0
        %414 = vmatprep.subr.bf16.mxu0 0
        %415 = vmatpush1.bf16.msra.mxu0 0
        %416 = vmatprep.subr.bf16.mxu0 0
        %417 = vmatpush1.bf16.msra.mxu0 0
        %418 = vmatprep.subr.bf16.mxu0 0
        %419 = vmatpush1.bf16.msra.mxu0 0
        %420 = vmatprep.subr.bf16.mxu0 0
        %421 = vmatpush1.bf16.msra.mxu0 0
        %422 = vmatprep.mubr.bf16.mxu0 0
        %423 = vmatmul.mubr.bf16.gmra.mrb[0].mxu0 %v385
        %v424 = vpop.f32.mrb[0].mxu0
        %v425 = vadd.f32 0.0, %v424
        %v426 = vpop.f32.mrb[0].mxu0
        %v427 = vpop.f32.mrb[0].mxu0
        %v428 = vadd.f32 0.0, %v427
        %v429 = vpop.f32.mrb[0].mxu0
        %430 = vdwg.mxu0
        %v431 = vadd.f32 %v369, %v425
        %v432 = vadd.f32 %v370, %v428
        %v433 = vld [vmem:[%s374] sm:$0xf]
        %v434 = vld [vmem:[%s374 + $0x4] sm:$0xf]
        %v435 = vld [vmem:[%s374 + $0x8] sm:$0x1]
        %s436 = scalar_lea.vmem %s1, 8
        %v437 = vld [vmem:[%s436] sm:$0x3]
        %v441 = vunpack.c.l.b16 %v433
        %v442 = vunpack.c.l.b16 %v434
        %v443 = vunpack.c.l.b16 %v435
        %v444 = vpack.c.b16 %v442, %v441
        %v445 = vpack.c.b16 %v443, %v443
        %v447 = vshrl.u32 %v444, 16
        %v449 = vshll.u32 %v444, 16
        %v451 = vrot.slane %v449, 1
        %v452 = vor.u32 %v447, %v451
        %v454 = vshll.u32 %v445, 16
        %v456 = vrot.slane %v454, 1
        %v457 = vsel %vm204, %v452, %v456
        %v459 = vsel %vm217, %v457, 0
        %v462 = vsel %vm221, %v437, 0
        %464 = vmatprep.subr.bf16.mxu0 0
        %465 = vmatpush1.bf16.msra.mxu0 %v462
        %466 = vmatprep.subr.bf16.mxu0 0
        %467 = vmatpush1.bf16.msra.mxu0 0
        %468 = vmatprep.subr.bf16.mxu0 0
        %469 = vmatpush1.bf16.msra.mxu0 0
        %470 = vmatprep.subr.bf16.mxu0 0
        %471 = vmatpush1.bf16.msra.mxu0 0
        %472 = vmatprep.subr.bf16.mxu0 0
        %473 = vmatpush1.bf16.msra.mxu0 0
        %474 = vmatprep.subr.bf16.mxu0 0
        %475 = vmatpush1.bf16.msra.mxu0 0
        %476 = vmatprep.subr.bf16.mxu0 0
        %477 = vmatpush1.bf16.msra.mxu0 0
        %478 = vmatprep.subr.bf16.mxu0 0
        %479 = vmatpush1.bf16.msra.mxu0 0
        %480 = vmatprep.subr.bf16.mxu0 0
        %481 = vmatpush1.bf16.msra.mxu0 0
        %482 = vmatprep.subr.bf16.mxu0 0
        %483 = vmatpush1.bf16.msra.mxu0 0
        %484 = vmatprep.subr.bf16.mxu0 0
        %485 = vmatpush1.bf16.msra.mxu0 0
        %486 = vmatprep.subr.bf16.mxu0 0
        %487 = vmatpush1.bf16.msra.mxu0 0
        %488 = vmatprep.subr.bf16.mxu0 0
        %489 = vmatpush1.bf16.msra.mxu0 0
        %490 = vmatprep.subr.bf16.mxu0 0
        %491 = vmatpush1.bf16.msra.mxu0 0
        %492 = vmatprep.subr.bf16.mxu0 0
        %493 = vmatpush1.bf16.msra.mxu0 0
        %494 = vmatprep.subr.bf16.mxu0 0
        %495 = vmatpush1.bf16.msra.mxu0 0
        %496 = vmatprep.mubr.bf16.mxu0 0
        %497 = vmatmul.mubr.bf16.gmra.mrb[0].mxu0 %v459
        %v498 = vpop.f32.mrb[0].mxu0
        %v499 = vadd.f32 0.0, %v498
        %v500 = vpop.f32.mrb[0].mxu0
        %v501 = vpop.f32.mrb[0].mxu0
        %v502 = vadd.f32 0.0, %v501
        %v503 = vpop.f32.mrb[0].mxu0
        %504 = vdwg.mxu0
        %v505 = vadd.f32 %v431, %v499
        %v506 = vadd.f32 %v432, %v502
        %v507 = vld [vmem:[%s374] sm:$0xe]
        %s508 = scalar_lea.vmem %s1, 10
        %v509 = vld [vmem:[%s508] sm:$0x3]
        %v511 = vunpack.c.l.b16 %v507
        %v512 = vpack.c.b16 %v442, %v511
        %v513 = vrot.slane %v512, 1
        %v514 = vrot.slane %v445, 1
        %v515 = vsel %vm318, %v513, %v514
        %v517 = vsel %vm217, %v515, 0
        %v520 = vsel %vm221, %v509, 0
        %522 = vmatprep.subr.bf16.mxu0 0
        %523 = vmatpush1.bf16.msra.mxu0 %v520
        %524 = vmatprep.subr.bf16.mxu0 0
        %525 = vmatpush1.bf16.msra.mxu0 0
        %526 = vmatprep.subr.bf16.mxu0 0
        %527 = vmatpush1.bf16.msra.mxu0 0
        %528 = vmatprep.subr.bf16.mxu0 0
        %529 = vmatpush1.bf16.msra.mxu0 0
        %530 = vmatprep.subr.bf16.mxu0 0
        %531 = vmatpush1.bf16.msra.mxu0 0
        %532 = vmatprep.subr.bf16.mxu0 0
        %533 = vmatpush1.bf16.msra.mxu0 0
        %534 = vmatprep.subr.bf16.mxu0 0
        %535 = vmatpush1.bf16.msra.mxu0 0
        %536 = vmatprep.subr.bf16.mxu0 0
        %537 = vmatpush1.bf16.msra.mxu0 0
        %538 = vmatprep.subr.bf16.mxu0 0
        %539 = vmatpush1.bf16.msra.mxu0 0
        %540 = vmatprep.subr.bf16.mxu0 0
        %541 = vmatpush1.bf16.msra.mxu0 0
        %542 = vmatprep.subr.bf16.mxu0 0
        %543 = vmatpush1.bf16.msra.mxu0 0
        %544 = vmatprep.subr.bf16.mxu0 0
        %545 = vmatpush1.bf16.msra.mxu0 0
        %546 = vmatprep.subr.bf16.mxu0 0
        %547 = vmatpush1.bf16.msra.mxu0 0
        %548 = vmatprep.subr.bf16.mxu0 0
        %549 = vmatpush1.bf16.msra.mxu0 0
        %550 = vmatprep.subr.bf16.mxu0 0
        %551 = vmatpush1.bf16.msra.mxu0 0
        %552 = vmatprep.subr.bf16.mxu0 0
        %553 = vmatpush1.bf16.msra.mxu0 0
        %554 = vmatprep.mubr.bf16.mxu0 0
        %555 = vmatmul.mubr.bf16.gmra.mrb[0].mxu0 %v517
        %v556 = vpop.f32.mrb[0].mxu0
        %v557 = vadd.f32 0.0, %v556
        %v558 = vpop.f32.mrb[0].mxu0
        %v559 = vpop.f32.mrb[0].mxu0
        %v560 = vadd.f32 0.0, %v559
        %v561 = vpop.f32.mrb[0].mxu0
        %562 = vdwg.mxu0
        %v563 = vadd.f32 %v505, %v557
        %v564 = vadd.f32 %v506, %v560
        %s565 = sadd.s32 %s186, 2
        %s566 = smul.u32 %s565, 3
        %s567 = smul.addr %s566, 4
        %s568 = scalar_lea.vmem %s182, %s567
        %v569 = vld [vmem:[%s568] sm:$0xf]
        %v570 = vld [vmem:[%s568 + $0x4] sm:$0xf]
        %s571 = scalar_lea.vmem %s1, 12
        %v572 = vld [vmem:[%s571] sm:$0x3]
        %v575 = vunpack.c.l.b16 %v569
        %v576 = vunpack.c.l.b16 %v570
        %v577 = vpack.c.b16 %v576, %v575
        %v579 = vsel %vm217, %v577, 0
        %v582 = vsel %vm221, %v572, 0
        %584 = vmatprep.subr.bf16.mxu0 0
        %585 = vmatpush1.bf16.msra.mxu0 %v582
        %586 = vmatprep.subr.bf16.mxu0 0
        %587 = vmatpush1.bf16.msra.mxu0 0
        %588 = vmatprep.subr.bf16.mxu0 0
        %589 = vmatpush1.bf16.msra.mxu0 0
        %590 = vmatprep.subr.bf16.mxu0 0
        %591 = vmatpush1.bf16.msra.mxu0 0
        %592 = vmatprep.subr.bf16.mxu0 0
        %593 = vmatpush1.bf16.msra.mxu0 0
        %594 = vmatprep.subr.bf16.mxu0 0
        %595 = vmatpush1.bf16.msra.mxu0 0
        %596 = vmatprep.subr.bf16.mxu0 0
        %597 = vmatpush1.bf16.msra.mxu0 0
        %598 = vmatprep.subr.bf16.mxu0 0
        %599 = vmatpush1.bf16.msra.mxu0 0
        %600 = vmatprep.subr.bf16.mxu0 0
        %601 = vmatpush1.bf16.msra.mxu0 0
        %602 = vmatprep.subr.bf16.mxu0 0
        %603 = vmatpush1.bf16.msra.mxu0 0
        %604 = vmatprep.subr.bf16.mxu0 0
        %605 = vmatpush1.bf16.msra.mxu0 0
        %606 = vmatprep.subr.bf16.mxu0 0
        %607 = vmatpush1.bf16.msra.mxu0 0
        %608 = vmatprep.subr.bf16.mxu0 0
        %609 = vmatpush1.bf16.msra.mxu0 0
        %610 = vmatprep.subr.bf16.mxu0 0
        %611 = vmatpush1.bf16.msra.mxu0 0
        %612 = vmatprep.subr.bf16.mxu0 0
        %613 = vmatpush1.bf16.msra.mxu0 0
        %614 = vmatprep.subr.bf16.mxu0 0
        %615 = vmatpush1.bf16.msra.mxu0 0
        %616 = vmatprep.mubr.bf16.mxu0 0
        %617 = vmatmul.mubr.bf16.gmra.mrb[0].mxu0 %v579
        %v618 = vpop.f32.mrb[0].mxu0
        %v619 = vadd.f32 0.0, %v618
        %v620 = vpop.f32.mrb[0].mxu0
        %v621 = vpop.f32.mrb[0].mxu0
        %v622 = vadd.f32 0.0, %v621
        %v623 = vpop.f32.mrb[0].mxu0
        %624 = vdwg.mxu0
        %v625 = vadd.f32 %v563, %v619
        %v626 = vadd.f32 %v564, %v622
        %v627 = vld [vmem:[%s568] sm:$0xf]
        %v628 = vld [vmem:[%s568 + $0x4] sm:$0xf]
        %v629 = vld [vmem:[%s568 + $0x8] sm:$0x1]
        %s630 = scalar_lea.vmem %s1, 14
        %v631 = vld [vmem:[%s630] sm:$0x3]
        %v635 = vunpack.c.l.b16 %v627
        %v636 = vunpack.c.l.b16 %v628
        %v637 = vunpack.c.l.b16 %v629
        %v638 = vpack.c.b16 %v636, %v635
        %v639 = vpack.c.b16 %v637, %v637
        %v641 = vshrl.u32 %v638, 16
        %v643 = vshll.u32 %v638, 16
        %v645 = vrot.slane %v643, 1
        %v646 = vor.u32 %v641, %v645
        %v648 = vshll.u32 %v639, 16
        %v650 = vrot.slane %v648, 1
        %v651 = vsel %vm204, %v646, %v650
        %v653 = vsel %vm217, %v651, 0
        %v656 = vsel %vm221, %v631, 0
        %658 = vmatprep.subr.bf16.mxu0 0
        %659 = vmatpush1.bf16.msra.mxu0 %v656
        %660 = vmatprep.subr.bf16.mxu0 0
        %661 = vmatpush1.bf16.msra.mxu0 0
        %662 = vmatprep.subr.bf16.mxu0 0
        %663 = vmatpush1.bf16.msra.mxu0 0
        %664 = vmatprep.subr.bf16.mxu0 0
        %665 = vmatpush1.bf16.msra.mxu0 0
        %666 = vmatprep.subr.bf16.mxu0 0
        %667 = vmatpush1.bf16.msra.mxu0 0
        %668 = vmatprep.subr.bf16.mxu0 0
        %669 = vmatpush1.bf16.msra.mxu0 0
        %670 = vmatprep.subr.bf16.mxu0 0
        %671 = vmatpush1.bf16.msra.mxu0 0
        %672 = vmatprep.subr.bf16.mxu0 0
        %673 = vmatpush1.bf16.msra.mxu0 0
        %674 = vmatprep.subr.bf16.mxu0 0
        %675 = vmatpush1.bf16.msra.mxu0 0
        %676 = vmatprep.subr.bf16.mxu0 0
        %677 = vmatpush1.bf16.msra.mxu0 0
        %678 = vmatprep.subr.bf16.mxu0 0
        %679 = vmatpush1.bf16.msra.mxu0 0
        %680 = vmatprep.subr.bf16.mxu0 0
        %681 = vmatpush1.bf16.msra.mxu0 0
        %682 = vmatprep.subr.bf16.mxu0 0
        %683 = vmatpush1.bf16.msra.mxu0 0
        %684 = vmatprep.subr.bf16.mxu0 0
        %685 = vmatpush1.bf16.msra.mxu0 0
        %686 = vmatprep.subr.bf16.mxu0 0
        %687 = vmatpush1.bf16.msra.mxu0 0
        %688 = vmatprep.subr.bf16.mxu0 0
        %689 = vmatpush1.bf16.msra.mxu0 0
        %690 = vmatprep.mubr.bf16.mxu0 0
        %691 = vmatmul.mubr.bf16.gmra.mrb[0].mxu0 %v653
        %v692 = vpop.f32.mrb[0].mxu0
        %v693 = vadd.f32 0.0, %v692
        %v694 = vpop.f32.mrb[0].mxu0
        %v695 = vpop.f32.mrb[0].mxu0
        %v696 = vadd.f32 0.0, %v695
        %v697 = vpop.f32.mrb[0].mxu0
        %698 = vdwg.mxu0
        %v699 = vadd.f32 %v625, %v693
        %v700 = vadd.f32 %v626, %v696
        %v701 = vld [vmem:[%s568] sm:$0xe]
        %s702 = scalar_lea.vmem %s1, 16
        %v703 = vld [vmem:[%s702] sm:$0x3]
        %v705 = vunpack.c.l.b16 %v701
        %v706 = vpack.c.b16 %v636, %v705
        %v707 = vrot.slane %v706, 1
        %v708 = vrot.slane %v639, 1
        %v709 = vsel %vm318, %v707, %v708
        %v711 = vsel %vm217, %v709, 0
        %v714 = vsel %vm221, %v703, 0
        %716 = vmatprep.subr.bf16.mxu0 0
        %717 = vmatpush1.bf16.msra.mxu0 %v714
        %718 = vmatprep.subr.bf16.mxu0 0
        %719 = vmatpush1.bf16.msra.mxu0 0
        %720 = vmatprep.subr.bf16.mxu0 0
        %721 = vmatpush1.bf16.msra.mxu0 0
        %722 = vmatprep.subr.bf16.mxu0 0
        %723 = vmatpush1.bf16.msra.mxu0 0
        %724 = vmatprep.subr.bf16.mxu0 0
        %725 = vmatpush1.bf16.msra.mxu0 0
        %726 = vmatprep.subr.bf16.mxu0 0
        %727 = vmatpush1.bf16.msra.mxu0 0
        %728 = vmatprep.subr.bf16.mxu0 0
        %729 = vmatpush1.bf16.msra.mxu0 0
        %730 = vmatprep.subr.bf16.mxu0 0
        %731 = vmatpush1.bf16.msra.mxu0 0
        %732 = vmatprep.subr.bf16.mxu0 0
        %733 = vmatpush1.bf16.msra.mxu0 0
        %734 = vmatprep.subr.bf16.mxu0 0
        %735 = vmatpush1.bf16.msra.mxu0 0
        %736 = vmatprep.subr.bf16.mxu0 0
        %737 = vmatpush1.bf16.msra.mxu0 0
        %738 = vmatprep.subr.bf16.mxu0 0
        %739 = vmatpush1.bf16.msra.mxu0 0
        %740 = vmatprep.subr.bf16.mxu0 0
        %741 = vmatpush1.bf16.msra.mxu0 0
        %742 = vmatprep.subr.bf16.mxu0 0
        %743 = vmatpush1.bf16.msra.mxu0 0
        %744 = vmatprep.subr.bf16.mxu0 0
        %745 = vmatpush1.bf16.msra.mxu0 0
        %746 = vmatprep.subr.bf16.mxu0 0
        %747 = vmatpush1.bf16.msra.mxu0 0
        %748 = vmatprep.mubr.bf16.mxu0 0
        %749 = vmatmul.mubr.bf16.gmra.mrb[0].mxu0 %v711
        %v750 = vpop.f32.mrb[0].mxu0
        %v751 = vadd.f32 0.0, %v750
        %v752 = vpop.f32.mrb[0].mxu0
        %v753 = vpop.f32.mrb[0].mxu0
        %v754 = vadd.f32 0.0, %v753
        %v755 = vpop.f32.mrb[0].mxu0
        %756 = vdwg.mxu0
        %v757 = vadd.f32 %v699, %v751
        %v758 = vadd.f32 %v700, %v754
        %v760 = vlaneseq
        %v761 = vshrl.u32 %v760, 7
        %v762 = vsub.s32 0, %v761
        %v763 = vrot.slane %v185, %v762
        %v765 = vadd.f32 %v757, %v763
        %v766 = vadd.f32 %v758, %v763
        %v767 = vmin.f32 %v765, 0.0
        %v768 = vmin.f32 %v766, 0.0
        %v769 = vmul.f32 %v767, 1.442695
        %v770 = vpow.pop %v769
        %v771 = vmul.f32 %v768, 1.442695
        %v772 = vpow.pop %v771
        %v773 = vsub.f32 %v770, 1.0
        %v774 = vsub.f32 %v772, 1.0
        %vm775 = vcmp.gt.f32.partialorder %v765, 0.0
        %vm776 = vcmp.gt.f32.partialorder %v766, 0.0
        %v777 = vsel %vm775, %v765, %v773
        %v778 = vsel %vm776, %v766, %v774
        %779 = vst [vmem:[%s177] sm:$0xff] %v777
        %780 = vst [vmem:[%s177 + $0x8] sm:$0xff] %v778
        %v781 = vld [vmem:[%s374] sm:$0xf]
        %v782 = vld [vmem:[%s374 + $0x4] sm:$0xf]
        %v783 = vld [vmem:[%s1] sm:$0x3]
        %v784 = vld [vmem:[%s374 + $0x8] sm:$0x1]
        %v785 = vld [vmem:[%s194] sm:$0x3]
        %v789 = vunpack.c.l.b16 %v781
        %v790 = vunpack.c.l.b16 %v782
        %v791 = vunpack.c.l.b16 %v784
        %v792 = vpack.c.b16 %v790, %v789
        %v793 = vpack.c.b16 %v791, %v791
        %v795 = vshrl.u32 %v792, 16
        %v797 = vshll.u32 %v792, 16
        %v799 = vrot.slane %v797, 1
        %v800 = vor.u32 %v795, %v799
        %v802 = vshll.u32 %v793, 16
        %v804 = vrot.slane %v802, 1
        %v805 = vsel %vm204, %v800, %v804
        %v807 = vsel %vm217, %v805, 0
        %v810 = vsel %vm221, %v785, 0
        %812 = vmatprep.subr.bf16.mxu0 0
        %813 = vmatpush1.bf16.msra.mxu0 %v810
        %814 = vmatprep.subr.bf16.mxu0 0
        %815 = vmatpush1.bf16.msra.mxu0 0
        %816 = vmatprep.subr.bf16.mxu0 0
        %817 = vmatpush1.bf16.msra.mxu0 0
        %818 = vmatprep.subr.bf16.mxu0 0
        %819 = vmatpush1.bf16.msra.mxu0 0
        %820 = vmatprep.subr.bf16.mxu0 0
        %821 = vmatpush1.bf16.msra.mxu0 0
        %822 = vmatprep.subr.bf16.mxu0 0
        %823 = vmatpush1.bf16.msra.mxu0 0
        %824 = vmatprep.subr.bf16.mxu0 0
        %825 = vmatpush1.bf16.msra.mxu0 0
        %826 = vmatprep.subr.bf16.mxu0 0
        %827 = vmatpush1.bf16.msra.mxu0 0
        %828 = vmatprep.subr.bf16.mxu0 0
        %829 = vmatpush1.bf16.msra.mxu0 0
        %830 = vmatprep.subr.bf16.mxu0 0
        %831 = vmatpush1.bf16.msra.mxu0 0
        %832 = vmatprep.subr.bf16.mxu0 0
        %833 = vmatpush1.bf16.msra.mxu0 0
        %834 = vmatprep.subr.bf16.mxu0 0
        %835 = vmatpush1.bf16.msra.mxu0 0
        %836 = vmatprep.subr.bf16.mxu0 0
        %837 = vmatpush1.bf16.msra.mxu0 0
        %838 = vmatprep.subr.bf16.mxu0 0
        %839 = vmatpush1.bf16.msra.mxu0 0
        %840 = vmatprep.subr.bf16.mxu0 0
        %841 = vmatpush1.bf16.msra.mxu0 0
        %842 = vmatprep.subr.bf16.mxu0 0
        %843 = vmatpush1.bf16.msra.mxu0 0
        %844 = vmatprep.mubr.bf16.mxu0 0
        %845 = vmatmul.mubr.bf16.gmra.mrb[0].mxu0 %v807
        %v846 = vpop.f32.mrb[0].mxu0
        %v847 = vadd.f32 0.0, %v846
        %v848 = vpop.f32.mrb[0].mxu0
        %v849 = vpop.f32.mrb[0].mxu0
        %v850 = vadd.f32 0.0, %v849
        %v851 = vpop.f32.mrb[0].mxu0
        %852 = vdwg.mxu0
        %v853 = vsel %vm217, %v792, 0
        %v856 = vsel %vm221, %v783, 0
        %858 = vmatprep.subr.bf16.mxu0 0
        %859 = vmatpush1.bf16.msra.mxu0 %v856
        %860 = vmatprep.subr.bf16.mxu0 0
        %861 = vmatpush1.bf16.msra.mxu0 0
        %862 = vmatprep.subr.bf16.mxu0 0
        %863 = vmatpush1.bf16.msra.mxu0 0
        %864 = vmatprep.subr.bf16.mxu0 0
        %865 = vmatpush1.bf16.msra.mxu0 0
        %866 = vmatprep.subr.bf16.mxu0 0
        %867 = vmatpush1.bf16.msra.mxu0 0
        %868 = vmatprep.subr.bf16.mxu0 0
        %869 = vmatpush1.bf16.msra.mxu0 0
        %870 = vmatprep.subr.bf16.mxu0 0
        %871 = vmatpush1.bf16.msra.mxu0 0
        %872 = vmatprep.subr.bf16.mxu0 0
        %873 = vmatpush1.bf16.msra.mxu0 0
        %874 = vmatprep.subr.bf16.mxu0 0
        %875 = vmatpush1.bf16.msra.mxu0 0
        %876 = vmatprep.subr.bf16.mxu0 0
        %877 = vmatpush1.bf16.msra.mxu0 0
        %878 = vmatprep.subr.bf16.mxu0 0
        %879 = vmatpush1.bf16.msra.mxu0 0
        %880 = vmatprep.subr.bf16.mxu0 0
        %881 = vmatpush1.bf16.msra.mxu0 0
        %882 = vmatprep.subr.bf16.mxu0 0
        %883 = vmatpush1.bf16.msra.mxu0 0
        %884 = vmatprep.subr.bf16.mxu0 0
        %885 = vmatpush1.bf16.msra.mxu0 0
        %886 = vmatprep.subr.bf16.mxu0 0
        %887 = vmatpush1.bf16.msra.mxu0 0
        %888 = vmatprep.subr.bf16.mxu0 0
        %889 = vmatpush1.bf16.msra.mxu0 0
        %890 = vmatprep.mubr.bf16.mxu0 0
        %891 = vmatmul.mubr.bf16.gmra.mrb[0].mxu0 %v853
        %v892 = vpop.f32.mrb[0].mxu0
        %v893 = vadd.f32 %v847, %v892
        %v894 = vpop.f32.mrb[0].mxu0
        %v895 = vpop.f32.mrb[0].mxu0
        %v896 = vadd.f32 %v850, %v895
        %v897 = vpop.f32.mrb[0].mxu0
        %898 = vdwg.mxu0
        %v899 = vld [vmem:[%s374] sm:$0xe]
        %v900 = vld [vmem:[%s313] sm:$0x3]
        %v902 = vunpack.c.l.b16 %v899
        %v903 = vpack.c.b16 %v790, %v902
        %v904 = vrot.slane %v903, 1
        %v905 = vrot.slane %v793, 1
        %v906 = vsel %vm318, %v904, %v905
        %v908 = vsel %vm217, %v906, 0
        %v911 = vsel %vm221, %v900, 0
        %913 = vmatprep.subr.bf16.mxu0 0
        %914 = vmatpush1.bf16.msra.mxu0 %v911
        %915 = vmatprep.subr.bf16.mxu0 0
        %916 = vmatpush1.bf16.msra.mxu0 0
        %917 = vmatprep.subr.bf16.mxu0 0
        %918 = vmatpush1.bf16.msra.mxu0 0
        %919 = vmatprep.subr.bf16.mxu0 0
        %920 = vmatpush1.bf16.msra.mxu0 0
        %921 = vmatprep.subr.bf16.mxu0 0
        %922 = vmatpush1.bf16.msra.mxu0 0
        %923 = vmatprep.subr.bf16.mxu0 0
        %924 = vmatpush1.bf16.msra.mxu0 0
        %925 = vmatprep.subr.bf16.mxu0 0
        %926 = vmatpush1.bf16.msra.mxu0 0
        %927 = vmatprep.subr.bf16.mxu0 0
        %928 = vmatpush1.bf16.msra.mxu0 0
        %929 = vmatprep.subr.bf16.mxu0 0
        %930 = vmatpush1.bf16.msra.mxu0 0
        %931 = vmatprep.subr.bf16.mxu0 0
        %932 = vmatpush1.bf16.msra.mxu0 0
        %933 = vmatprep.subr.bf16.mxu0 0
        %934 = vmatpush1.bf16.msra.mxu0 0
        %935 = vmatprep.subr.bf16.mxu0 0
        %936 = vmatpush1.bf16.msra.mxu0 0
        %937 = vmatprep.subr.bf16.mxu0 0
        %938 = vmatpush1.bf16.msra.mxu0 0
        %939 = vmatprep.subr.bf16.mxu0 0
        %940 = vmatpush1.bf16.msra.mxu0 0
        %941 = vmatprep.subr.bf16.mxu0 0
        %942 = vmatpush1.bf16.msra.mxu0 0
        %943 = vmatprep.subr.bf16.mxu0 0
        %944 = vmatpush1.bf16.msra.mxu0 0
        %945 = vmatprep.mubr.bf16.mxu0 0
        %946 = vmatmul.mubr.bf16.gmra.mrb[0].mxu0 %v908
        %v947 = vpop.f32.mrb[0].mxu0
        %v948 = vadd.f32 0.0, %v947
        %v949 = vpop.f32.mrb[0].mxu0
        %v950 = vpop.f32.mrb[0].mxu0
        %v951 = vadd.f32 0.0, %v950
        %v952 = vpop.f32.mrb[0].mxu0
        %953 = vdwg.mxu0
        %v954 = vadd.f32 %v893, %v948
        %v955 = vadd.f32 %v896, %v951
        %v956 = vld [vmem:[%s568] sm:$0xf]
        %v957 = vld [vmem:[%s568 + $0x4] sm:$0xf]
        %v958 = vld [vmem:[%s377] sm:$0x3]
        %v961 = vunpack.c.l.b16 %v956
        %v962 = vunpack.c.l.b16 %v957
        %v963 = vpack.c.b16 %v962, %v961
        %v965 = vsel %vm217, %v963, 0
        %v968 = vsel %vm221, %v958, 0
        %970 = vmatprep.subr.bf16.mxu0 0
        %971 = vmatpush1.bf16.msra.mxu0 %v968
        %972 = vmatprep.subr.bf16.mxu0 0
        %973 = vmatpush1.bf16.msra.mxu0 0
        %974 = vmatprep.subr.bf16.mxu0 0
        %975 = vmatpush1.bf16.msra.mxu0 0
        %976 = vmatprep.subr.bf16.mxu0 0
        %977 = vmatpush1.bf16.msra.mxu0 0
        %978 = vmatprep.subr.bf16.mxu0 0
        %979 = vmatpush1.bf16.msra.mxu0 0
        %980 = vmatprep.subr.bf16.mxu0 0
        %981 = vmatpush1.bf16.msra.mxu0 0
        %982 = vmatprep.subr.bf16.mxu0 0
        %983 = vmatpush1.bf16.msra.mxu0 0
        %984 = vmatprep.subr.bf16.mxu0 0
        %985 = vmatpush1.bf16.msra.mxu0 0
        %986 = vmatprep.subr.bf16.mxu0 0
        %987 = vmatpush1.bf16.msra.mxu0 0
        %988 = vmatprep.subr.bf16.mxu0 0
        %989 = vmatpush1.bf16.msra.mxu0 0
        %990 = vmatprep.subr.bf16.mxu0 0
        %991 = vmatpush1.bf16.msra.mxu0 0
        %992 = vmatprep.subr.bf16.mxu0 0
        %993 = vmatpush1.bf16.msra.mxu0 0
        %994 = vmatprep.subr.bf16.mxu0 0
        %995 = vmatpush1.bf16.msra.mxu0 0
        %996 = vmatprep.subr.bf16.mxu0 0
        %997 = vmatpush1.bf16.msra.mxu0 0
        %998 = vmatprep.subr.bf16.mxu0 0
        %999 = vmatpush1.bf16.msra.mxu0 0
        %1000 = vmatprep.subr.bf16.mxu0 0
        %1001 = vmatpush1.bf16.msra.mxu0 0
        %1002 = vmatprep.mubr.bf16.mxu0 0
        %1003 = vmatmul.mubr.bf16.gmra.mrb[0].mxu0 %v965
        %v1004 = vpop.f32.mrb[0].mxu0
        %v1005 = vadd.f32 0.0, %v1004
        %v1006 = vpop.f32.mrb[0].mxu0
        %v1007 = vpop.f32.mrb[0].mxu0
        %v1008 = vadd.f32 0.0, %v1007
        %v1009 = vpop.f32.mrb[0].mxu0
        %1010 = vdwg.mxu0
        %v1011 = vadd.f32 %v954, %v1005
        %v1012 = vadd.f32 %v955, %v1008
        %v1013 = vld [vmem:[%s568] sm:$0xf]
        %v1014 = vld [vmem:[%s568 + $0x4] sm:$0xf]
        %v1015 = vld [vmem:[%s568 + $0x8] sm:$0x1]
        %v1016 = vld [vmem:[%s436] sm:$0x3]
        %v1020 = vunpack.c.l.b16 %v1013
        %v1021 = vunpack.c.l.b16 %v1014
        %v1022 = vunpack.c.l.b16 %v1015
        %v1023 = vpack.c.b16 %v1021, %v1020
        %v1024 = vpack.c.b16 %v1022, %v1022
        %v1026 = vshrl.u32 %v1023, 16
        %v1028 = vshll.u32 %v1023, 16
        %v1030 = vrot.slane %v1028, 1
        %v1031 = vor.u32 %v1026, %v1030
        %v1033 = vshll.u32 %v1024, 16
        %v1035 = vrot.slane %v1033, 1
        %v1036 = vsel %vm204, %v1031, %v1035
        %v1038 = vsel %vm217, %v1036, 0
        %v1041 = vsel %vm221, %v1016, 0
        %1043 = vmatprep.subr.bf16.mxu0 0
        %1044 = vmatpush1.bf16.msra.mxu0 %v1041
        %1045 = vmatprep.subr.bf16.mxu0 0
        %1046 = vmatpush1.bf16.msra.mxu0 0
        %1047 = vmatprep.subr.bf16.mxu0 0
        %1048 = vmatpush1.bf16.msra.mxu0 0
        %1049 = vmatprep.subr.bf16.mxu0 0
        %1050 = vmatpush1.bf16.msra.mxu0 0
        %1051 = vmatprep.subr.bf16.mxu0 0
        %1052 = vmatpush1.bf16.msra.mxu0 0
        %1053 = vmatprep.subr.bf16.mxu0 0
        %1054 = vmatpush1.bf16.msra.mxu0 0
        %1055 = vmatprep.subr.bf16.mxu0 0
        %1056 = vmatpush1.bf16.msra.mxu0 0
        %1057 = vmatprep.subr.bf16.mxu0 0
        %1058 = vmatpush1.bf16.msra.mxu0 0
        %1059 = vmatprep.subr.bf16.mxu0 0
        %1060 = vmatpush1.bf16.msra.mxu0 0
        %1061 = vmatprep.subr.bf16.mxu0 0
        %1062 = vmatpush1.bf16.msra.mxu0 0
        %1063 = vmatprep.subr.bf16.mxu0 0
        %1064 = vmatpush1.bf16.msra.mxu0 0
        %1065 = vmatprep.subr.bf16.mxu0 0
        %1066 = vmatpush1.bf16.msra.mxu0 0
        %1067 = vmatprep.subr.bf16.mxu0 0
        %1068 = vmatpush1.bf16.msra.mxu0 0
        %1069 = vmatprep.subr.bf16.mxu0 0
        %1070 = vmatpush1.bf16.msra.mxu0 0
        %1071 = vmatprep.subr.bf16.mxu0 0
        %1072 = vmatpush1.bf16.msra.mxu0 0
        %1073 = vmatprep.subr.bf16.mxu0 0
        %1074 = vmatpush1.bf16.msra.mxu0 0
        %1075 = vmatprep.mubr.bf16.mxu0 0
        %1076 = vmatmul.mubr.bf16.gmra.mrb[0].mxu0 %v1038
        %v1077 = vpop.f32.mrb[0].mxu0
        %v1078 = vadd.f32 0.0, %v1077
        %v1079 = vpop.f32.mrb[0].mxu0
        %v1080 = vpop.f32.mrb[0].mxu0
        %v1081 = vadd.f32 0.0, %v1080
        %v1082 = vpop.f32.mrb[0].mxu0
        %1083 = vdwg.mxu0
        %v1084 = vadd.f32 %v1011, %v1078
        %v1085 = vadd.f32 %v1012, %v1081
        %v1086 = vld [vmem:[%s568] sm:$0xe]
        %v1087 = vld [vmem:[%s508] sm:$0x3]
        %v1089 = vunpack.c.l.b16 %v1086
        %v1090 = vpack.c.b16 %v1021, %v1089
        %v1091 = vrot.slane %v1090, 1
        %v1092 = vrot.slane %v1024, 1
        %v1093 = vsel %vm318, %v1091, %v1092
        %v1095 = vsel %vm217, %v1093, 0
        %v1098 = vsel %vm221, %v1087, 0
        %1100 = vmatprep.subr.bf16.mxu0 0
        %1101 = vmatpush1.bf16.msra.mxu0 %v1098
        %1102 = vmatprep.subr.bf16.mxu0 0
        %1103 = vmatpush1.bf16.msra.mxu0 0
        %1104 = vmatprep.subr.bf16.mxu0 0
        %1105 = vmatpush1.bf16.msra.mxu0 0
        %1106 = vmatprep.subr.bf16.mxu0 0
        %1107 = vmatpush1.bf16.msra.mxu0 0
        %1108 = vmatprep.subr.bf16.mxu0 0
        %1109 = vmatpush1.bf16.msra.mxu0 0
        %1110 = vmatprep.subr.bf16.mxu0 0
        %1111 = vmatpush1.bf16.msra.mxu0 0
        %1112 = vmatprep.subr.bf16.mxu0 0
        %1113 = vmatpush1.bf16.msra.mxu0 0
        %1114 = vmatprep.subr.bf16.mxu0 0
        %1115 = vmatpush1.bf16.msra.mxu0 0
        %1116 = vmatprep.subr.bf16.mxu0 0
        %1117 = vmatpush1.bf16.msra.mxu0 0
        %1118 = vmatprep.subr.bf16.mxu0 0
        %1119 = vmatpush1.bf16.msra.mxu0 0
        %1120 = vmatprep.subr.bf16.mxu0 0
        %1121 = vmatpush1.bf16.msra.mxu0 0
        %1122 = vmatprep.subr.bf16.mxu0 0
        %1123 = vmatpush1.bf16.msra.mxu0 0
        %1124 = vmatprep.subr.bf16.mxu0 0
        %1125 = vmatpush1.bf16.msra.mxu0 0
        %1126 = vmatprep.subr.bf16.mxu0 0
        %1127 = vmatpush1.bf16.msra.mxu0 0
        %1128 = vmatprep.subr.bf16.mxu0 0
        %1129 = vmatpush1.bf16.msra.mxu0 0
        %1130 = vmatprep.subr.bf16.mxu0 0
        %1131 = vmatpush1.bf16.msra.mxu0 0
        %1132 = vmatprep.mubr.bf16.mxu0 0
        %1133 = vmatmul.mubr.bf16.gmra.mrb[0].mxu0 %v1095
        %v1134 = vpop.f32.mrb[0].mxu0
        %v1135 = vadd.f32 0.0, %v1134
        %v1136 = vpop.f32.mrb[0].mxu0
        %v1137 = vpop.f32.mrb[0].mxu0
        %v1138 = vadd.f32 0.0, %v1137
        %v1139 = vpop.f32.mrb[0].mxu0
        %1140 = vdwg.mxu0
        %v1141 = vadd.f32 %v1084, %v1135
        %v1142 = vadd.f32 %v1085, %v1138
        %s1143 = sadd.s32 %s186, 3
        %s1144 = smul.u32 %s1143, 3
        %s1145 = smul.addr %s1144, 4
        %s1146 = scalar_lea.vmem %s182, %s1145
        %v1147 = vld [vmem:[%s1146] sm:$0xf]
        %v1148 = vld [vmem:[%s1146 + $0x4] sm:$0xf]
        %v1149 = vld [vmem:[%s571] sm:$0x3]
        %v1152 = vunpack.c.l.b16 %v1147
        %v1153 = vunpack.c.l.b16 %v1148
        %v1154 = vpack.c.b16 %v1153, %v1152
        %v1156 = vsel %vm217, %v1154, 0
        %v1159 = vsel %vm221, %v1149, 0
        %1161 = vmatprep.subr.bf16.mxu0 0
        %1162 = vmatpush1.bf16.msra.mxu0 %v1159
        %1163 = vmatprep.subr.bf16.mxu0 0
        %1164 = vmatpush1.bf16.msra.mxu0 0
        %1165 = vmatprep.subr.bf16.mxu0 0
        %1166 = vmatpush1.bf16.msra.mxu0 0
        %1167 = vmatprep.subr.bf16.mxu0 0
        %1168 = vmatpush1.bf16.msra.mxu0 0
        %1169 = vmatprep.subr.bf16.mxu0 0
        %1170 = vmatpush1.bf16.msra.mxu0 0
        %1171 = vmatprep.subr.bf16.mxu0 0
        %1172 = vmatpush1.bf16.msra.mxu0 0
        %1173 = vmatprep.subr.bf16.mxu0 0
        %1174 = vmatpush1.bf16.msra.mxu0 0
        %1175 = vmatprep.subr.bf16.mxu0 0
        %1176 = vmatpush1.bf16.msra.mxu0 0
        %1177 = vmatprep.subr.bf16.mxu0 0
        %1178 = vmatpush1.bf16.msra.mxu0 0
        %1179 = vmatprep.subr.bf16.mxu0 0
        %1180 = vmatpush1.bf16.msra.mxu0 0
        %1181 = vmatprep.subr.bf16.mxu0 0
        %1182 = vmatpush1.bf16.msra.mxu0 0
        %1183 = vmatprep.subr.bf16.mxu0 0
        %1184 = vmatpush1.bf16.msra.mxu0 0
        %1185 = vmatprep.subr.bf16.mxu0 0
        %1186 = vmatpush1.bf16.msra.mxu0 0
        %1187 = vmatprep.subr.bf16.mxu0 0
        %1188 = vmatpush1.bf16.msra.mxu0 0
        %1189 = vmatprep.subr.bf16.mxu0 0
        %1190 = vmatpush1.bf16.msra.mxu0 0
        %1191 = vmatprep.subr.bf16.mxu0 0
        %1192 = vmatpush1.bf16.msra.mxu0 0
        %1193 = vmatprep.mubr.bf16.mxu0 0
        %1194 = vmatmul.mubr.bf16.gmra.mrb[0].mxu0 %v1156
        %v1195 = vpop.f32.mrb[0].mxu0
        %v1196 = vadd.f32 0.0, %v1195
        %v1197 = vpop.f32.mrb[0].mxu0
        %v1198 = vpop.f32.mrb[0].mxu0
        %v1199 = vadd.f32 0.0, %v1198
        %v1200 = vpop.f32.mrb[0].mxu0
        %1201 = vdwg.mxu0
        %v1202 = vadd.f32 %v1141, %v1196
        %v1203 = vadd.f32 %v1142, %v1199
        %v1204 = vld [vmem:[%s1146] sm:$0xf]
        %v1205 = vld [vmem:[%s1146 + $0x4] sm:$0xf]
        %v1206 = vld [vmem:[%s1146 + $0x8] sm:$0x1]
        %v1207 = vld [vmem:[%s630] sm:$0x3]
        %v1211 = vunpack.c.l.b16 %v1204
        %v1212 = vunpack.c.l.b16 %v1205
        %v1213 = vunpack.c.l.b16 %v1206
        %v1214 = vpack.c.b16 %v1212, %v1211
        %v1215 = vpack.c.b16 %v1213, %v1213
        %v1217 = vshrl.u32 %v1214, 16
        %v1219 = vshll.u32 %v1214, 16
        %v1221 = vrot.slane %v1219, 1
        %v1222 = vor.u32 %v1217, %v1221
        %v1224 = vshll.u32 %v1215, 16
        %v1226 = vrot.slane %v1224, 1
        %v1227 = vsel %vm204, %v1222, %v1226
        %v1229 = vsel %vm217, %v1227, 0
        %v1232 = vsel %vm221, %v1207, 0
        %1234 = vmatprep.subr.bf16.mxu0 0
        %1235 = vmatpush1.bf16.msra.mxu0 %v1232
        %1236 = vmatprep.subr.bf16.mxu0 0
        %1237 = vmatpush1.bf16.msra.mxu0 0
        %1238 = vmatprep.subr.bf16.mxu0 0
        %1239 = vmatpush1.bf16.msra.mxu0 0
        %1240 = vmatprep.subr.bf16.mxu0 0
        %1241 = vmatpush1.bf16.msra.mxu0 0
        %1242 = vmatprep.subr.bf16.mxu0 0
        %1243 = vmatpush1.bf16.msra.mxu0 0
        %1244 = vmatprep.subr.bf16.mxu0 0
        %1245 = vmatpush1.bf16.msra.mxu0 0
        %1246 = vmatprep.subr.bf16.mxu0 0
        %1247 = vmatpush1.bf16.msra.mxu0 0
        %1248 = vmatprep.subr.bf16.mxu0 0
        %1249 = vmatpush1.bf16.msra.mxu0 0
        %1250 = vmatprep.subr.bf16.mxu0 0
        %1251 = vmatpush1.bf16.msra.mxu0 0
        %1252 = vmatprep.subr.bf16.mxu0 0
        %1253 = vmatpush1.bf16.msra.mxu0 0
        %1254 = vmatprep.subr.bf16.mxu0 0
        %1255 = vmatpush1.bf16.msra.mxu0 0
        %1256 = vmatprep.subr.bf16.mxu0 0
        %1257 = vmatpush1.bf16.msra.mxu0 0
        %1258 = vmatprep.subr.bf16.mxu0 0
        %1259 = vmatpush1.bf16.msra.mxu0 0
        %1260 = vmatprep.subr.bf16.mxu0 0
        %1261 = vmatpush1.bf16.msra.mxu0 0
        %1262 = vmatprep.subr.bf16.mxu0 0
        %1263 = vmatpush1.bf16.msra.mxu0 0
        %1264 = vmatprep.subr.bf16.mxu0 0
        %1265 = vmatpush1.bf16.msra.mxu0 0
        %1266 = vmatprep.mubr.bf16.mxu0 0
        %1267 = vmatmul.mubr.bf16.gmra.mrb[0].mxu0 %v1229
        %v1268 = vpop.f32.mrb[0].mxu0
        %v1269 = vadd.f32 0.0, %v1268
        %v1270 = vpop.f32.mrb[0].mxu0
        %v1271 = vpop.f32.mrb[0].mxu0
        %v1272 = vadd.f32 0.0, %v1271
        %v1273 = vpop.f32.mrb[0].mxu0
        %1274 = vdwg.mxu0
        %v1275 = vadd.f32 %v1202, %v1269
        %v1276 = vadd.f32 %v1203, %v1272
        %v1277 = vld [vmem:[%s1146] sm:$0xe]
        %v1278 = vld [vmem:[%s702] sm:$0x3]
        %v1280 = vunpack.c.l.b16 %v1277
        %v1281 = vpack.c.b16 %v1212, %v1280
        %v1282 = vrot.slane %v1281, 1
        %v1283 = vrot.slane %v1215, 1
        %v1284 = vsel %vm318, %v1282, %v1283
        %v1286 = vsel %vm217, %v1284, 0
        %v1289 = vsel %vm221, %v1278, 0
        %1291 = vmatprep.subr.bf16.mxu0 0
        %1292 = vmatpush1.bf16.msra.mxu0 %v1289
        %1293 = vmatprep.subr.bf16.mxu0 0
        %1294 = vmatpush1.bf16.msra.mxu0 0
        %1295 = vmatprep.subr.bf16.mxu0 0
        %1296 = vmatpush1.bf16.msra.mxu0 0
        %1297 = vmatprep.subr.bf16.mxu0 0
        %1298 = vmatpush1.bf16.msra.mxu0 0
        %1299 = vmatprep.subr.bf16.mxu0 0
        %1300 = vmatpush1.bf16.msra.mxu0 0
        %1301 = vmatprep.subr.bf16.mxu0 0
        %1302 = vmatpush1.bf16.msra.mxu0 0
        %1303 = vmatprep.subr.bf16.mxu0 0
        %1304 = vmatpush1.bf16.msra.mxu0 0
        %1305 = vmatprep.subr.bf16.mxu0 0
        %1306 = vmatpush1.bf16.msra.mxu0 0
        %1307 = vmatprep.subr.bf16.mxu0 0
        %1308 = vmatpush1.bf16.msra.mxu0 0
        %1309 = vmatprep.subr.bf16.mxu0 0
        %1310 = vmatpush1.bf16.msra.mxu0 0
        %1311 = vmatprep.subr.bf16.mxu0 0
        %1312 = vmatpush1.bf16.msra.mxu0 0
        %1313 = vmatprep.subr.bf16.mxu0 0
        %1314 = vmatpush1.bf16.msra.mxu0 0
        %1315 = vmatprep.subr.bf16.mxu0 0
        %1316 = vmatpush1.bf16.msra.mxu0 0
        %1317 = vmatprep.subr.bf16.mxu0 0
        %1318 = vmatpush1.bf16.msra.mxu0 0
        %1319 = vmatprep.subr.bf16.mxu0 0
        %1320 = vmatpush1.bf16.msra.mxu0 0
        %1321 = vmatprep.subr.bf16.mxu0 0
        %1322 = vmatpush1.bf16.msra.mxu0 0
        %1323 = vmatprep.mubr.bf16.mxu0 0
        %1324 = vmatmul.mubr.bf16.gmra.mrb[0].mxu0 %v1286
        %v1325 = vpop.f32.mrb[0].mxu0
        %v1326 = vadd.f32 0.0, %v1325
        %v1327 = vpop.f32.mrb[0].mxu0
        %v1328 = vpop.f32.mrb[0].mxu0
        %v1329 = vadd.f32 0.0, %v1328
        %v1330 = vpop.f32.mrb[0].mxu0
        %1331 = vdwg.mxu0
        %v1332 = vadd.f32 %v1275, %v1326
        %v1333 = vadd.f32 %v1276, %v1329
        %v1334 = vadd.f32 %v1332, %v763
        %v1335 = vadd.f32 %v1333, %v763
        %v1336 = vmin.f32 %v1334, 0.0
        %v1337 = vmin.f32 %v1335, 0.0
        %v1338 = vmul.f32 %v1336, 1.442695
        %v1339 = vpow.pop %v1338
        %v1340 = vmul.f32 %v1337, 1.442695
        %v1341 = vpow.pop %v1340
        %v1342 = vsub.f32 %v1339, 1.0
        %v1343 = vsub.f32 %v1341, 1.0
        %vm1344 = vcmp.gt.f32.partialorder %v1334, 0.0
        %vm1345 = vcmp.gt.f32.partialorder %v1335, 0.0
        %v1346 = vsel %vm1344, %v1334, %v1342
        %v1347 = vsel %vm1345, %v1335, %v1343
        %s1348 = scalar_lea.vmem %s177, 16 [#allocation2]
        %1349 = vst [vmem:[%s1348] sm:$0xff] %v1346
        %1350 = vst [vmem:[%s1348 + $0x8] sm:$0xff] %v1347
        %v1351 = vld [vmem:[%s568] sm:$0xf]
        %v1352 = vld [vmem:[%s568 + $0x4] sm:$0xf]
        %v1353 = vld [vmem:[%s1] sm:$0x3]
        %v1354 = vld [vmem:[%s568 + $0x8] sm:$0x1]
        %v1355 = vld [vmem:[%s194] sm:$0x3]
        %v1359 = vunpack.c.l.b16 %v1351
        %v1360 = vunpack.c.l.b16 %v1352
        %v1361 = vunpack.c.l.b16 %v1354
        %v1362 = vpack.c.b16 %v1360, %v1359
        %v1363 = vpack.c.b16 %v1361, %v1361
        %v1365 = vshrl.u32 %v1362, 16
        %v1367 = vshll.u32 %v1362, 16
        %v1369 = vrot.slane %v1367, 1
        %v1370 = vor.u32 %v1365, %v1369
        %v1372 = vshll.u32 %v1363, 16
        %v1374 = vrot.slane %v1372, 1
        %v1375 = vsel %vm204, %v1370, %v1374
        %v1377 = vsel %vm217, %v1375, 0
        %v1380 = vsel %vm221, %v1355, 0
        %1382 = vmatprep.subr.bf16.mxu0 0
        %1383 = vmatpush1.bf16.msra.mxu0 %v1380
        %1384 = vmatprep.subr.bf16.mxu0 0
        %1385 = vmatpush1.bf16.msra.mxu0 0
        %1386 = vmatprep.subr.bf16.mxu0 0
        %1387 = vmatpush1.bf16.msra.mxu0 0
        %1388 = vmatprep.subr.bf16.mxu0 0
        %1389 = vmatpush1.bf16.msra.mxu0 0
        %1390 = vmatprep.subr.bf16.mxu0 0
        %1391 = vmatpush1.bf16.msra.mxu0 0
        %1392 = vmatprep.subr.bf16.mxu0 0
        %1393 = vmatpush1.bf16.msra.mxu0 0
        %1394 = vmatprep.subr.bf16.mxu0 0
        %1395 = vmatpush1.bf16.msra.mxu0 0
        %1396 = vmatprep.subr.bf16.mxu0 0
        %1397 = vmatpush1.bf16.msra.mxu0 0
        %1398 = vmatprep.subr.bf16.mxu0 0
        %1399 = vmatpush1.bf16.msra.mxu0 0
        %1400 = vmatprep.subr.bf16.mxu0 0
        %1401 = vmatpush1.bf16.msra.mxu0 0
        %1402 = vmatprep.subr.bf16.mxu0 0
        %1403 = vmatpush1.bf16.msra.mxu0 0
        %1404 = vmatprep.subr.bf16.mxu0 0
        %1405 = vmatpush1.bf16.msra.mxu0 0
        %1406 = vmatprep.subr.bf16.mxu0 0
        %1407 = vmatpush1.bf16.msra.mxu0 0
        %1408 = vmatprep.subr.bf16.mxu0 0
        %1409 = vmatpush1.bf16.msra.mxu0 0
        %1410 = vmatprep.subr.bf16.mxu0 0
        %1411 = vmatpush1.bf16.msra.mxu0 0
        %1412 = vmatprep.subr.bf16.mxu0 0
        %1413 = vmatpush1.bf16.msra.mxu0 0
        %1414 = vmatprep.mubr.bf16.mxu0 0
        %1415 = vmatmul.mubr.bf16.gmra.mrb[0].mxu0 %v1377
        %v1416 = vpop.f32.mrb[0].mxu0
        %v1417 = vadd.f32 0.0, %v1416
        %v1418 = vpop.f32.mrb[0].mxu0
        %v1419 = vpop.f32.mrb[0].mxu0
        %v1420 = vadd.f32 0.0, %v1419
        %v1421 = vpop.f32.mrb[0].mxu0
        %1422 = vdwg.mxu0
        %v1423 = vsel %vm217, %v1362, 0
        %v1426 = vsel %vm221, %v1353, 0
        %1428 = vmatprep.subr.bf16.mxu0 0
        %1429 = vmatpush1.bf16.msra.mxu0 %v1426
        %1430 = vmatprep.subr.bf16.mxu0 0
        %1431 = vmatpush1.bf16.msra.mxu0 0
        %1432 = vmatprep.subr.bf16.mxu0 0
        %1433 = vmatpush1.bf16.msra.mxu0 0
        %1434 = vmatprep.subr.bf16.mxu0 0
        %1435 = vmatpush1.bf16.msra.mxu0 0
        %1436 = vmatprep.subr.bf16.mxu0 0
        %1437 = vmatpush1.bf16.msra.mxu0 0
        %1438 = vmatprep.subr.bf16.mxu0 0
        %1439 = vmatpush1.bf16.msra.mxu0 0
        %1440 = vmatprep.subr.bf16.mxu0 0
        %1441 = vmatpush1.bf16.msra.mxu0 0
        %1442 = vmatprep.subr.bf16.mxu0 0
        %1443 = vmatpush1.bf16.msra.mxu0 0
        %1444 = vmatprep.subr.bf16.mxu0 0
        %1445 = vmatpush1.bf16.msra.mxu0 0
        %1446 = vmatprep.subr.bf16.mxu0 0
        %1447 = vmatpush1.bf16.msra.mxu0 0
        %1448 = vmatprep.subr.bf16.mxu0 0
        %1449 = vmatpush1.bf16.msra.mxu0 0
        %1450 = vmatprep.subr.bf16.mxu0 0
        %1451 = vmatpush1.bf16.msra.mxu0 0
        %1452 = vmatprep.subr.bf16.mxu0 0
        %1453 = vmatpush1.bf16.msra.mxu0 0
        %1454 = vmatprep.subr.bf16.mxu0 0
        %1455 = vmatpush1.bf16.msra.mxu0 0
        %1456 = vmatprep.subr.bf16.mxu0 0
        %1457 = vmatpush1.bf16.msra.mxu0 0
        %1458 = vmatprep.subr.bf16.mxu0 0
        %1459 = vmatpush1.bf16.msra.mxu0 0
        %1460 = vmatprep.mubr.bf16.mxu0 0
        %1461 = vmatmul.mubr.bf16.gmra.mrb[0].mxu0 %v1423
        %v1462 = vpop.f32.mrb[0].mxu0
        %v1463 = vadd.f32 %v1417, %v1462
        %v1464 = vpop.f32.mrb[0].mxu0
        %v1465 = vpop.f32.mrb[0].mxu0
        %v1466 = vadd.f32 %v1420, %v1465
        %v1467 = vpop.f32.mrb[0].mxu0
        %1468 = vdwg.mxu0
        %v1469 = vld [vmem:[%s568] sm:$0xe]
        %v1470 = vld [vmem:[%s313] sm:$0x3]
        %v1472 = vunpack.c.l.b16 %v1469
        %v1473 = vpack.c.b16 %v1360, %v1472
        %v1474 = vrot.slane %v1473, 1
        %v1475 = vrot.slane %v1363, 1
        %v1476 = vsel %vm318, %v1474, %v1475
        %v1478 = vsel %vm217, %v1476, 0
        %v1481 = vsel %vm221, %v1470, 0
        %1483 = vmatprep.subr.bf16.mxu0 0
        %1484 = vmatpush1.bf16.msra.mxu0 %v1481
        %1485 = vmatprep.subr.bf16.mxu0 0
        %1486 = vmatpush1.bf16.msra.mxu0 0
        %1487 = vmatprep.subr.bf16.mxu0 0
        %1488 = vmatpush1.bf16.msra.mxu0 0
        %1489 = vmatprep.subr.bf16.mxu0 0
        %1490 = vmatpush1.bf16.msra.mxu0 0
        %1491 = vmatprep.subr.bf16.mxu0 0
        %1492 = vmatpush1.bf16.msra.mxu0 0
        %1493 = vmatprep.subr.bf16.mxu0 0
        %1494 = vmatpush1.bf16.msra.mxu0 0
        %1495 = vmatprep.subr.bf16.mxu0 0
        %1496 = vmatpush1.bf16.msra.mxu0 0
        %1497 = vmatprep.subr.bf16.mxu0 0
        %1498 = vmatpush1.bf16.msra.mxu0 0
        %1499 = vmatprep.subr.bf16.mxu0 0
        %1500 = vmatpush1.bf16.msra.mxu0 0
        %1501 = vmatprep.subr.bf16.mxu0 0
        %1502 = vmatpush1.bf16.msra.mxu0 0
        %1503 = vmatprep.subr.bf16.mxu0 0
        %1504 = vmatpush1.bf16.msra.mxu0 0
        %1505 = vmatprep.subr.bf16.mxu0 0
        %1506 = vmatpush1.bf16.msra.mxu0 0
        %1507 = vmatprep.subr.bf16.mxu0 0
        %1508 = vmatpush1.bf16.msra.mxu0 0
        %1509 = vmatprep.subr.bf16.mxu0 0
        %1510 = vmatpush1.bf16.msra.mxu0 0
        %1511 = vmatprep.subr.bf16.mxu0 0
        %1512 = vmatpush1.bf16.msra.mxu0 0
        %1513 = vmatprep.subr.bf16.mxu0 0
        %1514 = vmatpush1.bf16.msra.mxu0 0
        %1515 = vmatprep.mubr.bf16.mxu0 0
        %1516 = vmatmul.mubr.bf16.gmra.mrb[0].mxu0 %v1478
        %v1517 = vpop.f32.mrb[0].mxu0
        %v1518 = vadd.f32 0.0, %v1517
        %v1519 = vpop.f32.mrb[0].mxu0
        %v1520 = vpop.f32.mrb[0].mxu0
        %v1521 = vadd.f32 0.0, %v1520
        %v1522 = vpop.f32.mrb[0].mxu0
        %1523 = vdwg.mxu0
        %v1524 = vadd.f32 %v1463, %v1518
        %v1525 = vadd.f32 %v1466, %v1521
        %v1526 = vld [vmem:[%s1146] sm:$0xf]
        %v1527 = vld [vmem:[%s1146 + $0x4] sm:$0xf]
        %v1528 = vld [vmem:[%s377] sm:$0x3]
        %v1531 = vunpack.c.l.b16 %v1526
        %v1532 = vunpack.c.l.b16 %v1527
        %v1533 = vpack.c.b16 %v1532, %v1531
        %v1535 = vsel %vm217, %v1533, 0
        %v1538 = vsel %vm221, %v1528, 0
        %1540 = vmatprep.subr.bf16.mxu0 0
        %1541 = vmatpush1.bf16.msra.mxu0 %v1538
        %1542 = vmatprep.subr.bf16.mxu0 0
        %1543 = vmatpush1.bf16.msra.mxu0 0
        %1544 = vmatprep.subr.bf16.mxu0 0
        %1545 = vmatpush1.bf16.msra.mxu0 0
        %1546 = vmatprep.subr.bf16.mxu0 0
        %1547 = vmatpush1.bf16.msra.mxu0 0
        %1548 = vmatprep.subr.bf16.mxu0 0
        %1549 = vmatpush1.bf16.msra.mxu0 0
        %1550 = vmatprep.subr.bf16.mxu0 0
        %1551 = vmatpush1.bf16.msra.mxu0 0
        %1552 = vmatprep.subr.bf16.mxu0 0
        %1553 = vmatpush1.bf16.msra.mxu0 0
        %1554 = vmatprep.subr.bf16.mxu0 0
        %1555 = vmatpush1.bf16.msra.mxu0 0
        %1556 = vmatprep.subr.bf16.mxu0 0
        %1557 = vmatpush1.bf16.msra.mxu0 0
        %1558 = vmatprep.subr.bf16.mxu0 0
        %1559 = vmatpush1.bf16.msra.mxu0 0
        %1560 = vmatprep.subr.bf16.mxu0 0
        %1561 = vmatpush1.bf16.msra.mxu0 0
        %1562 = vmatprep.subr.bf16.mxu0 0
        %1563 = vmatpush1.bf16.msra.mxu0 0
        %1564 = vmatprep.subr.bf16.mxu0 0
        %1565 = vmatpush1.bf16.msra.mxu0 0
        %1566 = vmatprep.subr.bf16.mxu0 0
        %1567 = vmatpush1.bf16.msra.mxu0 0
        %1568 = vmatprep.subr.bf16.mxu0 0
        %1569 = vmatpush1.bf16.msra.mxu0 0
        %1570 = vmatprep.subr.bf16.mxu0 0
        %1571 = vmatpush1.bf16.msra.mxu0 0
        %1572 = vmatprep.mubr.bf16.mxu0 0
        %1573 = vmatmul.mubr.bf16.gmra.mrb[0].mxu0 %v1535
        %v1574 = vpop.f32.mrb[0].mxu0
        %v1575 = vadd.f32 0.0, %v1574
        %v1576 = vpop.f32.mrb[0].mxu0
        %v1577 = vpop.f32.mrb[0].mxu0
        %v1578 = vadd.f32 0.0, %v1577
        %v1579 = vpop.f32.mrb[0].mxu0
        %1580 = vdwg.mxu0
        %v1581 = vadd.f32 %v1524, %v1575
        %v1582 = vadd.f32 %v1525, %v1578
        %v1583 = vld [vmem:[%s1146] sm:$0xf]
        %v1584 = vld [vmem:[%s1146 + $0x4] sm:$0xf]
        %v1585 = vld [vmem:[%s1146 + $0x8] sm:$0x1]
        %v1586 = vld [vmem:[%s436] sm:$0x3]
        %v1590 = vunpack.c.l.b16 %v1583
        %v1591 = vunpack.c.l.b16 %v1584
        %v1592 = vunpack.c.l.b16 %v1585
        %v1593 = vpack.c.b16 %v1591, %v1590
        %v1594 = vpack.c.b16 %v1592, %v1592
        %v1596 = vshrl.u32 %v1593, 16
        %v1598 = vshll.u32 %v1593, 16
        %v1600 = vrot.slane %v1598, 1
        %v1601 = vor.u32 %v1596, %v1600
        %v1603 = vshll.u32 %v1594, 16
        %v1605 = vrot.slane %v1603, 1
        %v1606 = vsel %vm204, %v1601, %v1605
        %v1608 = vsel %vm217, %v1606, 0
        %v1611 = vsel %vm221, %v1586, 0
        %1613 = vmatprep.subr.bf16.mxu0 0
        %1614 = vmatpush1.bf16.msra.mxu0 %v1611
        %1615 = vmatprep.subr.bf16.mxu0 0
        %1616 = vmatpush1.bf16.msra.mxu0 0
        %1617 = vmatprep.subr.bf16.mxu0 0
        %1618 = vmatpush1.bf16.msra.mxu0 0
        %1619 = vmatprep.subr.bf16.mxu0 0
        %1620 = vmatpush1.bf16.msra.mxu0 0
        %1621 = vmatprep.subr.bf16.mxu0 0
        %1622 = vmatpush1.bf16.msra.mxu0 0
        %1623 = vmatprep.subr.bf16.mxu0 0
        %1624 = vmatpush1.bf16.msra.mxu0 0
        %1625 = vmatprep.subr.bf16.mxu0 0
        %1626 = vmatpush1.bf16.msra.mxu0 0
        %1627 = vmatprep.subr.bf16.mxu0 0
        %1628 = vmatpush1.bf16.msra.mxu0 0
        %1629 = vmatprep.subr.bf16.mxu0 0
        %1630 = vmatpush1.bf16.msra.mxu0 0
        %1631 = vmatprep.subr.bf16.mxu0 0
        %1632 = vmatpush1.bf16.msra.mxu0 0
        %1633 = vmatprep.subr.bf16.mxu0 0
        %1634 = vmatpush1.bf16.msra.mxu0 0
        %1635 = vmatprep.subr.bf16.mxu0 0
        %1636 = vmatpush1.bf16.msra.mxu0 0
        %1637 = vmatprep.subr.bf16.mxu0 0
        %1638 = vmatpush1.bf16.msra.mxu0 0
        %1639 = vmatprep.subr.bf16.mxu0 0
        %1640 = vmatpush1.bf16.msra.mxu0 0
        %1641 = vmatprep.subr.bf16.mxu0 0
        %1642 = vmatpush1.bf16.msra.mxu0 0
        %1643 = vmatprep.subr.bf16.mxu0 0
        %1644 = vmatpush1.bf16.msra.mxu0 0
        %1645 = vmatprep.mubr.bf16.mxu0 0
        %1646 = vmatmul.mubr.bf16.gmra.mrb[0].mxu0 %v1608
        %v1647 = vpop.f32.mrb[0].mxu0
        %v1648 = vadd.f32 0.0, %v1647
        %v1649 = vpop.f32.mrb[0].mxu0
        %v1650 = vpop.f32.mrb[0].mxu0
        %v1651 = vadd.f32 0.0, %v1650
        %v1652 = vpop.f32.mrb[0].mxu0
        %1653 = vdwg.mxu0
        %v1654 = vadd.f32 %v1581, %v1648
        %v1655 = vadd.f32 %v1582, %v1651
        %v1656 = vld [vmem:[%s1146] sm:$0xe]
        %v1657 = vld [vmem:[%s508] sm:$0x3]
        %v1659 = vunpack.c.l.b16 %v1656
        %v1660 = vpack.c.b16 %v1591, %v1659
        %v1661 = vrot.slane %v1660, 1
        %v1662 = vrot.slane %v1594, 1
        %v1663 = vsel %vm318, %v1661, %v1662
        %v1665 = vsel %vm217, %v1663, 0
        %v1668 = vsel %vm221, %v1657, 0
        %1670 = vmatprep.subr.bf16.mxu0 0
        %1671 = vmatpush1.bf16.msra.mxu0 %v1668
        %1672 = vmatprep.subr.bf16.mxu0 0
        %1673 = vmatpush1.bf16.msra.mxu0 0
        %1674 = vmatprep.subr.bf16.mxu0 0
        %1675 = vmatpush1.bf16.msra.mxu0 0
        %1676 = vmatprep.subr.bf16.mxu0 0
        %1677 = vmatpush1.bf16.msra.mxu0 0
        %1678 = vmatprep.subr.bf16.mxu0 0
        %1679 = vmatpush1.bf16.msra.mxu0 0
        %1680 = vmatprep.subr.bf16.mxu0 0
        %1681 = vmatpush1.bf16.msra.mxu0 0
        %1682 = vmatprep.subr.bf16.mxu0 0
        %1683 = vmatpush1.bf16.msra.mxu0 0
        %1684 = vmatprep.subr.bf16.mxu0 0
        %1685 = vmatpush1.bf16.msra.mxu0 0
        %1686 = vmatprep.subr.bf16.mxu0 0
        %1687 = vmatpush1.bf16.msra.mxu0 0
        %1688 = vmatprep.subr.bf16.mxu0 0
        %1689 = vmatpush1.bf16.msra.mxu0 0
        %1690 = vmatprep.subr.bf16.mxu0 0
        %1691 = vmatpush1.bf16.msra.mxu0 0
        %1692 = vmatprep.subr.bf16.mxu0 0
        %1693 = vmatpush1.bf16.msra.mxu0 0
        %1694 = vmatprep.subr.bf16.mxu0 0
        %1695 = vmatpush1.bf16.msra.mxu0 0
        %1696 = vmatprep.subr.bf16.mxu0 0
        %1697 = vmatpush1.bf16.msra.mxu0 0
        %1698 = vmatprep.subr.bf16.mxu0 0
        %1699 = vmatpush1.bf16.msra.mxu0 0
        %1700 = vmatprep.subr.bf16.mxu0 0
        %1701 = vmatpush1.bf16.msra.mxu0 0
        %1702 = vmatprep.mubr.bf16.mxu0 0
        %1703 = vmatmul.mubr.bf16.gmra.mrb[0].mxu0 %v1665
        %v1704 = vpop.f32.mrb[0].mxu0
        %v1705 = vadd.f32 0.0, %v1704
        %v1706 = vpop.f32.mrb[0].mxu0
        %v1707 = vpop.f32.mrb[0].mxu0
        %v1708 = vadd.f32 0.0, %v1707
        %v1709 = vpop.f32.mrb[0].mxu0
        %1710 = vdwg.mxu0
        %v1711 = vadd.f32 %v1654, %v1705
        %v1712 = vadd.f32 %v1655, %v1708
        %s1713 = sadd.s32 %s186, 4
        %s1714 = smul.u32 %s1713, 3
        %s1715 = smul.addr %s1714, 4
        %s1716 = scalar_lea.vmem %s182, %s1715
        %v1717 = vld [vmem:[%s1716] sm:$0xf]
        %v1718 = vld [vmem:[%s1716 + $0x4] sm:$0xf]
        %v1719 = vld [vmem:[%s571] sm:$0x3]
        %v1722 = vunpack.c.l.b16 %v1717
        %v1723 = vunpack.c.l.b16 %v1718
        %v1724 = vpack.c.b16 %v1723, %v1722
        %v1726 = vsel %vm217, %v1724, 0
        %v1729 = vsel %vm221, %v1719, 0
        %1731 = vmatprep.subr.bf16.mxu0 0
        %1732 = vmatpush1.bf16.msra.mxu0 %v1729
        %1733 = vmatprep.subr.bf16.mxu0 0
        %1734 = vmatpush1.bf16.msra.mxu0 0
        %1735 = vmatprep.subr.bf16.mxu0 0
        %1736 = vmatpush1.bf16.msra.mxu0 0
        %1737 = vmatprep.subr.bf16.mxu0 0
        %1738 = vmatpush1.bf16.msra.mxu0 0
        %1739 = vmatprep.subr.bf16.mxu0 0
        %1740 = vmatpush1.bf16.msra.mxu0 0
        %1741 = vmatprep.subr.bf16.mxu0 0
        %1742 = vmatpush1.bf16.msra.mxu0 0
        %1743 = vmatprep.subr.bf16.mxu0 0
        %1744 = vmatpush1.bf16.msra.mxu0 0
        %1745 = vmatprep.subr.bf16.mxu0 0
        %1746 = vmatpush1.bf16.msra.mxu0 0
        %1747 = vmatprep.subr.bf16.mxu0 0
        %1748 = vmatpush1.bf16.msra.mxu0 0
        %1749 = vmatprep.subr.bf16.mxu0 0
        %1750 = vmatpush1.bf16.msra.mxu0 0
        %1751 = vmatprep.subr.bf16.mxu0 0
        %1752 = vmatpush1.bf16.msra.mxu0 0
        %1753 = vmatprep.subr.bf16.mxu0 0
        %1754 = vmatpush1.bf16.msra.mxu0 0
        %1755 = vmatprep.subr.bf16.mxu0 0
        %1756 = vmatpush1.bf16.msra.mxu0 0
        %1757 = vmatprep.subr.bf16.mxu0 0
        %1758 = vmatpush1.bf16.msra.mxu0 0
        %1759 = vmatprep.subr.bf16.mxu0 0
        %1760 = vmatpush1.bf16.msra.mxu0 0
        %1761 = vmatprep.subr.bf16.mxu0 0
        %1762 = vmatpush1.bf16.msra.mxu0 0
        %1763 = vmatprep.mubr.bf16.mxu0 0
        %1764 = vmatmul.mubr.bf16.gmra.mrb[0].mxu0 %v1726
        %v1765 = vpop.f32.mrb[0].mxu0
        %v1766 = vadd.f32 0.0, %v1765
        %v1767 = vpop.f32.mrb[0].mxu0
        %v1768 = vpop.f32.mrb[0].mxu0
        %v1769 = vadd.f32 0.0, %v1768
        %v1770 = vpop.f32.mrb[0].mxu0
        %1771 = vdwg.mxu0
        %v1772 = vadd.f32 %v1711, %v1766
        %v1773 = vadd.f32 %v1712, %v1769
        %v1774 = vld [vmem:[%s1716] sm:$0xf]
        %v1775 = vld [vmem:[%s1716 + $0x4] sm:$0xf]
        %v1776 = vld [vmem:[%s1716 + $0x8] sm:$0x1]
        %v1777 = vld [vmem:[%s630] sm:$0x3]
        %v1781 = vunpack.c.l.b16 %v1774
        %v1782 = vunpack.c.l.b16 %v1775
        %v1783 = vunpack.c.l.b16 %v1776
        %v1784 = vpack.c.b16 %v1782, %v1781
        %v1785 = vpack.c.b16 %v1783, %v1783
        %v1787 = vshrl.u32 %v1784, 16
        %v1789 = vshll.u32 %v1784, 16
        %v1791 = vrot.slane %v1789, 1
        %v1792 = vor.u32 %v1787, %v1791
        %v1794 = vshll.u32 %v1785, 16
        %v1796 = vrot.slane %v1794, 1
        %v1797 = vsel %vm204, %v1792, %v1796
        %v1799 = vsel %vm217, %v1797, 0
        %v1802 = vsel %vm221, %v1777, 0
        %1804 = vmatprep.subr.bf16.mxu0 0
        %1805 = vmatpush1.bf16.msra.mxu0 %v1802
        %1806 = vmatprep.subr.bf16.mxu0 0
        %1807 = vmatpush1.bf16.msra.mxu0 0
        %1808 = vmatprep.subr.bf16.mxu0 0
        %1809 = vmatpush1.bf16.msra.mxu0 0
        %1810 = vmatprep.subr.bf16.mxu0 0
        %1811 = vmatpush1.bf16.msra.mxu0 0
        %1812 = vmatprep.subr.bf16.mxu0 0
        %1813 = vmatpush1.bf16.msra.mxu0 0
        %1814 = vmatprep.subr.bf16.mxu0 0
        %1815 = vmatpush1.bf16.msra.mxu0 0
        %1816 = vmatprep.subr.bf16.mxu0 0
        %1817 = vmatpush1.bf16.msra.mxu0 0
        %1818 = vmatprep.subr.bf16.mxu0 0
        %1819 = vmatpush1.bf16.msra.mxu0 0
        %1820 = vmatprep.subr.bf16.mxu0 0
        %1821 = vmatpush1.bf16.msra.mxu0 0
        %1822 = vmatprep.subr.bf16.mxu0 0
        %1823 = vmatpush1.bf16.msra.mxu0 0
        %1824 = vmatprep.subr.bf16.mxu0 0
        %1825 = vmatpush1.bf16.msra.mxu0 0
        %1826 = vmatprep.subr.bf16.mxu0 0
        %1827 = vmatpush1.bf16.msra.mxu0 0
        %1828 = vmatprep.subr.bf16.mxu0 0
        %1829 = vmatpush1.bf16.msra.mxu0 0
        %1830 = vmatprep.subr.bf16.mxu0 0
        %1831 = vmatpush1.bf16.msra.mxu0 0
        %1832 = vmatprep.subr.bf16.mxu0 0
        %1833 = vmatpush1.bf16.msra.mxu0 0
        %1834 = vmatprep.subr.bf16.mxu0 0
        %1835 = vmatpush1.bf16.msra.mxu0 0
        %1836 = vmatprep.mubr.bf16.mxu0 0
        %1837 = vmatmul.mubr.bf16.gmra.mrb[0].mxu0 %v1799
        %v1838 = vpop.f32.mrb[0].mxu0
        %v1839 = vadd.f32 0.0, %v1838
        %v1840 = vpop.f32.mrb[0].mxu0
        %v1841 = vpop.f32.mrb[0].mxu0
        %v1842 = vadd.f32 0.0, %v1841
        %v1843 = vpop.f32.mrb[0].mxu0
        %1844 = vdwg.mxu0
        %v1845 = vadd.f32 %v1772, %v1839
        %v1846 = vadd.f32 %v1773, %v1842
        %v1847 = vld [vmem:[%s1716] sm:$0xe]
        %v1848 = vld [vmem:[%s702] sm:$0x3]
        %v1850 = vunpack.c.l.b16 %v1847
        %v1851 = vpack.c.b16 %v1782, %v1850
        %v1852 = vrot.slane %v1851, 1
        %v1853 = vrot.slane %v1785, 1
        %v1854 = vsel %vm318, %v1852, %v1853
        %v1856 = vsel %vm217, %v1854, 0
        %v1859 = vsel %vm221, %v1848, 0
        %1861 = vmatprep.subr.bf16.mxu0 0
        %1862 = vmatpush1.bf16.msra.mxu0 %v1859
        %1863 = vmatprep.subr.bf16.mxu0 0
        %1864 = vmatpush1.bf16.msra.mxu0 0
        %1865 = vmatprep.subr.bf16.mxu0 0
        %1866 = vmatpush1.bf16.msra.mxu0 0
        %1867 = vmatprep.subr.bf16.mxu0 0
        %1868 = vmatpush1.bf16.msra.mxu0 0
        %1869 = vmatprep.subr.bf16.mxu0 0
        %1870 = vmatpush1.bf16.msra.mxu0 0
        %1871 = vmatprep.subr.bf16.mxu0 0
        %1872 = vmatpush1.bf16.msra.mxu0 0
        %1873 = vmatprep.subr.bf16.mxu0 0
        %1874 = vmatpush1.bf16.msra.mxu0 0
        %1875 = vmatprep.subr.bf16.mxu0 0
        %1876 = vmatpush1.bf16.msra.mxu0 0
        %1877 = vmatprep.subr.bf16.mxu0 0
        %1878 = vmatpush1.bf16.msra.mxu0 0
        %1879 = vmatprep.subr.bf16.mxu0 0
        %1880 = vmatpush1.bf16.msra.mxu0 0
        %1881 = vmatprep.subr.bf16.mxu0 0
        %1882 = vmatpush1.bf16.msra.mxu0 0
        %1883 = vmatprep.subr.bf16.mxu0 0
        %1884 = vmatpush1.bf16.msra.mxu0 0
        %1885 = vmatprep.subr.bf16.mxu0 0
        %1886 = vmatpush1.bf16.msra.mxu0 0
        %1887 = vmatprep.subr.bf16.mxu0 0
        %1888 = vmatpush1.bf16.msra.mxu0 0
        %1889 = vmatprep.subr.bf16.mxu0 0
        %1890 = vmatpush1.bf16.msra.mxu0 0
        %1891 = vmatprep.subr.bf16.mxu0 0
        %1892 = vmatpush1.bf16.msra.mxu0 0
        %1893 = vmatprep.mubr.bf16.mxu0 0
        %1894 = vmatmul.mubr.bf16.gmra.mrb[0].mxu0 %v1856
        %v1895 = vpop.f32.mrb[0].mxu0
        %v1896 = vadd.f32 0.0, %v1895
        %v1897 = vpop.f32.mrb[0].mxu0
        %v1898 = vpop.f32.mrb[0].mxu0
        %v1899 = vadd.f32 0.0, %v1898
        %v1900 = vpop.f32.mrb[0].mxu0
        %1901 = vdwg.mxu0
        %v1902 = vadd.f32 %v1845, %v1896
        %v1903 = vadd.f32 %v1846, %v1899
        %v1904 = vadd.f32 %v1902, %v763
        %v1905 = vadd.f32 %v1903, %v763
        %v1906 = vmin.f32 %v1904, 0.0
        %v1907 = vmin.f32 %v1905, 0.0
        %v1908 = vmul.f32 %v1906, 1.442695
        %v1909 = vpow.pop %v1908
        %v1910 = vmul.f32 %v1907, 1.442695
        %v1911 = vpow.pop %v1910
        %v1912 = vsub.f32 %v1909, 1.0
        %v1913 = vsub.f32 %v1911, 1.0
        %vm1914 = vcmp.gt.f32.partialorder %v1904, 0.0
        %vm1915 = vcmp.gt.f32.partialorder %v1905, 0.0
        %v1916 = vsel %vm1914, %v1904, %v1912
        %v1917 = vsel %vm1915, %v1905, %v1913
        %s1918 = scalar_lea.vmem %s177, 32 [#allocation2]
        %1919 = vst [vmem:[%s1918] sm:$0xff] %v1916
        %1920 = vst [vmem:[%s1918 + $0x8] sm:$0xff] %v1917
        %v1921 = vld [vmem:[%s1146] sm:$0xf]
        %v1922 = vld [vmem:[%s1146 + $0x4] sm:$0xf]
        %v1923 = vld [vmem:[%s1] sm:$0x3]
        %v1924 = vld [vmem:[%s1146 + $0x8] sm:$0x1]
        %v1925 = vld [vmem:[%s194] sm:$0x3]
        %v1929 = vunpack.c.l.b16 %v1921
        %v1930 = vunpack.c.l.b16 %v1922
        %v1931 = vunpack.c.l.b16 %v1924
        %v1932 = vpack.c.b16 %v1930, %v1929
        %v1933 = vpack.c.b16 %v1931, %v1931
        %v1935 = vshrl.u32 %v1932, 16
        %v1937 = vshll.u32 %v1932, 16
        %v1939 = vrot.slane %v1937, 1
        %v1940 = vor.u32 %v1935, %v1939
        %v1942 = vshll.u32 %v1933, 16
        %v1944 = vrot.slane %v1942, 1
        %v1945 = vsel %vm204, %v1940, %v1944
        %v1947 = vsel %vm217, %v1945, 0
        %v1950 = vsel %vm221, %v1925, 0
        %1952 = vmatprep.subr.bf16.mxu0 0
        %1953 = vmatpush1.bf16.msra.mxu0 %v1950
        %1954 = vmatprep.subr.bf16.mxu0 0
        %1955 = vmatpush1.bf16.msra.mxu0 0
        %1956 = vmatprep.subr.bf16.mxu0 0
        %1957 = vmatpush1.bf16.msra.mxu0 0
        %1958 = vmatprep.subr.bf16.mxu0 0
        %1959 = vmatpush1.bf16.msra.mxu0 0
        %1960 = vmatprep.subr.bf16.mxu0 0
        %1961 = vmatpush1.bf16.msra.mxu0 0
        %1962 = vmatprep.subr.bf16.mxu0 0
        %1963 = vmatpush1.bf16.msra.mxu0 0
        %1964 = vmatprep.subr.bf16.mxu0 0
        %1965 = vmatpush1.bf16.msra.mxu0 0
        %1966 = vmatprep.subr.bf16.mxu0 0
        %1967 = vmatpush1.bf16.msra.mxu0 0
        %1968 = vmatprep.subr.bf16.mxu0 0
        %1969 = vmatpush1.bf16.msra.mxu0 0
        %1970 = vmatprep.subr.bf16.mxu0 0
        %1971 = vmatpush1.bf16.msra.mxu0 0
        %1972 = vmatprep.subr.bf16.mxu0 0
        %1973 = vmatpush1.bf16.msra.mxu0 0
        %1974 = vmatprep.subr.bf16.mxu0 0
        %1975 = vmatpush1.bf16.msra.mxu0 0
        %1976 = vmatprep.subr.bf16.mxu0 0
        %1977 = vmatpush1.bf16.msra.mxu0 0
        %1978 = vmatprep.subr.bf16.mxu0 0
        %1979 = vmatpush1.bf16.msra.mxu0 0
        %1980 = vmatprep.subr.bf16.mxu0 0
        %1981 = vmatpush1.bf16.msra.mxu0 0
        %1982 = vmatprep.subr.bf16.mxu0 0
        %1983 = vmatpush1.bf16.msra.mxu0 0
        %1984 = vmatprep.mubr.bf16.mxu0 0
        %1985 = vmatmul.mubr.bf16.gmra.mrb[0].mxu0 %v1947
        %v1986 = vpop.f32.mrb[0].mxu0
        %v1987 = vadd.f32 0.0, %v1986
        %v1988 = vpop.f32.mrb[0].mxu0
        %v1989 = vpop.f32.mrb[0].mxu0
        %v1990 = vadd.f32 0.0, %v1989
        %v1991 = vpop.f32.mrb[0].mxu0
        %1992 = vdwg.mxu0
        %v1993 = vsel %vm217, %v1932, 0
        %v1996 = vsel %vm221, %v1923, 0
        %1998 = vmatprep.subr.bf16.mxu0 0
        %1999 = vmatpush1.bf16.msra.mxu0 %v1996
        %2000 = vmatprep.subr.bf16.mxu0 0
        %2001 = vmatpush1.bf16.msra.mxu0 0
        %2002 = vmatprep.subr.bf16.mxu0 0
        %2003 = vmatpush1.bf16.msra.mxu0 0
        %2004 = vmatprep.subr.bf16.mxu0 0
        %2005 = vmatpush1.bf16.msra.mxu0 0
        %2006 = vmatprep.subr.bf16.mxu0 0
        %2007 = vmatpush1.bf16.msra.mxu0 0
        %2008 = vmatprep.subr.bf16.mxu0 0
        %2009 = vmatpush1.bf16.msra.mxu0 0
        %2010 = vmatprep.subr.bf16.mxu0 0
        %2011 = vmatpush1.bf16.msra.mxu0 0
        %2012 = vmatprep.subr.bf16.mxu0 0
        %2013 = vmatpush1.bf16.msra.mxu0 0
        %2014 = vmatprep.subr.bf16.mxu0 0
        %2015 = vmatpush1.bf16.msra.mxu0 0
        %2016 = vmatprep.subr.bf16.mxu0 0
        %2017 = vmatpush1.bf16.msra.mxu0 0
        %2018 = vmatprep.subr.bf16.mxu0 0
        %2019 = vmatpush1.bf16.msra.mxu0 0
        %2020 = vmatprep.subr.bf16.mxu0 0
        %2021 = vmatpush1.bf16.msra.mxu0 0
        %2022 = vmatprep.subr.bf16.mxu0 0
        %2023 = vmatpush1.bf16.msra.mxu0 0
        %2024 = vmatprep.subr.bf16.mxu0 0
        %2025 = vmatpush1.bf16.msra.mxu0 0
        %2026 = vmatprep.subr.bf16.mxu0 0
        %2027 = vmatpush1.bf16.msra.mxu0 0
        %2028 = vmatprep.subr.bf16.mxu0 0
        %2029 = vmatpush1.bf16.msra.mxu0 0
        %2030 = vmatprep.mubr.bf16.mxu0 0
        %2031 = vmatmul.mubr.bf16.gmra.mrb[0].mxu0 %v1993
        %v2032 = vpop.f32.mrb[0].mxu0
        %v2033 = vadd.f32 %v1987, %v2032
        %v2034 = vpop.f32.mrb[0].mxu0
        %v2035 = vpop.f32.mrb[0].mxu0
        %v2036 = vadd.f32 %v1990, %v2035
        %v2037 = vpop.f32.mrb[0].mxu0
        %2038 = vdwg.mxu0
        %v2039 = vld [vmem:[%s1146] sm:$0xe]
        %v2040 = vld [vmem:[%s313] sm:$0x3]
        %v2042 = vunpack.c.l.b16 %v2039
        %v2043 = vpack.c.b16 %v1930, %v2042
        %v2044 = vrot.slane %v2043, 1
        %v2045 = vrot.slane %v1933, 1
        %v2046 = vsel %vm318, %v2044, %v2045
        %v2048 = vsel %vm217, %v2046, 0
        %v2051 = vsel %vm221, %v2040, 0
        %2053 = vmatprep.subr.bf16.mxu0 0
        %2054 = vmatpush1.bf16.msra.mxu0 %v2051
        %2055 = vmatprep.subr.bf16.mxu0 0
        %2056 = vmatpush1.bf16.msra.mxu0 0
        %2057 = vmatprep.subr.bf16.mxu0 0
        %2058 = vmatpush1.bf16.msra.mxu0 0
        %2059 = vmatprep.subr.bf16.mxu0 0
        %2060 = vmatpush1.bf16.msra.mxu0 0
        %2061 = vmatprep.subr.bf16.mxu0 0
        %2062 = vmatpush1.bf16.msra.mxu0 0
        %2063 = vmatprep.subr.bf16.mxu0 0
        %2064 = vmatpush1.bf16.msra.mxu0 0
        %2065 = vmatprep.subr.bf16.mxu0 0
        %2066 = vmatpush1.bf16.msra.mxu0 0
        %2067 = vmatprep.subr.bf16.mxu0 0
        %2068 = vmatpush1.bf16.msra.mxu0 0
        %2069 = vmatprep.subr.bf16.mxu0 0
        %2070 = vmatpush1.bf16.msra.mxu0 0
        %2071 = vmatprep.subr.bf16.mxu0 0
        %2072 = vmatpush1.bf16.msra.mxu0 0
        %2073 = vmatprep.subr.bf16.mxu0 0
        %2074 = vmatpush1.bf16.msra.mxu0 0
        %2075 = vmatprep.subr.bf16.mxu0 0
        %2076 = vmatpush1.bf16.msra.mxu0 0
        %2077 = vmatprep.subr.bf16.mxu0 0
        %2078 = vmatpush1.bf16.msra.mxu0 0
        %2079 = vmatprep.subr.bf16.mxu0 0
        %2080 = vmatpush1.bf16.msra.mxu0 0
        %2081 = vmatprep.subr.bf16.mxu0 0
        %2082 = vmatpush1.bf16.msra.mxu0 0
        %2083 = vmatprep.subr.bf16.mxu0 0
        %2084 = vmatpush1.bf16.msra.mxu0 0
        %2085 = vmatprep.mubr.bf16.mxu0 0
        %2086 = vmatmul.mubr.bf16.gmra.mrb[0].mxu0 %v2048
        %v2087 = vpop.f32.mrb[0].mxu0
        %v2088 = vadd.f32 0.0, %v2087
        %v2089 = vpop.f32.mrb[0].mxu0
        %v2090 = vpop.f32.mrb[0].mxu0
        %v2091 = vadd.f32 0.0, %v2090
        %v2092 = vpop.f32.mrb[0].mxu0
        %2093 = vdwg.mxu0
        %v2094 = vadd.f32 %v2033, %v2088
        %v2095 = vadd.f32 %v2036, %v2091
        %v2096 = vld [vmem:[%s1716] sm:$0xf]
        %v2097 = vld [vmem:[%s1716 + $0x4] sm:$0xf]
        %v2098 = vld [vmem:[%s377] sm:$0x3]
        %v2101 = vunpack.c.l.b16 %v2096
        %v2102 = vunpack.c.l.b16 %v2097
        %v2103 = vpack.c.b16 %v2102, %v2101
        %v2105 = vsel %vm217, %v2103, 0
        %v2108 = vsel %vm221, %v2098, 0
        %2110 = vmatprep.subr.bf16.mxu0 0
        %2111 = vmatpush1.bf16.msra.mxu0 %v2108
        %2112 = vmatprep.subr.bf16.mxu0 0
        %2113 = vmatpush1.bf16.msra.mxu0 0
        %2114 = vmatprep.subr.bf16.mxu0 0
        %2115 = vmatpush1.bf16.msra.mxu0 0
        %2116 = vmatprep.subr.bf16.mxu0 0
        %2117 = vmatpush1.bf16.msra.mxu0 0
        %2118 = vmatprep.subr.bf16.mxu0 0
        %2119 = vmatpush1.bf16.msra.mxu0 0
        %2120 = vmatprep.subr.bf16.mxu0 0
        %2121 = vmatpush1.bf16.msra.mxu0 0
        %2122 = vmatprep.subr.bf16.mxu0 0
        %2123 = vmatpush1.bf16.msra.mxu0 0
        %2124 = vmatprep.subr.bf16.mxu0 0
        %2125 = vmatpush1.bf16.msra.mxu0 0
        %2126 = vmatprep.subr.bf16.mxu0 0
        %2127 = vmatpush1.bf16.msra.mxu0 0
        %2128 = vmatprep.subr.bf16.mxu0 0
        %2129 = vmatpush1.bf16.msra.mxu0 0
        %2130 = vmatprep.subr.bf16.mxu0 0
        %2131 = vmatpush1.bf16.msra.mxu0 0
        %2132 = vmatprep.subr.bf16.mxu0 0
        %2133 = vmatpush1.bf16.msra.mxu0 0
        %2134 = vmatprep.subr.bf16.mxu0 0
        %2135 = vmatpush1.bf16.msra.mxu0 0
        %2136 = vmatprep.subr.bf16.mxu0 0
        %2137 = vmatpush1.bf16.msra.mxu0 0
        %2138 = vmatprep.subr.bf16.mxu0 0
        %2139 = vmatpush1.bf16.msra.mxu0 0
        %2140 = vmatprep.subr.bf16.mxu0 0
        %2141 = vmatpush1.bf16.msra.mxu0 0
        %2142 = vmatprep.mubr.bf16.mxu0 0
        %2143 = vmatmul.mubr.bf16.gmra.mrb[0].mxu0 %v2105
        %v2144 = vpop.f32.mrb[0].mxu0
        %v2145 = vadd.f32 0.0, %v2144
        %v2146 = vpop.f32.mrb[0].mxu0
        %v2147 = vpop.f32.mrb[0].mxu0
        %v2148 = vadd.f32 0.0, %v2147
        %v2149 = vpop.f32.mrb[0].mxu0
        %2150 = vdwg.mxu0
        %v2151 = vadd.f32 %v2094, %v2145
        %v2152 = vadd.f32 %v2095, %v2148
        %v2153 = vld [vmem:[%s1716] sm:$0xf]
        %v2154 = vld [vmem:[%s1716 + $0x4] sm:$0xf]
        %v2155 = vld [vmem:[%s1716 + $0x8] sm:$0x1]
        %v2156 = vld [vmem:[%s436] sm:$0x3]
        %v2160 = vunpack.c.l.b16 %v2153
        %v2161 = vunpack.c.l.b16 %v2154
        %v2162 = vunpack.c.l.b16 %v2155
        %v2163 = vpack.c.b16 %v2161, %v2160
        %v2164 = vpack.c.b16 %v2162, %v2162
        %v2166 = vshrl.u32 %v2163, 16
        %v2168 = vshll.u32 %v2163, 16
        %v2170 = vrot.slane %v2168, 1
        %v2171 = vor.u32 %v2166, %v2170
        %v2173 = vshll.u32 %v2164, 16
        %v2175 = vrot.slane %v2173, 1
        %v2176 = vsel %vm204, %v2171, %v2175
        %v2178 = vsel %vm217, %v2176, 0
        %v2181 = vsel %vm221, %v2156, 0
        %2183 = vmatprep.subr.bf16.mxu0 0
        %2184 = vmatpush1.bf16.msra.mxu0 %v2181
        %2185 = vmatprep.subr.bf16.mxu0 0
        %2186 = vmatpush1.bf16.msra.mxu0 0
        %2187 = vmatprep.subr.bf16.mxu0 0
        %2188 = vmatpush1.bf16.msra.mxu0 0
        %2189 = vmatprep.subr.bf16.mxu0 0
        %2190 = vmatpush1.bf16.msra.mxu0 0
        %2191 = vmatprep.subr.bf16.mxu0 0
        %2192 = vmatpush1.bf16.msra.mxu0 0
        %2193 = vmatprep.subr.bf16.mxu0 0
        %2194 = vmatpush1.bf16.msra.mxu0 0
        %2195 = vmatprep.subr.bf16.mxu0 0
        %2196 = vmatpush1.bf16.msra.mxu0 0
        %2197 = vmatprep.subr.bf16.mxu0 0
        %2198 = vmatpush1.bf16.msra.mxu0 0
        %2199 = vmatprep.subr.bf16.mxu0 0
        %2200 = vmatpush1.bf16.msra.mxu0 0
        %2201 = vmatprep.subr.bf16.mxu0 0
        %2202 = vmatpush1.bf16.msra.mxu0 0
        %2203 = vmatprep.subr.bf16.mxu0 0
        %2204 = vmatpush1.bf16.msra.mxu0 0
        %2205 = vmatprep.subr.bf16.mxu0 0
        %2206 = vmatpush1.bf16.msra.mxu0 0
        %2207 = vmatprep.subr.bf16.mxu0 0
        %2208 = vmatpush1.bf16.msra.mxu0 0
        %2209 = vmatprep.subr.bf16.mxu0 0
        %2210 = vmatpush1.bf16.msra.mxu0 0
        %2211 = vmatprep.subr.bf16.mxu0 0
        %2212 = vmatpush1.bf16.msra.mxu0 0
        %2213 = vmatprep.subr.bf16.mxu0 0
        %2214 = vmatpush1.bf16.msra.mxu0 0
        %2215 = vmatprep.mubr.bf16.mxu0 0
        %2216 = vmatmul.mubr.bf16.gmra.mrb[0].mxu0 %v2178
        %v2217 = vpop.f32.mrb[0].mxu0
        %v2218 = vadd.f32 0.0, %v2217
        %v2219 = vpop.f32.mrb[0].mxu0
        %v2220 = vpop.f32.mrb[0].mxu0
        %v2221 = vadd.f32 0.0, %v2220
        %v2222 = vpop.f32.mrb[0].mxu0
        %2223 = vdwg.mxu0
        %v2224 = vadd.f32 %v2151, %v2218
        %v2225 = vadd.f32 %v2152, %v2221
        %v2226 = vld [vmem:[%s1716] sm:$0xe]
        %v2227 = vld [vmem:[%s508] sm:$0x3]
        %v2229 = vunpack.c.l.b16 %v2226
        %v2230 = vpack.c.b16 %v2161, %v2229
        %v2231 = vrot.slane %v2230, 1
        %v2232 = vrot.slane %v2164, 1
        %v2233 = vsel %vm318, %v2231, %v2232
        %v2235 = vsel %vm217, %v2233, 0
        %v2238 = vsel %vm221, %v2227, 0
        %2240 = vmatprep.subr.bf16.mxu0 0
        %2241 = vmatpush1.bf16.msra.mxu0 %v2238
        %2242 = vmatprep.subr.bf16.mxu0 0
        %2243 = vmatpush1.bf16.msra.mxu0 0
        %2244 = vmatprep.subr.bf16.mxu0 0
        %2245 = vmatpush1.bf16.msra.mxu0 0
        %2246 = vmatprep.subr.bf16.mxu0 0
        %2247 = vmatpush1.bf16.msra.mxu0 0
        %2248 = vmatprep.subr.bf16.mxu0 0
        %2249 = vmatpush1.bf16.msra.mxu0 0
        %2250 = vmatprep.subr.bf16.mxu0 0
        %2251 = vmatpush1.bf16.msra.mxu0 0
        %2252 = vmatprep.subr.bf16.mxu0 0
        %2253 = vmatpush1.bf16.msra.mxu0 0
        %2254 = vmatprep.subr.bf16.mxu0 0
        %2255 = vmatpush1.bf16.msra.mxu0 0
        %2256 = vmatprep.subr.bf16.mxu0 0
        %2257 = vmatpush1.bf16.msra.mxu0 0
        %2258 = vmatprep.subr.bf16.mxu0 0
        %2259 = vmatpush1.bf16.msra.mxu0 0
        %2260 = vmatprep.subr.bf16.mxu0 0
        %2261 = vmatpush1.bf16.msra.mxu0 0
        %2262 = vmatprep.subr.bf16.mxu0 0
        %2263 = vmatpush1.bf16.msra.mxu0 0
        %2264 = vmatprep.subr.bf16.mxu0 0
        %2265 = vmatpush1.bf16.msra.mxu0 0
        %2266 = vmatprep.subr.bf16.mxu0 0
        %2267 = vmatpush1.bf16.msra.mxu0 0
        %2268 = vmatprep.subr.bf16.mxu0 0
        %2269 = vmatpush1.bf16.msra.mxu0 0
        %2270 = vmatprep.subr.bf16.mxu0 0
        %2271 = vmatpush1.bf16.msra.mxu0 0
        %2272 = vmatprep.mubr.bf16.mxu0 0
        %2273 = vmatmul.mubr.bf16.gmra.mrb[0].mxu0 %v2235
        %v2274 = vpop.f32.mrb[0].mxu0
        %v2275 = vadd.f32 0.0, %v2274
        %v2276 = vpop.f32.mrb[0].mxu0
        %v2277 = vpop.f32.mrb[0].mxu0
        %v2278 = vadd.f32 0.0, %v2277
        %v2279 = vpop.f32.mrb[0].mxu0
        %2280 = vdwg.mxu0
        %v2281 = vadd.f32 %v2224, %v2275
        %v2282 = vadd.f32 %v2225, %v2278
        %s2283 = sadd.s32 %s186, 5
        %s2284 = smul.u32 %s2283, 3
        %s2285 = smul.addr %s2284, 4
        %s2286 = scalar_lea.vmem %s182, %s2285
        %v2287 = vld [vmem:[%s2286] sm:$0xf]
        %v2288 = vld [vmem:[%s2286 + $0x4] sm:$0xf]
        %v2289 = vld [vmem:[%s571] sm:$0x3]
        %v2292 = vunpack.c.l.b16 %v2287
        %v2293 = vunpack.c.l.b16 %v2288
        %v2294 = vpack.c.b16 %v2293, %v2292
        %v2296 = vsel %vm217, %v2294, 0
        %v2299 = vsel %vm221, %v2289, 0
        %2301 = vmatprep.subr.bf16.mxu0 0
        %2302 = vmatpush1.bf16.msra.mxu0 %v2299
        %2303 = vmatprep.subr.bf16.mxu0 0
        %2304 = vmatpush1.bf16.msra.mxu0 0
        %2305 = vmatprep.subr.bf16.mxu0 0
        %2306 = vmatpush1.bf16.msra.mxu0 0
        %2307 = vmatprep.subr.bf16.mxu0 0
        %2308 = vmatpush1.bf16.msra.mxu0 0
        %2309 = vmatprep.subr.bf16.mxu0 0
        %2310 = vmatpush1.bf16.msra.mxu0 0
        %2311 = vmatprep.subr.bf16.mxu0 0
        %2312 = vmatpush1.bf16.msra.mxu0 0
        %2313 = vmatprep.subr.bf16.mxu0 0
        %2314 = vmatpush1.bf16.msra.mxu0 0
        %2315 = vmatprep.subr.bf16.mxu0 0
        %2316 = vmatpush1.bf16.msra.mxu0 0
        %2317 = vmatprep.subr.bf16.mxu0 0
        %2318 = vmatpush1.bf16.msra.mxu0 0
        %2319 = vmatprep.subr.bf16.mxu0 0
        %2320 = vmatpush1.bf16.msra.mxu0 0
        %2321 = vmatprep.subr.bf16.mxu0 0
        %2322 = vmatpush1.bf16.msra.mxu0 0
        %2323 = vmatprep.subr.bf16.mxu0 0
        %2324 = vmatpush1.bf16.msra.mxu0 0
        %2325 = vmatprep.subr.bf16.mxu0 0
        %2326 = vmatpush1.bf16.msra.mxu0 0
        %2327 = vmatprep.subr.bf16.mxu0 0
        %2328 = vmatpush1.bf16.msra.mxu0 0
        %2329 = vmatprep.subr.bf16.mxu0 0
        %2330 = vmatpush1.bf16.msra.mxu0 0
        %2331 = vmatprep.subr.bf16.mxu0 0
        %2332 = vmatpush1.bf16.msra.mxu0 0
        %2333 = vmatprep.mubr.bf16.mxu0 0
        %2334 = vmatmul.mubr.bf16.gmra.mrb[0].mxu0 %v2296
        %v2335 = vpop.f32.mrb[0].mxu0
        %v2336 = vadd.f32 0.0, %v2335
        %v2337 = vpop.f32.mrb[0].mxu0
        %v2338 = vpop.f32.mrb[0].mxu0
        %v2339 = vadd.f32 0.0, %v2338
        %v2340 = vpop.f32.mrb[0].mxu0
        %2341 = vdwg.mxu0
        %v2342 = vadd.f32 %v2281, %v2336
        %v2343 = vadd.f32 %v2282, %v2339
        %v2344 = vld [vmem:[%s2286] sm:$0xf]
        %v2345 = vld [vmem:[%s2286 + $0x4] sm:$0xf]
        %v2346 = vld [vmem:[%s2286 + $0x8] sm:$0x1]
        %v2347 = vld [vmem:[%s630] sm:$0x3]
        %v2351 = vunpack.c.l.b16 %v2344
        %v2352 = vunpack.c.l.b16 %v2345
        %v2353 = vunpack.c.l.b16 %v2346
        %v2354 = vpack.c.b16 %v2352, %v2351
        %v2355 = vpack.c.b16 %v2353, %v2353
        %v2357 = vshrl.u32 %v2354, 16
        %v2359 = vshll.u32 %v2354, 16
        %v2361 = vrot.slane %v2359, 1
        %v2362 = vor.u32 %v2357, %v2361
        %v2364 = vshll.u32 %v2355, 16
        %v2366 = vrot.slane %v2364, 1
        %v2367 = vsel %vm204, %v2362, %v2366
        %v2369 = vsel %vm217, %v2367, 0
        %v2372 = vsel %vm221, %v2347, 0
        %2374 = vmatprep.subr.bf16.mxu0 0
        %2375 = vmatpush1.bf16.msra.mxu0 %v2372
        %2376 = vmatprep.subr.bf16.mxu0 0
        %2377 = vmatpush1.bf16.msra.mxu0 0
        %2378 = vmatprep.subr.bf16.mxu0 0
        %2379 = vmatpush1.bf16.msra.mxu0 0
        %2380 = vmatprep.subr.bf16.mxu0 0
        %2381 = vmatpush1.bf16.msra.mxu0 0
        %2382 = vmatprep.subr.bf16.mxu0 0
        %2383 = vmatpush1.bf16.msra.mxu0 0
        %2384 = vmatprep.subr.bf16.mxu0 0
        %2385 = vmatpush1.bf16.msra.mxu0 0
        %2386 = vmatprep.subr.bf16.mxu0 0
        %2387 = vmatpush1.bf16.msra.mxu0 0
        %2388 = vmatprep.subr.bf16.mxu0 0
        %2389 = vmatpush1.bf16.msra.mxu0 0
        %2390 = vmatprep.subr.bf16.mxu0 0
        %2391 = vmatpush1.bf16.msra.mxu0 0
        %2392 = vmatprep.subr.bf16.mxu0 0
        %2393 = vmatpush1.bf16.msra.mxu0 0
        %2394 = vmatprep.subr.bf16.mxu0 0
        %2395 = vmatpush1.bf16.msra.mxu0 0
        %2396 = vmatprep.subr.bf16.mxu0 0
        %2397 = vmatpush1.bf16.msra.mxu0 0
        %2398 = vmatprep.subr.bf16.mxu0 0
        %2399 = vmatpush1.bf16.msra.mxu0 0
        %2400 = vmatprep.subr.bf16.mxu0 0
        %2401 = vmatpush1.bf16.msra.mxu0 0
        %2402 = vmatprep.subr.bf16.mxu0 0
        %2403 = vmatpush1.bf16.msra.mxu0 0
        %2404 = vmatprep.subr.bf16.mxu0 0
        %2405 = vmatpush1.bf16.msra.mxu0 0
        %2406 = vmatprep.mubr.bf16.mxu0 0
        %2407 = vmatmul.mubr.bf16.gmra.mrb[0].mxu0 %v2369
        %v2408 = vpop.f32.mrb[0].mxu0
        %v2409 = vadd.f32 0.0, %v2408
        %v2410 = vpop.f32.mrb[0].mxu0
        %v2411 = vpop.f32.mrb[0].mxu0
        %v2412 = vadd.f32 0.0, %v2411
        %v2413 = vpop.f32.mrb[0].mxu0
        %2414 = vdwg.mxu0
        %v2415 = vadd.f32 %v2342, %v2409
        %v2416 = vadd.f32 %v2343, %v2412
        %v2417 = vld [vmem:[%s2286] sm:$0xe]
        %v2418 = vld [vmem:[%s702] sm:$0x3]
        %v2420 = vunpack.c.l.b16 %v2417
        %v2421 = vpack.c.b16 %v2352, %v2420
        %v2422 = vrot.slane %v2421, 1
        %v2423 = vrot.slane %v2355, 1
        %v2424 = vsel %vm318, %v2422, %v2423
        %v2426 = vsel %vm217, %v2424, 0
        %v2429 = vsel %vm221, %v2418, 0
        %2431 = vmatprep.subr.bf16.mxu0 0
        %2432 = vmatpush1.bf16.msra.mxu0 %v2429
        %2433 = vmatprep.subr.bf16.mxu0 0
        %2434 = vmatpush1.bf16.msra.mxu0 0
        %2435 = vmatprep.subr.bf16.mxu0 0
        %2436 = vmatpush1.bf16.msra.mxu0 0
        %2437 = vmatprep.subr.bf16.mxu0 0
        %2438 = vmatpush1.bf16.msra.mxu0 0
        %2439 = vmatprep.subr.bf16.mxu0 0
        %2440 = vmatpush1.bf16.msra.mxu0 0
        %2441 = vmatprep.subr.bf16.mxu0 0
        %2442 = vmatpush1.bf16.msra.mxu0 0
        %2443 = vmatprep.subr.bf16.mxu0 0
        %2444 = vmatpush1.bf16.msra.mxu0 0
        %2445 = vmatprep.subr.bf16.mxu0 0
        %2446 = vmatpush1.bf16.msra.mxu0 0
        %2447 = vmatprep.subr.bf16.mxu0 0
        %2448 = vmatpush1.bf16.msra.mxu0 0
        %2449 = vmatprep.subr.bf16.mxu0 0
        %2450 = vmatpush1.bf16.msra.mxu0 0
        %2451 = vmatprep.subr.bf16.mxu0 0
        %2452 = vmatpush1.bf16.msra.mxu0 0
        %2453 = vmatprep.subr.bf16.mxu0 0
        %2454 = vmatpush1.bf16.msra.mxu0 0
        %2455 = vmatprep.subr.bf16.mxu0 0
        %2456 = vmatpush1.bf16.msra.mxu0 0
        %2457 = vmatprep.subr.bf16.mxu0 0
        %2458 = vmatpush1.bf16.msra.mxu0 0
        %2459 = vmatprep.subr.bf16.mxu0 0
        %2460 = vmatpush1.bf16.msra.mxu0 0
        %2461 = vmatprep.subr.bf16.mxu0 0
        %2462 = vmatpush1.bf16.msra.mxu0 0
        %2463 = vmatprep.mubr.bf16.mxu0 0
        %2464 = vmatmul.mubr.bf16.gmra.mrb[0].mxu0 %v2426
        %v2465 = vpop.f32.mrb[0].mxu0
        %v2466 = vadd.f32 0.0, %v2465
        %v2467 = vpop.f32.mrb[0].mxu0
        %v2468 = vpop.f32.mrb[0].mxu0
        %v2469 = vadd.f32 0.0, %v2468
        %v2470 = vpop.f32.mrb[0].mxu0
        %2471 = vdwg.mxu0
        %v2472 = vadd.f32 %v2415, %v2466
        %v2473 = vadd.f32 %v2416, %v2469
        %v2474 = vadd.f32 %v2472, %v763
        %v2475 = vadd.f32 %v2473, %v763
        %v2476 = vmin.f32 %v2474, 0.0
        %v2477 = vmin.f32 %v2475, 0.0
        %v2478 = vmul.f32 %v2476, 1.442695
        %v2479 = vpow.pop %v2478
        %v2480 = vmul.f32 %v2477, 1.442695
        %v2481 = vpow.pop %v2480
        %v2482 = vsub.f32 %v2479, 1.0
        %v2483 = vsub.f32 %v2481, 1.0
        %vm2484 = vcmp.gt.f32.partialorder %v2474, 0.0
        %vm2485 = vcmp.gt.f32.partialorder %v2475, 0.0
        %v2486 = vsel %vm2484, %v2474, %v2482
        %v2487 = vsel %vm2485, %v2475, %v2483
        %s2488 = scalar_lea.vmem %s177, 48 [#allocation2]
        %2489 = vst [vmem:[%s2488] sm:$0xff] %v2486
        %2490 = vst [vmem:[%s2488 + $0x8] sm:$0xff] %v2487
        %v2491 = vld [vmem:[%s1716] sm:$0xf]
        %v2492 = vld [vmem:[%s1716 + $0x4] sm:$0xf]
        %v2493 = vld [vmem:[%s1] sm:$0x3]
        %v2494 = vld [vmem:[%s1716 + $0x8] sm:$0x1]
        %v2495 = vld [vmem:[%s194] sm:$0x3]
        %v2499 = vunpack.c.l.b16 %v2491
        %v2500 = vunpack.c.l.b16 %v2492
        %v2501 = vunpack.c.l.b16 %v2494
        %v2502 = vpack.c.b16 %v2500, %v2499
        %v2503 = vpack.c.b16 %v2501, %v2501
        %v2505 = vshrl.u32 %v2502, 16
        %v2507 = vshll.u32 %v2502, 16
        %v2509 = vrot.slane %v2507, 1
        %v2510 = vor.u32 %v2505, %v2509
        %v2512 = vshll.u32 %v2503, 16
        %v2514 = vrot.slane %v2512, 1
        %v2515 = vsel %vm204, %v2510, %v2514
        %v2517 = vsel %vm217, %v2515, 0
        %v2520 = vsel %vm221, %v2495, 0
        %2522 = vmatprep.subr.bf16.mxu0 0
        %2523 = vmatpush1.bf16.msra.mxu0 %v2520
        %2524 = vmatprep.subr.bf16.mxu0 0
        %2525 = vmatpush1.bf16.msra.mxu0 0
        %2526 = vmatprep.subr.bf16.mxu0 0
        %2527 = vmatpush1.bf16.msra.mxu0 0
        %2528 = vmatprep.subr.bf16.mxu0 0
        %2529 = vmatpush1.bf16.msra.mxu0 0
        %2530 = vmatprep.subr.bf16.mxu0 0
        %2531 = vmatpush1.bf16.msra.mxu0 0
        %2532 = vmatprep.subr.bf16.mxu0 0
        %2533 = vmatpush1.bf16.msra.mxu0 0
        %2534 = vmatprep.subr.bf16.mxu0 0
        %2535 = vmatpush1.bf16.msra.mxu0 0
        %2536 = vmatprep.subr.bf16.mxu0 0
        %2537 = vmatpush1.bf16.msra.mxu0 0
        %2538 = vmatprep.subr.bf16.mxu0 0
        %2539 = vmatpush1.bf16.msra.mxu0 0
        %2540 = vmatprep.subr.bf16.mxu0 0
        %2541 = vmatpush1.bf16.msra.mxu0 0
        %2542 = vmatprep.subr.bf16.mxu0 0
        %2543 = vmatpush1.bf16.msra.mxu0 0
        %2544 = vmatprep.subr.bf16.mxu0 0
        %2545 = vmatpush1.bf16.msra.mxu0 0
        %2546 = vmatprep.subr.bf16.mxu0 0
        %2547 = vmatpush1.bf16.msra.mxu0 0
        %2548 = vmatprep.subr.bf16.mxu0 0
        %2549 = vmatpush1.bf16.msra.mxu0 0
        %2550 = vmatprep.subr.bf16.mxu0 0
        %2551 = vmatpush1.bf16.msra.mxu0 0
        %2552 = vmatprep.subr.bf16.mxu0 0
        %2553 = vmatpush1.bf16.msra.mxu0 0
        %2554 = vmatprep.mubr.bf16.mxu0 0
        %2555 = vmatmul.mubr.bf16.gmra.mrb[0].mxu0 %v2517
        %v2556 = vpop.f32.mrb[0].mxu0
        %v2557 = vadd.f32 0.0, %v2556
        %v2558 = vpop.f32.mrb[0].mxu0
        %v2559 = vpop.f32.mrb[0].mxu0
        %v2560 = vadd.f32 0.0, %v2559
        %v2561 = vpop.f32.mrb[0].mxu0
        %2562 = vdwg.mxu0
        %v2563 = vsel %vm217, %v2502, 0
        %v2566 = vsel %vm221, %v2493, 0
        %2568 = vmatprep.subr.bf16.mxu0 0
        %2569 = vmatpush1.bf16.msra.mxu0 %v2566
        %2570 = vmatprep.subr.bf16.mxu0 0
        %2571 = vmatpush1.bf16.msra.mxu0 0
        %2572 = vmatprep.subr.bf16.mxu0 0
        %2573 = vmatpush1.bf16.msra.mxu0 0
        %2574 = vmatprep.subr.bf16.mxu0 0
        %2575 = vmatpush1.bf16.msra.mxu0 0
        %2576 = vmatprep.subr.bf16.mxu0 0
        %2577 = vmatpush1.bf16.msra.mxu0 0
        %2578 = vmatprep.subr.bf16.mxu0 0
        %2579 = vmatpush1.bf16.msra.mxu0 0
        %2580 = vmatprep.subr.bf16.mxu0 0
        %2581 = vmatpush1.bf16.msra.mxu0 0
        %2582 = vmatprep.subr.bf16.mxu0 0
        %2583 = vmatpush1.bf16.msra.mxu0 0
        %2584 = vmatprep.subr.bf16.mxu0 0
        %2585 = vmatpush1.bf16.msra.mxu0 0
        %2586 = vmatprep.subr.bf16.mxu0 0
        %2587 = vmatpush1.bf16.msra.mxu0 0
        %2588 = vmatprep.subr.bf16.mxu0 0
        %2589 = vmatpush1.bf16.msra.mxu0 0
        %2590 = vmatprep.subr.bf16.mxu0 0
        %2591 = vmatpush1.bf16.msra.mxu0 0
        %2592 = vmatprep.subr.bf16.mxu0 0
        %2593 = vmatpush1.bf16.msra.mxu0 0
        %2594 = vmatprep.subr.bf16.mxu0 0
        %2595 = vmatpush1.bf16.msra.mxu0 0
        %2596 = vmatprep.subr.bf16.mxu0 0
        %2597 = vmatpush1.bf16.msra.mxu0 0
        %2598 = vmatprep.subr.bf16.mxu0 0
        %2599 = vmatpush1.bf16.msra.mxu0 0
        %2600 = vmatprep.mubr.bf16.mxu0 0
        %2601 = vmatmul.mubr.bf16.gmra.mrb[0].mxu0 %v2563
        %v2602 = vpop.f32.mrb[0].mxu0
        %v2603 = vadd.f32 %v2557, %v2602
        %v2604 = vpop.f32.mrb[0].mxu0
        %v2605 = vpop.f32.mrb[0].mxu0
        %v2606 = vadd.f32 %v2560, %v2605
        %v2607 = vpop.f32.mrb[0].mxu0
        %2608 = vdwg.mxu0
        %v2609 = vld [vmem:[%s1716] sm:$0xe]
        %v2610 = vld [vmem:[%s313] sm:$0x3]
        %v2612 = vunpack.c.l.b16 %v2609
        %v2613 = vpack.c.b16 %v2500, %v2612
        %v2614 = vrot.slane %v2613, 1
        %v2615 = vrot.slane %v2503, 1
        %v2616 = vsel %vm318, %v2614, %v2615
        %v2618 = vsel %vm217, %v2616, 0
        %v2621 = vsel %vm221, %v2610, 0
        %2623 = vmatprep.subr.bf16.mxu0 0
        %2624 = vmatpush1.bf16.msra.mxu0 %v2621
        %2625 = vmatprep.subr.bf16.mxu0 0
        %2626 = vmatpush1.bf16.msra.mxu0 0
        %2627 = vmatprep.subr.bf16.mxu0 0
        %2628 = vmatpush1.bf16.msra.mxu0 0
        %2629 = vmatprep.subr.bf16.mxu0 0
        %2630 = vmatpush1.bf16.msra.mxu0 0
        %2631 = vmatprep.subr.bf16.mxu0 0
        %2632 = vmatpush1.bf16.msra.mxu0 0
        %2633 = vmatprep.subr.bf16.mxu0 0
        %2634 = vmatpush1.bf16.msra.mxu0 0
        %2635 = vmatprep.subr.bf16.mxu0 0
        %2636 = vmatpush1.bf16.msra.mxu0 0
        %2637 = vmatprep.subr.bf16.mxu0 0
        %2638 = vmatpush1.bf16.msra.mxu0 0
        %2639 = vmatprep.subr.bf16.mxu0 0
        %2640 = vmatpush1.bf16.msra.mxu0 0
        %2641 = vmatprep.subr.bf16.mxu0 0
        %2642 = vmatpush1.bf16.msra.mxu0 0
        %2643 = vmatprep.subr.bf16.mxu0 0
        %2644 = vmatpush1.bf16.msra.mxu0 0
        %2645 = vmatprep.subr.bf16.mxu0 0
        %2646 = vmatpush1.bf16.msra.mxu0 0
        %2647 = vmatprep.subr.bf16.mxu0 0
        %2648 = vmatpush1.bf16.msra.mxu0 0
        %2649 = vmatprep.subr.bf16.mxu0 0
        %2650 = vmatpush1.bf16.msra.mxu0 0
        %2651 = vmatprep.subr.bf16.mxu0 0
        %2652 = vmatpush1.bf16.msra.mxu0 0
        %2653 = vmatprep.subr.bf16.mxu0 0
        %2654 = vmatpush1.bf16.msra.mxu0 0
        %2655 = vmatprep.mubr.bf16.mxu0 0
        %2656 = vmatmul.mubr.bf16.gmra.mrb[0].mxu0 %v2618
        %v2657 = vpop.f32.mrb[0].mxu0
        %v2658 = vadd.f32 0.0, %v2657
        %v2659 = vpop.f32.mrb[0].mxu0
        %v2660 = vpop.f32.mrb[0].mxu0
        %v2661 = vadd.f32 0.0, %v2660
        %v2662 = vpop.f32.mrb[0].mxu0
        %2663 = vdwg.mxu0
        %v2664 = vadd.f32 %v2603, %v2658
        %v2665 = vadd.f32 %v2606, %v2661
        %v2666 = vld [vmem:[%s2286] sm:$0xf]
        %v2667 = vld [vmem:[%s2286 + $0x4] sm:$0xf]
        %v2668 = vld [vmem:[%s377] sm:$0x3]
        %v2671 = vunpack.c.l.b16 %v2666
        %v2672 = vunpack.c.l.b16 %v2667
        %v2673 = vpack.c.b16 %v2672, %v2671
        %v2675 = vsel %vm217, %v2673, 0
        %v2678 = vsel %vm221, %v2668, 0
        %2680 = vmatprep.subr.bf16.mxu0 0
        %2681 = vmatpush1.bf16.msra.mxu0 %v2678
        %2682 = vmatprep.subr.bf16.mxu0 0
        %2683 = vmatpush1.bf16.msra.mxu0 0
        %2684 = vmatprep.subr.bf16.mxu0 0
        %2685 = vmatpush1.bf16.msra.mxu0 0
        %2686 = vmatprep.subr.bf16.mxu0 0
        %2687 = vmatpush1.bf16.msra.mxu0 0
        %2688 = vmatprep.subr.bf16.mxu0 0
        %2689 = vmatpush1.bf16.msra.mxu0 0
        %2690 = vmatprep.subr.bf16.mxu0 0
        %2691 = vmatpush1.bf16.msra.mxu0 0
        %2692 = vmatprep.subr.bf16.mxu0 0
        %2693 = vmatpush1.bf16.msra.mxu0 0
        %2694 = vmatprep.subr.bf16.mxu0 0
        %2695 = vmatpush1.bf16.msra.mxu0 0
        %2696 = vmatprep.subr.bf16.mxu0 0
        %2697 = vmatpush1.bf16.msra.mxu0 0
        %2698 = vmatprep.subr.bf16.mxu0 0
        %2699 = vmatpush1.bf16.msra.mxu0 0
        %2700 = vmatprep.subr.bf16.mxu0 0
        %2701 = vmatpush1.bf16.msra.mxu0 0
        %2702 = vmatprep.subr.bf16.mxu0 0
        %2703 = vmatpush1.bf16.msra.mxu0 0
        %2704 = vmatprep.subr.bf16.mxu0 0
        %2705 = vmatpush1.bf16.msra.mxu0 0
        %2706 = vmatprep.subr.bf16.mxu0 0
        %2707 = vmatpush1.bf16.msra.mxu0 0
        %2708 = vmatprep.subr.bf16.mxu0 0
        %2709 = vmatpush1.bf16.msra.mxu0 0
        %2710 = vmatprep.subr.bf16.mxu0 0
        %2711 = vmatpush1.bf16.msra.mxu0 0
        %2712 = vmatprep.mubr.bf16.mxu0 0
        %2713 = vmatmul.mubr.bf16.gmra.mrb[0].mxu0 %v2675
        %v2714 = vpop.f32.mrb[0].mxu0
        %v2715 = vadd.f32 0.0, %v2714
        %v2716 = vpop.f32.mrb[0].mxu0
        %v2717 = vpop.f32.mrb[0].mxu0
        %v2718 = vadd.f32 0.0, %v2717
        %v2719 = vpop.f32.mrb[0].mxu0
        %2720 = vdwg.mxu0
        %v2721 = vadd.f32 %v2664, %v2715
        %v2722 = vadd.f32 %v2665, %v2718
        %v2723 = vld [vmem:[%s2286] sm:$0xf]
        %v2724 = vld [vmem:[%s2286 + $0x4] sm:$0xf]
        %v2725 = vld [vmem:[%s2286 + $0x8] sm:$0x1]
        %v2726 = vld [vmem:[%s436] sm:$0x3]
        %v2730 = vunpack.c.l.b16 %v2723
        %v2731 = vunpack.c.l.b16 %v2724
        %v2732 = vunpack.c.l.b16 %v2725
        %v2733 = vpack.c.b16 %v2731, %v2730
        %v2734 = vpack.c.b16 %v2732, %v2732
        %v2736 = vshrl.u32 %v2733, 16
        %v2738 = vshll.u32 %v2733, 16
        %v2740 = vrot.slane %v2738, 1
        %v2741 = vor.u32 %v2736, %v2740
        %v2743 = vshll.u32 %v2734, 16
        %v2745 = vrot.slane %v2743, 1
        %v2746 = vsel %vm204, %v2741, %v2745
        %v2748 = vsel %vm217, %v2746, 0
        %v2751 = vsel %vm221, %v2726, 0
        %2753 = vmatprep.subr.bf16.mxu0 0
        %2754 = vmatpush1.bf16.msra.mxu0 %v2751
        %2755 = vmatprep.subr.bf16.mxu0 0
        %2756 = vmatpush1.bf16.msra.mxu0 0
        %2757 = vmatprep.subr.bf16.mxu0 0
        %2758 = vmatpush1.bf16.msra.mxu0 0
        %2759 = vmatprep.subr.bf16.mxu0 0
        %2760 = vmatpush1.bf16.msra.mxu0 0
        %2761 = vmatprep.subr.bf16.mxu0 0
        %2762 = vmatpush1.bf16.msra.mxu0 0
        %2763 = vmatprep.subr.bf16.mxu0 0
        %2764 = vmatpush1.bf16.msra.mxu0 0
        %2765 = vmatprep.subr.bf16.mxu0 0
        %2766 = vmatpush1.bf16.msra.mxu0 0
        %2767 = vmatprep.subr.bf16.mxu0 0
        %2768 = vmatpush1.bf16.msra.mxu0 0
        %2769 = vmatprep.subr.bf16.mxu0 0
        %2770 = vmatpush1.bf16.msra.mxu0 0
        %2771 = vmatprep.subr.bf16.mxu0 0
        %2772 = vmatpush1.bf16.msra.mxu0 0
        %2773 = vmatprep.subr.bf16.mxu0 0
        %2774 = vmatpush1.bf16.msra.mxu0 0
        %2775 = vmatprep.subr.bf16.mxu0 0
        %2776 = vmatpush1.bf16.msra.mxu0 0
        %2777 = vmatprep.subr.bf16.mxu0 0
        %2778 = vmatpush1.bf16.msra.mxu0 0
        %2779 = vmatprep.subr.bf16.mxu0 0
        %2780 = vmatpush1.bf16.msra.mxu0 0
        %2781 = vmatprep.subr.bf16.mxu0 0
        %2782 = vmatpush1.bf16.msra.mxu0 0
        %2783 = vmatprep.subr.bf16.mxu0 0
        %2784 = vmatpush1.bf16.msra.mxu0 0
        %2785 = vmatprep.mubr.bf16.mxu0 0
        %2786 = vmatmul.mubr.bf16.gmra.mrb[0].mxu0 %v2748
        %v2787 = vpop.f32.mrb[0].mxu0
        %v2788 = vadd.f32 0.0, %v2787
        %v2789 = vpop.f32.mrb[0].mxu0
        %v2790 = vpop.f32.mrb[0].mxu0
        %v2791 = vadd.f32 0.0, %v2790
        %v2792 = vpop.f32.mrb[0].mxu0
        %2793 = vdwg.mxu0
        %v2794 = vadd.f32 %v2721, %v2788
        %v2795 = vadd.f32 %v2722, %v2791
        %v2796 = vld [vmem:[%s2286] sm:$0xe]
        %v2797 = vld [vmem:[%s508] sm:$0x3]
        %v2799 = vunpack.c.l.b16 %v2796
        %v2800 = vpack.c.b16 %v2731, %v2799
        %v2801 = vrot.slane %v2800, 1
        %v2802 = vrot.slane %v2734, 1
        %v2803 = vsel %vm318, %v2801, %v2802
        %v2805 = vsel %vm217, %v2803, 0
        %v2808 = vsel %vm221, %v2797, 0
        %2810 = vmatprep.subr.bf16.mxu0 0
        %2811 = vmatpush1.bf16.msra.mxu0 %v2808
        %2812 = vmatprep.subr.bf16.mxu0 0
        %2813 = vmatpush1.bf16.msra.mxu0 0
        %2814 = vmatprep.subr.bf16.mxu0 0
        %2815 = vmatpush1.bf16.msra.mxu0 0
        %2816 = vmatprep.subr.bf16.mxu0 0
        %2817 = vmatpush1.bf16.msra.mxu0 0
        %2818 = vmatprep.subr.bf16.mxu0 0
        %2819 = vmatpush1.bf16.msra.mxu0 0
        %2820 = vmatprep.subr.bf16.mxu0 0
        %2821 = vmatpush1.bf16.msra.mxu0 0
        %2822 = vmatprep.subr.bf16.mxu0 0
        %2823 = vmatpush1.bf16.msra.mxu0 0
        %2824 = vmatprep.subr.bf16.mxu0 0
        %2825 = vmatpush1.bf16.msra.mxu0 0
        %2826 = vmatprep.subr.bf16.mxu0 0
        %2827 = vmatpush1.bf16.msra.mxu0 0
        %2828 = vmatprep.subr.bf16.mxu0 0
        %2829 = vmatpush1.bf16.msra.mxu0 0
        %2830 = vmatprep.subr.bf16.mxu0 0
        %2831 = vmatpush1.bf16.msra.mxu0 0
        %2832 = vmatprep.subr.bf16.mxu0 0
        %2833 = vmatpush1.bf16.msra.mxu0 0
        %2834 = vmatprep.subr.bf16.mxu0 0
        %2835 = vmatpush1.bf16.msra.mxu0 0
        %2836 = vmatprep.subr.bf16.mxu0 0
        %2837 = vmatpush1.bf16.msra.mxu0 0
        %2838 = vmatprep.subr.bf16.mxu0 0
        %2839 = vmatpush1.bf16.msra.mxu0 0
        %2840 = vmatprep.subr.bf16.mxu0 0
        %2841 = vmatpush1.bf16.msra.mxu0 0
        %2842 = vmatprep.mubr.bf16.mxu0 0
        %2843 = vmatmul.mubr.bf16.gmra.mrb[0].mxu0 %v2805
        %v2844 = vpop.f32.mrb[0].mxu0
        %v2845 = vadd.f32 0.0, %v2844
        %v2846 = vpop.f32.mrb[0].mxu0
        %v2847 = vpop.f32.mrb[0].mxu0
        %v2848 = vadd.f32 0.0, %v2847
        %v2849 = vpop.f32.mrb[0].mxu0
        %2850 = vdwg.mxu0
        %v2851 = vadd.f32 %v2794, %v2845
        %v2852 = vadd.f32 %v2795, %v2848
        %s2853 = sadd.s32 %s186, 6
        %s2854 = smul.u32 %s2853, 3
        %s2855 = smul.addr %s2854, 4
        %s2856 = scalar_lea.vmem %s182, %s2855
        %v2857 = vld [vmem:[%s2856] sm:$0xf]
        %v2858 = vld [vmem:[%s2856 + $0x4] sm:$0xf]
        %v2859 = vld [vmem:[%s571] sm:$0x3]
        %v2862 = vunpack.c.l.b16 %v2857
        %v2863 = vunpack.c.l.b16 %v2858
        %v2864 = vpack.c.b16 %v2863, %v2862
        %v2866 = vsel %vm217, %v2864, 0
        %v2869 = vsel %vm221, %v2859, 0
        %2871 = vmatprep.subr.bf16.mxu0 0
        %2872 = vmatpush1.bf16.msra.mxu0 %v2869
        %2873 = vmatprep.subr.bf16.mxu0 0
        %2874 = vmatpush1.bf16.msra.mxu0 0
        %2875 = vmatprep.subr.bf16.mxu0 0
        %2876 = vmatpush1.bf16.msra.mxu0 0
        %2877 = vmatprep.subr.bf16.mxu0 0
        %2878 = vmatpush1.bf16.msra.mxu0 0
        %2879 = vmatprep.subr.bf16.mxu0 0
        %2880 = vmatpush1.bf16.msra.mxu0 0
        %2881 = vmatprep.subr.bf16.mxu0 0
        %2882 = vmatpush1.bf16.msra.mxu0 0
        %2883 = vmatprep.subr.bf16.mxu0 0
        %2884 = vmatpush1.bf16.msra.mxu0 0
        %2885 = vmatprep.subr.bf16.mxu0 0
        %2886 = vmatpush1.bf16.msra.mxu0 0
        %2887 = vmatprep.subr.bf16.mxu0 0
        %2888 = vmatpush1.bf16.msra.mxu0 0
        %2889 = vmatprep.subr.bf16.mxu0 0
        %2890 = vmatpush1.bf16.msra.mxu0 0
        %2891 = vmatprep.subr.bf16.mxu0 0
        %2892 = vmatpush1.bf16.msra.mxu0 0
        %2893 = vmatprep.subr.bf16.mxu0 0
        %2894 = vmatpush1.bf16.msra.mxu0 0
        %2895 = vmatprep.subr.bf16.mxu0 0
        %2896 = vmatpush1.bf16.msra.mxu0 0
        %2897 = vmatprep.subr.bf16.mxu0 0
        %2898 = vmatpush1.bf16.msra.mxu0 0
        %2899 = vmatprep.subr.bf16.mxu0 0
        %2900 = vmatpush1.bf16.msra.mxu0 0
        %2901 = vmatprep.subr.bf16.mxu0 0
        %2902 = vmatpush1.bf16.msra.mxu0 0
        %2903 = vmatprep.mubr.bf16.mxu0 0
        %2904 = vmatmul.mubr.bf16.gmra.mrb[0].mxu0 %v2866
        %v2905 = vpop.f32.mrb[0].mxu0
        %v2906 = vadd.f32 0.0, %v2905
        %v2907 = vpop.f32.mrb[0].mxu0
        %v2908 = vpop.f32.mrb[0].mxu0
        %v2909 = vadd.f32 0.0, %v2908
        %v2910 = vpop.f32.mrb[0].mxu0
        %2911 = vdwg.mxu0
        %v2912 = vadd.f32 %v2851, %v2906
        %v2913 = vadd.f32 %v2852, %v2909
        %v2914 = vld [vmem:[%s2856] sm:$0xf]
        %v2915 = vld [vmem:[%s2856 + $0x4] sm:$0xf]
        %v2916 = vld [vmem:[%s2856 + $0x8] sm:$0x1]
        %v2917 = vld [vmem:[%s630] sm:$0x3]
        %v2921 = vunpack.c.l.b16 %v2914
        %v2922 = vunpack.c.l.b16 %v2915
        %v2923 = vunpack.c.l.b16 %v2916
        %v2924 = vpack.c.b16 %v2922, %v2921
        %v2925 = vpack.c.b16 %v2923, %v2923
        %v2927 = vshrl.u32 %v2924, 16
        %v2929 = vshll.u32 %v2924, 16
        %v2931 = vrot.slane %v2929, 1
        %v2932 = vor.u32 %v2927, %v2931
        %v2934 = vshll.u32 %v2925, 16
        %v2936 = vrot.slane %v2934, 1
        %v2937 = vsel %vm204, %v2932, %v2936
        %v2939 = vsel %vm217, %v2937, 0
        %v2942 = vsel %vm221, %v2917, 0
        %2944 = vmatprep.subr.bf16.mxu0 0
        %2945 = vmatpush1.bf16.msra.mxu0 %v2942
        %2946 = vmatprep.subr.bf16.mxu0 0
        %2947 = vmatpush1.bf16.msra.mxu0 0
        %2948 = vmatprep.subr.bf16.mxu0 0
        %2949 = vmatpush1.bf16.msra.mxu0 0
        %2950 = vmatprep.subr.bf16.mxu0 0
        %2951 = vmatpush1.bf16.msra.mxu0 0
        %2952 = vmatprep.subr.bf16.mxu0 0
        %2953 = vmatpush1.bf16.msra.mxu0 0
        %2954 = vmatprep.subr.bf16.mxu0 0
        %2955 = vmatpush1.bf16.msra.mxu0 0
        %2956 = vmatprep.subr.bf16.mxu0 0
        %2957 = vmatpush1.bf16.msra.mxu0 0
        %2958 = vmatprep.subr.bf16.mxu0 0
        %2959 = vmatpush1.bf16.msra.mxu0 0
        %2960 = vmatprep.subr.bf16.mxu0 0
        %2961 = vmatpush1.bf16.msra.mxu0 0
        %2962 = vmatprep.subr.bf16.mxu0 0
        %2963 = vmatpush1.bf16.msra.mxu0 0
        %2964 = vmatprep.subr.bf16.mxu0 0
        %2965 = vmatpush1.bf16.msra.mxu0 0
        %2966 = vmatprep.subr.bf16.mxu0 0
        %2967 = vmatpush1.bf16.msra.mxu0 0
        %2968 = vmatprep.subr.bf16.mxu0 0
        %2969 = vmatpush1.bf16.msra.mxu0 0
        %2970 = vmatprep.subr.bf16.mxu0 0
        %2971 = vmatpush1.bf16.msra.mxu0 0
        %2972 = vmatprep.subr.bf16.mxu0 0
        %2973 = vmatpush1.bf16.msra.mxu0 0
        %2974 = vmatprep.subr.bf16.mxu0 0
        %2975 = vmatpush1.bf16.msra.mxu0 0
        %2976 = vmatprep.mubr.bf16.mxu0 0
        %2977 = vmatmul.mubr.bf16.gmra.mrb[0].mxu0 %v2939
        %v2978 = vpop.f32.mrb[0].mxu0
        %v2979 = vadd.f32 0.0, %v2978
        %v2980 = vpop.f32.mrb[0].mxu0
        %v2981 = vpop.f32.mrb[0].mxu0
        %v2982 = vadd.f32 0.0, %v2981
        %v2983 = vpop.f32.mrb[0].mxu0
        %2984 = vdwg.mxu0
        %v2985 = vadd.f32 %v2912, %v2979
        %v2986 = vadd.f32 %v2913, %v2982
        %v2987 = vld [vmem:[%s2856] sm:$0xe]
        %v2988 = vld [vmem:[%s702] sm:$0x3]
        %v2990 = vunpack.c.l.b16 %v2987
        %v2991 = vpack.c.b16 %v2922, %v2990
        %v2992 = vrot.slane %v2991, 1
        %v2993 = vrot.slane %v2925, 1
        %v2994 = vsel %vm318, %v2992, %v2993
        %v2996 = vsel %vm217, %v2994, 0
        %v2999 = vsel %vm221, %v2988, 0
        %3001 = vmatprep.subr.bf16.mxu0 0
        %3002 = vmatpush1.bf16.msra.mxu0 %v2999
        %3003 = vmatprep.subr.bf16.mxu0 0
        %3004 = vmatpush1.bf16.msra.mxu0 0
        %3005 = vmatprep.subr.bf16.mxu0 0
        %3006 = vmatpush1.bf16.msra.mxu0 0
        %3007 = vmatprep.subr.bf16.mxu0 0
        %3008 = vmatpush1.bf16.msra.mxu0 0
        %3009 = vmatprep.subr.bf16.mxu0 0
        %3010 = vmatpush1.bf16.msra.mxu0 0
        %3011 = vmatprep.subr.bf16.mxu0 0
        %3012 = vmatpush1.bf16.msra.mxu0 0
        %3013 = vmatprep.subr.bf16.mxu0 0
        %3014 = vmatpush1.bf16.msra.mxu0 0
        %3015 = vmatprep.subr.bf16.mxu0 0
        %3016 = vmatpush1.bf16.msra.mxu0 0
        %3017 = vmatprep.subr.bf16.mxu0 0
        %3018 = vmatpush1.bf16.msra.mxu0 0
        %3019 = vmatprep.subr.bf16.mxu0 0
        %3020 = vmatpush1.bf16.msra.mxu0 0
        %3021 = vmatprep.subr.bf16.mxu0 0
        %3022 = vmatpush1.bf16.msra.mxu0 0
        %3023 = vmatprep.subr.bf16.mxu0 0
        %3024 = vmatpush1.bf16.msra.mxu0 0
        %3025 = vmatprep.subr.bf16.mxu0 0
        %3026 = vmatpush1.bf16.msra.mxu0 0
        %3027 = vmatprep.subr.bf16.mxu0 0
        %3028 = vmatpush1.bf16.msra.mxu0 0
        %3029 = vmatprep.subr.bf16.mxu0 0
        %3030 = vmatpush1.bf16.msra.mxu0 0
        %3031 = vmatprep.subr.bf16.mxu0 0
        %3032 = vmatpush1.bf16.msra.mxu0 0
        %3033 = vmatprep.mubr.bf16.mxu0 0
        %3034 = vmatmul.mubr.bf16.gmra.mrb[0].mxu0 %v2996
        %v3035 = vpop.f32.mrb[0].mxu0
        %v3036 = vadd.f32 0.0, %v3035
        %v3037 = vpop.f32.mrb[0].mxu0
        %v3038 = vpop.f32.mrb[0].mxu0
        %v3039 = vadd.f32 0.0, %v3038
        %v3040 = vpop.f32.mrb[0].mxu0
        %3041 = vdwg.mxu0
        %v3042 = vadd.f32 %v2985, %v3036
        %v3043 = vadd.f32 %v2986, %v3039
        %v3044 = vadd.f32 %v3042, %v763
        %v3045 = vadd.f32 %v3043, %v763
        %v3046 = vmin.f32 %v3044, 0.0
        %v3047 = vmin.f32 %v3045, 0.0
        %v3048 = vmul.f32 %v3046, 1.442695
        %v3049 = vpow.pop %v3048
        %v3050 = vmul.f32 %v3047, 1.442695
        %v3051 = vpow.pop %v3050
        %v3052 = vsub.f32 %v3049, 1.0
        %v3053 = vsub.f32 %v3051, 1.0
        %vm3054 = vcmp.gt.f32.partialorder %v3044, 0.0
        %vm3055 = vcmp.gt.f32.partialorder %v3045, 0.0
        %v3056 = vsel %vm3054, %v3044, %v3052
        %v3057 = vsel %vm3055, %v3045, %v3053
        %s3058 = scalar_lea.vmem %s177, 64 [#allocation2]
        %3059 = vst [vmem:[%s3058] sm:$0xff] %v3056
        %3060 = vst [vmem:[%s3058 + $0x8] sm:$0xff] %v3057
        %v3061 = vld [vmem:[%s2286] sm:$0xf]
        %v3062 = vld [vmem:[%s2286 + $0x4] sm:$0xf]
        %v3063 = vld [vmem:[%s1] sm:$0x3]
        %v3064 = vld [vmem:[%s2286 + $0x8] sm:$0x1]
        %v3065 = vld [vmem:[%s194] sm:$0x3]
        %v3069 = vunpack.c.l.b16 %v3061
        %v3070 = vunpack.c.l.b16 %v3062
        %v3071 = vunpack.c.l.b16 %v3064
        %v3072 = vpack.c.b16 %v3070, %v3069
        %v3073 = vpack.c.b16 %v3071, %v3071
        %v3075 = vshrl.u32 %v3072, 16
        %v3077 = vshll.u32 %v3072, 16
        %v3079 = vrot.slane %v3077, 1
        %v3080 = vor.u32 %v3075, %v3079
        %v3082 = vshll.u32 %v3073, 16
        %v3084 = vrot.slane %v3082, 1
        %v3085 = vsel %vm204, %v3080, %v3084
        %v3087 = vsel %vm217, %v3085, 0
        %v3090 = vsel %vm221, %v3065, 0
        %3092 = vmatprep.subr.bf16.mxu0 0
        %3093 = vmatpush1.bf16.msra.mxu0 %v3090
        %3094 = vmatprep.subr.bf16.mxu0 0
        %3095 = vmatpush1.bf16.msra.mxu0 0
        %3096 = vmatprep.subr.bf16.mxu0 0
        %3097 = vmatpush1.bf16.msra.mxu0 0
        %3098 = vmatprep.subr.bf16.mxu0 0
        %3099 = vmatpush1.bf16.msra.mxu0 0
        %3100 = vmatprep.subr.bf16.mxu0 0
        %3101 = vmatpush1.bf16.msra.mxu0 0
        %3102 = vmatprep.subr.bf16.mxu0 0
        %3103 = vmatpush1.bf16.msra.mxu0 0
        %3104 = vmatprep.subr.bf16.mxu0 0
        %3105 = vmatpush1.bf16.msra.mxu0 0
        %3106 = vmatprep.subr.bf16.mxu0 0
        %3107 = vmatpush1.bf16.msra.mxu0 0
        %3108 = vmatprep.subr.bf16.mxu0 0
        %3109 = vmatpush1.bf16.msra.mxu0 0
        %3110 = vmatprep.subr.bf16.mxu0 0
        %3111 = vmatpush1.bf16.msra.mxu0 0
        %3112 = vmatprep.subr.bf16.mxu0 0
        %3113 = vmatpush1.bf16.msra.mxu0 0
        %3114 = vmatprep.subr.bf16.mxu0 0
        %3115 = vmatpush1.bf16.msra.mxu0 0
        %3116 = vmatprep.subr.bf16.mxu0 0
        %3117 = vmatpush1.bf16.msra.mxu0 0
        %3118 = vmatprep.subr.bf16.mxu0 0
        %3119 = vmatpush1.bf16.msra.mxu0 0
        %3120 = vmatprep.subr.bf16.mxu0 0
        %3121 = vmatpush1.bf16.msra.mxu0 0
        %3122 = vmatprep.subr.bf16.mxu0 0
        %3123 = vmatpush1.bf16.msra.mxu0 0
        %3124 = vmatprep.mubr.bf16.mxu0 0
        %3125 = vmatmul.mubr.bf16.gmra.mrb[0].mxu0 %v3087
        %v3126 = vpop.f32.mrb[0].mxu0
        %v3127 = vadd.f32 0.0, %v3126
        %v3128 = vpop.f32.mrb[0].mxu0
        %v3129 = vpop.f32.mrb[0].mxu0
        %v3130 = vadd.f32 0.0, %v3129
        %v3131 = vpop.f32.mrb[0].mxu0
        %3132 = vdwg.mxu0
        %v3133 = vsel %vm217, %v3072, 0
        %v3136 = vsel %vm221, %v3063, 0
        %3138 = vmatprep.subr.bf16.mxu0 0
        %3139 = vmatpush1.bf16.msra.mxu0 %v3136
        %3140 = vmatprep.subr.bf16.mxu0 0
        %3141 = vmatpush1.bf16.msra.mxu0 0
        %3142 = vmatprep.subr.bf16.mxu0 0
        %3143 = vmatpush1.bf16.msra.mxu0 0
        %3144 = vmatprep.subr.bf16.mxu0 0
        %3145 = vmatpush1.bf16.msra.mxu0 0
        %3146 = vmatprep.subr.bf16.mxu0 0
        %3147 = vmatpush1.bf16.msra.mxu0 0
        %3148 = vmatprep.subr.bf16.mxu0 0
        %3149 = vmatpush1.bf16.msra.mxu0 0
        %3150 = vmatprep.subr.bf16.mxu0 0
        %3151 = vmatpush1.bf16.msra.mxu0 0
        %3152 = vmatprep.subr.bf16.mxu0 0
        %3153 = vmatpush1.bf16.msra.mxu0 0
        %3154 = vmatprep.subr.bf16.mxu0 0
        %3155 = vmatpush1.bf16.msra.mxu0 0
        %3156 = vmatprep.subr.bf16.mxu0 0
        %3157 = vmatpush1.bf16.msra.mxu0 0
        %3158 = vmatprep.subr.bf16.mxu0 0
        %3159 = vmatpush1.bf16.msra.mxu0 0
        %3160 = vmatprep.subr.bf16.mxu0 0
        %3161 = vmatpush1.bf16.msra.mxu0 0
        %3162 = vmatprep.subr.bf16.mxu0 0
        %3163 = vmatpush1.bf16.msra.mxu0 0
        %3164 = vmatprep.subr.bf16.mxu0 0
        %3165 = vmatpush1.bf16.msra.mxu0 0
        %3166 = vmatprep.subr.bf16.mxu0 0
        %3167 = vmatpush1.bf16.msra.mxu0 0
        %3168 = vmatprep.subr.bf16.mxu0 0
        %3169 = vmatpush1.bf16.msra.mxu0 0
        %3170 = vmatprep.mubr.bf16.mxu0 0
        %3171 = vmatmul.mubr.bf16.gmra.mrb[0].mxu0 %v3133
        %v3172 = vpop.f32.mrb[0].mxu0
        %v3173 = vadd.f32 %v3127, %v3172
        %v3174 = vpop.f32.mrb[0].mxu0
        %v3175 = vpop.f32.mrb[0].mxu0
        %v3176 = vadd.f32 %v3130, %v3175
        %v3177 = vpop.f32.mrb[0].mxu0
        %3178 = vdwg.mxu0
        %v3179 = vld [vmem:[%s2286] sm:$0xe]
        %v3180 = vld [vmem:[%s313] sm:$0x3]
        %v3182 = vunpack.c.l.b16 %v3179
        %v3183 = vpack.c.b16 %v3070, %v3182
        %v3184 = vrot.slane %v3183, 1
        %v3185 = vrot.slane %v3073, 1
        %v3186 = vsel %vm318, %v3184, %v3185
        %v3188 = vsel %vm217, %v3186, 0
        %v3191 = vsel %vm221, %v3180, 0
        %3193 = vmatprep.subr.bf16.mxu0 0
        %3194 = vmatpush1.bf16.msra.mxu0 %v3191
        %3195 = vmatprep.subr.bf16.mxu0 0
        %3196 = vmatpush1.bf16.msra.mxu0 0
        %3197 = vmatprep.subr.bf16.mxu0 0
        %3198 = vmatpush1.bf16.msra.mxu0 0
        %3199 = vmatprep.subr.bf16.mxu0 0
        %3200 = vmatpush1.bf16.msra.mxu0 0
        %3201 = vmatprep.subr.bf16.mxu0 0
        %3202 = vmatpush1.bf16.msra.mxu0 0
        %3203 = vmatprep.subr.bf16.mxu0 0
        %3204 = vmatpush1.bf16.msra.mxu0 0
        %3205 = vmatprep.subr.bf16.mxu0 0
        %3206 = vmatpush1.bf16.msra.mxu0 0
        %3207 = vmatprep.subr.bf16.mxu0 0
        %3208 = vmatpush1.bf16.msra.mxu0 0
        %3209 = vmatprep.subr.bf16.mxu0 0
        %3210 = vmatpush1.bf16.msra.mxu0 0
        %3211 = vmatprep.subr.bf16.mxu0 0
        %3212 = vmatpush1.bf16.msra.mxu0 0
        %3213 = vmatprep.subr.bf16.mxu0 0
        %3214 = vmatpush1.bf16.msra.mxu0 0
        %3215 = vmatprep.subr.bf16.mxu0 0
        %3216 = vmatpush1.bf16.msra.mxu0 0
        %3217 = vmatprep.subr.bf16.mxu0 0
        %3218 = vmatpush1.bf16.msra.mxu0 0
        %3219 = vmatprep.subr.bf16.mxu0 0
        %3220 = vmatpush1.bf16.msra.mxu0 0
        %3221 = vmatprep.subr.bf16.mxu0 0
        %3222 = vmatpush1.bf16.msra.mxu0 0
        %3223 = vmatprep.subr.bf16.mxu0 0
        %3224 = vmatpush1.bf16.msra.mxu0 0
        %3225 = vmatprep.mubr.bf16.mxu0 0
        %3226 = vmatmul.mubr.bf16.gmra.mrb[0].mxu0 %v3188
        %v3227 = vpop.f32.mrb[0].mxu0
        %v3228 = vadd.f32 0.0, %v3227
        %v3229 = vpop.f32.mrb[0].mxu0
        %v3230 = vpop.f32.mrb[0].mxu0
        %v3231 = vadd.f32 0.0, %v3230
        %v3232 = vpop.f32.mrb[0].mxu0
        %3233 = vdwg.mxu0
        %v3234 = vadd.f32 %v3173, %v3228
        %v3235 = vadd.f32 %v3176, %v3231
        %v3236 = vld [vmem:[%s2856] sm:$0xf]
        %v3237 = vld [vmem:[%s2856 + $0x4] sm:$0xf]
        %v3238 = vld [vmem:[%s377] sm:$0x3]
        %v3241 = vunpack.c.l.b16 %v3236
        %v3242 = vunpack.c.l.b16 %v3237
        %v3243 = vpack.c.b16 %v3242, %v3241
        %v3245 = vsel %vm217, %v3243, 0
        %v3248 = vsel %vm221, %v3238, 0
        %3250 = vmatprep.subr.bf16.mxu0 0
        %3251 = vmatpush1.bf16.msra.mxu0 %v3248
        %3252 = vmatprep.subr.bf16.mxu0 0
        %3253 = vmatpush1.bf16.msra.mxu0 0
        %3254 = vmatprep.subr.bf16.mxu0 0
        %3255 = vmatpush1.bf16.msra.mxu0 0
        %3256 = vmatprep.subr.bf16.mxu0 0
        %3257 = vmatpush1.bf16.msra.mxu0 0
        %3258 = vmatprep.subr.bf16.mxu0 0
        %3259 = vmatpush1.bf16.msra.mxu0 0
        %3260 = vmatprep.subr.bf16.mxu0 0
        %3261 = vmatpush1.bf16.msra.mxu0 0
        %3262 = vmatprep.subr.bf16.mxu0 0
        %3263 = vmatpush1.bf16.msra.mxu0 0
        %3264 = vmatprep.subr.bf16.mxu0 0
        %3265 = vmatpush1.bf16.msra.mxu0 0
        %3266 = vmatprep.subr.bf16.mxu0 0
        %3267 = vmatpush1.bf16.msra.mxu0 0
        %3268 = vmatprep.subr.bf16.mxu0 0
        %3269 = vmatpush1.bf16.msra.mxu0 0
        %3270 = vmatprep.subr.bf16.mxu0 0
        %3271 = vmatpush1.bf16.msra.mxu0 0
        %3272 = vmatprep.subr.bf16.mxu0 0
        %3273 = vmatpush1.bf16.msra.mxu0 0
        %3274 = vmatprep.subr.bf16.mxu0 0
        %3275 = vmatpush1.bf16.msra.mxu0 0
        %3276 = vmatprep.subr.bf16.mxu0 0
        %3277 = vmatpush1.bf16.msra.mxu0 0
        %3278 = vmatprep.subr.bf16.mxu0 0
        %3279 = vmatpush1.bf16.msra.mxu0 0
        %3280 = vmatprep.subr.bf16.mxu0 0
        %3281 = vmatpush1.bf16.msra.mxu0 0
        %3282 = vmatprep.mubr.bf16.mxu0 0
        %3283 = vmatmul.mubr.bf16.gmra.mrb[0].mxu0 %v3245
        %v3284 = vpop.f32.mrb[0].mxu0
        %v3285 = vadd.f32 0.0, %v3284
        %v3286 = vpop.f32.mrb[0].mxu0
        %v3287 = vpop.f32.mrb[0].mxu0
        %v3288 = vadd.f32 0.0, %v3287
        %v3289 = vpop.f32.mrb[0].mxu0
        %3290 = vdwg.mxu0
        %v3291 = vadd.f32 %v3234, %v3285
        %v3292 = vadd.f32 %v3235, %v3288
        %v3293 = vld [vmem:[%s2856] sm:$0xf]
        %v3294 = vld [vmem:[%s2856 + $0x4] sm:$0xf]
        %v3295 = vld [vmem:[%s2856 + $0x8] sm:$0x1]
        %v3296 = vld [vmem:[%s436] sm:$0x3]
        %v3300 = vunpack.c.l.b16 %v3293
        %v3301 = vunpack.c.l.b16 %v3294
        %v3302 = vunpack.c.l.b16 %v3295
        %v3303 = vpack.c.b16 %v3301, %v3300
        %v3304 = vpack.c.b16 %v3302, %v3302
        %v3306 = vshrl.u32 %v3303, 16
        %v3308 = vshll.u32 %v3303, 16
        %v3310 = vrot.slane %v3308, 1
        %v3311 = vor.u32 %v3306, %v3310
        %v3313 = vshll.u32 %v3304, 16
        %v3315 = vrot.slane %v3313, 1
        %v3316 = vsel %vm204, %v3311, %v3315
        %v3318 = vsel %vm217, %v3316, 0
        %v3321 = vsel %vm221, %v3296, 0
        %3323 = vmatprep.subr.bf16.mxu0 0
        %3324 = vmatpush1.bf16.msra.mxu0 %v3321
        %3325 = vmatprep.subr.bf16.mxu0 0
        %3326 = vmatpush1.bf16.msra.mxu0 0
        %3327 = vmatprep.subr.bf16.mxu0 0
        %3328 = vmatpush1.bf16.msra.mxu0 0
        %3329 = vmatprep.subr.bf16.mxu0 0
        %3330 = vmatpush1.bf16.msra.mxu0 0
        %3331 = vmatprep.subr.bf16.mxu0 0
        %3332 = vmatpush1.bf16.msra.mxu0 0
        %3333 = vmatprep.subr.bf16.mxu0 0
        %3334 = vmatpush1.bf16.msra.mxu0 0
        %3335 = vmatprep.subr.bf16.mxu0 0
        %3336 = vmatpush1.bf16.msra.mxu0 0
        %3337 = vmatprep.subr.bf16.mxu0 0
        %3338 = vmatpush1.bf16.msra.mxu0 0
        %3339 = vmatprep.subr.bf16.mxu0 0
        %3340 = vmatpush1.bf16.msra.mxu0 0
        %3341 = vmatprep.subr.bf16.mxu0 0
        %3342 = vmatpush1.bf16.msra.mxu0 0
        %3343 = vmatprep.subr.bf16.mxu0 0
        %3344 = vmatpush1.bf16.msra.mxu0 0
        %3345 = vmatprep.subr.bf16.mxu0 0
        %3346 = vmatpush1.bf16.msra.mxu0 0
        %3347 = vmatprep.subr.bf16.mxu0 0
        %3348 = vmatpush1.bf16.msra.mxu0 0
        %3349 = vmatprep.subr.bf16.mxu0 0
        %3350 = vmatpush1.bf16.msra.mxu0 0
        %3351 = vmatprep.subr.bf16.mxu0 0
        %3352 = vmatpush1.bf16.msra.mxu0 0
        %3353 = vmatprep.subr.bf16.mxu0 0
        %3354 = vmatpush1.bf16.msra.mxu0 0
        %3355 = vmatprep.mubr.bf16.mxu0 0
        %3356 = vmatmul.mubr.bf16.gmra.mrb[0].mxu0 %v3318
        %v3357 = vpop.f32.mrb[0].mxu0
        %v3358 = vadd.f32 0.0, %v3357
        %v3359 = vpop.f32.mrb[0].mxu0
        %v3360 = vpop.f32.mrb[0].mxu0
        %v3361 = vadd.f32 0.0, %v3360
        %v3362 = vpop.f32.mrb[0].mxu0
        %3363 = vdwg.mxu0
        %v3364 = vadd.f32 %v3291, %v3358
        %v3365 = vadd.f32 %v3292, %v3361
        %v3366 = vld [vmem:[%s2856] sm:$0xe]
        %v3367 = vld [vmem:[%s508] sm:$0x3]
        %v3369 = vunpack.c.l.b16 %v3366
        %v3370 = vpack.c.b16 %v3301, %v3369
        %v3371 = vrot.slane %v3370, 1
        %v3372 = vrot.slane %v3304, 1
        %v3373 = vsel %vm318, %v3371, %v3372
        %v3375 = vsel %vm217, %v3373, 0
        %v3378 = vsel %vm221, %v3367, 0
        %3380 = vmatprep.subr.bf16.mxu0 0
        %3381 = vmatpush1.bf16.msra.mxu0 %v3378
        %3382 = vmatprep.subr.bf16.mxu0 0
        %3383 = vmatpush1.bf16.msra.mxu0 0
        %3384 = vmatprep.subr.bf16.mxu0 0
        %3385 = vmatpush1.bf16.msra.mxu0 0
        %3386 = vmatprep.subr.bf16.mxu0 0
        %3387 = vmatpush1.bf16.msra.mxu0 0
        %3388 = vmatprep.subr.bf16.mxu0 0
        %3389 = vmatpush1.bf16.msra.mxu0 0
        %3390 = vmatprep.subr.bf16.mxu0 0
        %3391 = vmatpush1.bf16.msra.mxu0 0
        %3392 = vmatprep.subr.bf16.mxu0 0
        %3393 = vmatpush1.bf16.msra.mxu0 0
        %3394 = vmatprep.subr.bf16.mxu0 0
        %3395 = vmatpush1.bf16.msra.mxu0 0
        %3396 = vmatprep.subr.bf16.mxu0 0
        %3397 = vmatpush1.bf16.msra.mxu0 0
        %3398 = vmatprep.subr.bf16.mxu0 0
        %3399 = vmatpush1.bf16.msra.mxu0 0
        %3400 = vmatprep.subr.bf16.mxu0 0
        %3401 = vmatpush1.bf16.msra.mxu0 0
        %3402 = vmatprep.subr.bf16.mxu0 0
        %3403 = vmatpush1.bf16.msra.mxu0 0
        %3404 = vmatprep.subr.bf16.mxu0 0
        %3405 = vmatpush1.bf16.msra.mxu0 0
        %3406 = vmatprep.subr.bf16.mxu0 0
        %3407 = vmatpush1.bf16.msra.mxu0 0
        %3408 = vmatprep.subr.bf16.mxu0 0
        %3409 = vmatpush1.bf16.msra.mxu0 0
        %3410 = vmatprep.subr.bf16.mxu0 0
        %3411 = vmatpush1.bf16.msra.mxu0 0
        %3412 = vmatprep.mubr.bf16.mxu0 0
        %3413 = vmatmul.mubr.bf16.gmra.mrb[0].mxu0 %v3375
        %v3414 = vpop.f32.mrb[0].mxu0
        %v3415 = vadd.f32 0.0, %v3414
        %v3416 = vpop.f32.mrb[0].mxu0
        %v3417 = vpop.f32.mrb[0].mxu0
        %v3418 = vadd.f32 0.0, %v3417
        %v3419 = vpop.f32.mrb[0].mxu0
        %3420 = vdwg.mxu0
        %v3421 = vadd.f32 %v3364, %v3415
        %v3422 = vadd.f32 %v3365, %v3418
        %s3423 = sadd.s32 %s186, 7
        %s3424 = smul.u32 %s3423, 3
        %s3425 = smul.addr %s3424, 4
        %s3426 = scalar_lea.vmem %s182, %s3425
        %v3427 = vld [vmem:[%s3426] sm:$0xf]
        %v3428 = vld [vmem:[%s3426 + $0x4] sm:$0xf]
        %v3429 = vld [vmem:[%s571] sm:$0x3]
        %v3432 = vunpack.c.l.b16 %v3427
        %v3433 = vunpack.c.l.b16 %v3428
        %v3434 = vpack.c.b16 %v3433, %v3432
        %v3436 = vsel %vm217, %v3434, 0
        %v3439 = vsel %vm221, %v3429, 0
        %3441 = vmatprep.subr.bf16.mxu0 0
        %3442 = vmatpush1.bf16.msra.mxu0 %v3439
        %3443 = vmatprep.subr.bf16.mxu0 0
        %3444 = vmatpush1.bf16.msra.mxu0 0
        %3445 = vmatprep.subr.bf16.mxu0 0
        %3446 = vmatpush1.bf16.msra.mxu0 0
        %3447 = vmatprep.subr.bf16.mxu0 0
        %3448 = vmatpush1.bf16.msra.mxu0 0
        %3449 = vmatprep.subr.bf16.mxu0 0
        %3450 = vmatpush1.bf16.msra.mxu0 0
        %3451 = vmatprep.subr.bf16.mxu0 0
        %3452 = vmatpush1.bf16.msra.mxu0 0
        %3453 = vmatprep.subr.bf16.mxu0 0
        %3454 = vmatpush1.bf16.msra.mxu0 0
        %3455 = vmatprep.subr.bf16.mxu0 0
        %3456 = vmatpush1.bf16.msra.mxu0 0
        %3457 = vmatprep.subr.bf16.mxu0 0
        %3458 = vmatpush1.bf16.msra.mxu0 0
        %3459 = vmatprep.subr.bf16.mxu0 0
        %3460 = vmatpush1.bf16.msra.mxu0 0
        %3461 = vmatprep.subr.bf16.mxu0 0
        %3462 = vmatpush1.bf16.msra.mxu0 0
        %3463 = vmatprep.subr.bf16.mxu0 0
        %3464 = vmatpush1.bf16.msra.mxu0 0
        %3465 = vmatprep.subr.bf16.mxu0 0
        %3466 = vmatpush1.bf16.msra.mxu0 0
        %3467 = vmatprep.subr.bf16.mxu0 0
        %3468 = vmatpush1.bf16.msra.mxu0 0
        %3469 = vmatprep.subr.bf16.mxu0 0
        %3470 = vmatpush1.bf16.msra.mxu0 0
        %3471 = vmatprep.subr.bf16.mxu0 0
        %3472 = vmatpush1.bf16.msra.mxu0 0
        %3473 = vmatprep.mubr.bf16.mxu0 0
        %3474 = vmatmul.mubr.bf16.gmra.mrb[0].mxu0 %v3436
        %v3475 = vpop.f32.mrb[0].mxu0
        %v3476 = vadd.f32 0.0, %v3475
        %v3477 = vpop.f32.mrb[0].mxu0
        %v3478 = vpop.f32.mrb[0].mxu0
        %v3479 = vadd.f32 0.0, %v3478
        %v3480 = vpop.f32.mrb[0].mxu0
        %3481 = vdwg.mxu0
        %v3482 = vadd.f32 %v3421, %v3476
        %v3483 = vadd.f32 %v3422, %v3479
        %v3484 = vld [vmem:[%s3426] sm:$0xf]
        %v3485 = vld [vmem:[%s3426 + $0x4] sm:$0xf]
        %v3486 = vld [vmem:[%s3426 + $0x8] sm:$0x1]
        %v3487 = vld [vmem:[%s630] sm:$0x3]
        %v3491 = vunpack.c.l.b16 %v3484
        %v3492 = vunpack.c.l.b16 %v3485
        %v3493 = vunpack.c.l.b16 %v3486
        %v3494 = vpack.c.b16 %v3492, %v3491
        %v3495 = vpack.c.b16 %v3493, %v3493
        %v3497 = vshrl.u32 %v3494, 16
        %v3499 = vshll.u32 %v3494, 16
        %v3501 = vrot.slane %v3499, 1
        %v3502 = vor.u32 %v3497, %v3501
        %v3504 = vshll.u32 %v3495, 16
        %v3506 = vrot.slane %v3504, 1
        %v3507 = vsel %vm204, %v3502, %v3506
        %v3509 = vsel %vm217, %v3507, 0
        %v3512 = vsel %vm221, %v3487, 0
        %3514 = vmatprep.subr.bf16.mxu0 0
        %3515 = vmatpush1.bf16.msra.mxu0 %v3512
        %3516 = vmatprep.subr.bf16.mxu0 0
        %3517 = vmatpush1.bf16.msra.mxu0 0
        %3518 = vmatprep.subr.bf16.mxu0 0
        %3519 = vmatpush1.bf16.msra.mxu0 0
        %3520 = vmatprep.subr.bf16.mxu0 0
        %3521 = vmatpush1.bf16.msra.mxu0 0
        %3522 = vmatprep.subr.bf16.mxu0 0
        %3523 = vmatpush1.bf16.msra.mxu0 0
        %3524 = vmatprep.subr.bf16.mxu0 0
        %3525 = vmatpush1.bf16.msra.mxu0 0
        %3526 = vmatprep.subr.bf16.mxu0 0
        %3527 = vmatpush1.bf16.msra.mxu0 0
        %3528 = vmatprep.subr.bf16.mxu0 0
        %3529 = vmatpush1.bf16.msra.mxu0 0
        %3530 = vmatprep.subr.bf16.mxu0 0
        %3531 = vmatpush1.bf16.msra.mxu0 0
        %3532 = vmatprep.subr.bf16.mxu0 0
        %3533 = vmatpush1.bf16.msra.mxu0 0
        %3534 = vmatprep.subr.bf16.mxu0 0
        %3535 = vmatpush1.bf16.msra.mxu0 0
        %3536 = vmatprep.subr.bf16.mxu0 0
        %3537 = vmatpush1.bf16.msra.mxu0 0
        %3538 = vmatprep.subr.bf16.mxu0 0
        %3539 = vmatpush1.bf16.msra.mxu0 0
        %3540 = vmatprep.subr.bf16.mxu0 0
        %3541 = vmatpush1.bf16.msra.mxu0 0
        %3542 = vmatprep.subr.bf16.mxu0 0
        %3543 = vmatpush1.bf16.msra.mxu0 0
        %3544 = vmatprep.subr.bf16.mxu0 0
        %3545 = vmatpush1.bf16.msra.mxu0 0
        %3546 = vmatprep.mubr.bf16.mxu0 0
        %3547 = vmatmul.mubr.bf16.gmra.mrb[0].mxu0 %v3509
        %v3548 = vpop.f32.mrb[0].mxu0
        %v3549 = vadd.f32 0.0, %v3548
        %v3550 = vpop.f32.mrb[0].mxu0
        %v3551 = vpop.f32.mrb[0].mxu0
        %v3552 = vadd.f32 0.0, %v3551
        %v3553 = vpop.f32.mrb[0].mxu0
        %3554 = vdwg.mxu0
        %v3555 = vadd.f32 %v3482, %v3549
        %v3556 = vadd.f32 %v3483, %v3552
        %v3557 = vld [vmem:[%s3426] sm:$0xe]
        %v3558 = vld [vmem:[%s702] sm:$0x3]
        %v3560 = vunpack.c.l.b16 %v3557
        %v3561 = vpack.c.b16 %v3492, %v3560
        %v3562 = vrot.slane %v3561, 1
        %v3563 = vrot.slane %v3495, 1
        %v3564 = vsel %vm318, %v3562, %v3563
        %v3566 = vsel %vm217, %v3564, 0
        %v3569 = vsel %vm221, %v3558, 0
        %3571 = vmatprep.subr.bf16.mxu0 0
        %3572 = vmatpush1.bf16.msra.mxu0 %v3569
        %3573 = vmatprep.subr.bf16.mxu0 0
        %3574 = vmatpush1.bf16.msra.mxu0 0
        %3575 = vmatprep.subr.bf16.mxu0 0
        %3576 = vmatpush1.bf16.msra.mxu0 0
        %3577 = vmatprep.subr.bf16.mxu0 0
        %3578 = vmatpush1.bf16.msra.mxu0 0
        %3579 = vmatprep.subr.bf16.mxu0 0
        %3580 = vmatpush1.bf16.msra.mxu0 0
        %3581 = vmatprep.subr.bf16.mxu0 0
        %3582 = vmatpush1.bf16.msra.mxu0 0
        %3583 = vmatprep.subr.bf16.mxu0 0
        %3584 = vmatpush1.bf16.msra.mxu0 0
        %3585 = vmatprep.subr.bf16.mxu0 0
        %3586 = vmatpush1.bf16.msra.mxu0 0
        %3587 = vmatprep.subr.bf16.mxu0 0
        %3588 = vmatpush1.bf16.msra.mxu0 0
        %3589 = vmatprep.subr.bf16.mxu0 0
        %3590 = vmatpush1.bf16.msra.mxu0 0
        %3591 = vmatprep.subr.bf16.mxu0 0
        %3592 = vmatpush1.bf16.msra.mxu0 0
        %3593 = vmatprep.subr.bf16.mxu0 0
        %3594 = vmatpush1.bf16.msra.mxu0 0
        %3595 = vmatprep.subr.bf16.mxu0 0
        %3596 = vmatpush1.bf16.msra.mxu0 0
        %3597 = vmatprep.subr.bf16.mxu0 0
        %3598 = vmatpush1.bf16.msra.mxu0 0
        %3599 = vmatprep.subr.bf16.mxu0 0
        %3600 = vmatpush1.bf16.msra.mxu0 0
        %3601 = vmatprep.subr.bf16.mxu0 0
        %3602 = vmatpush1.bf16.msra.mxu0 0
        %3603 = vmatprep.mubr.bf16.mxu0 0
        %3604 = vmatmul.mubr.bf16.gmra.mrb[0].mxu0 %v3566
        %v3605 = vpop.f32.mrb[0].mxu0
        %v3606 = vadd.f32 0.0, %v3605
        %v3607 = vpop.f32.mrb[0].mxu0
        %v3608 = vpop.f32.mrb[0].mxu0
        %v3609 = vadd.f32 0.0, %v3608
        %v3610 = vpop.f32.mrb[0].mxu0
        %3611 = vdwg.mxu0
        %v3612 = vadd.f32 %v3555, %v3606
        %v3613 = vadd.f32 %v3556, %v3609
        %v3614 = vadd.f32 %v3612, %v763
        %v3615 = vadd.f32 %v3613, %v763
        %v3616 = vmin.f32 %v3614, 0.0
        %v3617 = vmin.f32 %v3615, 0.0
        %v3618 = vmul.f32 %v3616, 1.442695
        %v3619 = vpow.pop %v3618
        %v3620 = vmul.f32 %v3617, 1.442695
        %v3621 = vpow.pop %v3620
        %v3622 = vsub.f32 %v3619, 1.0
        %v3623 = vsub.f32 %v3621, 1.0
        %vm3624 = vcmp.gt.f32.partialorder %v3614, 0.0
        %vm3625 = vcmp.gt.f32.partialorder %v3615, 0.0
        %v3626 = vsel %vm3624, %v3614, %v3622
        %v3627 = vsel %vm3625, %v3615, %v3623
        %s3628 = scalar_lea.vmem %s177, 80 [#allocation2]
        %3629 = vst [vmem:[%s3628] sm:$0xff] %v3626
        %3630 = vst [vmem:[%s3628 + $0x8] sm:$0xff] %v3627
        %v3631 = vld [vmem:[%s2856] sm:$0xf]
        %v3632 = vld [vmem:[%s2856 + $0x4] sm:$0xf]
        %v3633 = vld [vmem:[%s1] sm:$0x3]
        %v3634 = vld [vmem:[%s2856 + $0x8] sm:$0x1]
        %v3635 = vld [vmem:[%s194] sm:$0x3]
        %v3639 = vunpack.c.l.b16 %v3631
        %v3640 = vunpack.c.l.b16 %v3632
        %v3641 = vunpack.c.l.b16 %v3634
        %v3642 = vpack.c.b16 %v3640, %v3639
        %v3643 = vpack.c.b16 %v3641, %v3641
        %v3645 = vshrl.u32 %v3642, 16
        %v3647 = vshll.u32 %v3642, 16
        %v3649 = vrot.slane %v3647, 1
        %v3650 = vor.u32 %v3645, %v3649
        %v3652 = vshll.u32 %v3643, 16
        %v3654 = vrot.slane %v3652, 1
        %v3655 = vsel %vm204, %v3650, %v3654
        %v3657 = vsel %vm217, %v3655, 0
        %v3660 = vsel %vm221, %v3635, 0
        %3662 = vmatprep.subr.bf16.mxu0 0
        %3663 = vmatpush1.bf16.msra.mxu0 %v3660
        %3664 = vmatprep.subr.bf16.mxu0 0
        %3665 = vmatpush1.bf16.msra.mxu0 0
        %3666 = vmatprep.subr.bf16.mxu0 0
        %3667 = vmatpush1.bf16.msra.mxu0 0
        %3668 = vmatprep.subr.bf16.mxu0 0
        %3669 = vmatpush1.bf16.msra.mxu0 0
        %3670 = vmatprep.subr.bf16.mxu0 0
        %3671 = vmatpush1.bf16.msra.mxu0 0
        %3672 = vmatprep.subr.bf16.mxu0 0
        %3673 = vmatpush1.bf16.msra.mxu0 0
        %3674 = vmatprep.subr.bf16.mxu0 0
        %3675 = vmatpush1.bf16.msra.mxu0 0
        %3676 = vmatprep.subr.bf16.mxu0 0
        %3677 = vmatpush1.bf16.msra.mxu0 0
        %3678 = vmatprep.subr.bf16.mxu0 0
        %3679 = vmatpush1.bf16.msra.mxu0 0
        %3680 = vmatprep.subr.bf16.mxu0 0
        %3681 = vmatpush1.bf16.msra.mxu0 0
        %3682 = vmatprep.subr.bf16.mxu0 0
        %3683 = vmatpush1.bf16.msra.mxu0 0
        %3684 = vmatprep.subr.bf16.mxu0 0
        %3685 = vmatpush1.bf16.msra.mxu0 0
        %3686 = vmatprep.subr.bf16.mxu0 0
        %3687 = vmatpush1.bf16.msra.mxu0 0
        %3688 = vmatprep.subr.bf16.mxu0 0
        %3689 = vmatpush1.bf16.msra.mxu0 0
        %3690 = vmatprep.subr.bf16.mxu0 0
        %3691 = vmatpush1.bf16.msra.mxu0 0
        %3692 = vmatprep.subr.bf16.mxu0 0
        %3693 = vmatpush1.bf16.msra.mxu0 0
        %3694 = vmatprep.mubr.bf16.mxu0 0
        %3695 = vmatmul.mubr.bf16.gmra.mrb[0].mxu0 %v3657
        %v3696 = vpop.f32.mrb[0].mxu0
        %v3697 = vadd.f32 0.0, %v3696
        %v3698 = vpop.f32.mrb[0].mxu0
        %v3699 = vpop.f32.mrb[0].mxu0
        %v3700 = vadd.f32 0.0, %v3699
        %v3701 = vpop.f32.mrb[0].mxu0
        %3702 = vdwg.mxu0
        %v3703 = vsel %vm217, %v3642, 0
        %v3706 = vsel %vm221, %v3633, 0
        %3708 = vmatprep.subr.bf16.mxu0 0
        %3709 = vmatpush1.bf16.msra.mxu0 %v3706
        %3710 = vmatprep.subr.bf16.mxu0 0
        %3711 = vmatpush1.bf16.msra.mxu0 0
        %3712 = vmatprep.subr.bf16.mxu0 0
        %3713 = vmatpush1.bf16.msra.mxu0 0
        %3714 = vmatprep.subr.bf16.mxu0 0
        %3715 = vmatpush1.bf16.msra.mxu0 0
        %3716 = vmatprep.subr.bf16.mxu0 0
        %3717 = vmatpush1.bf16.msra.mxu0 0
        %3718 = vmatprep.subr.bf16.mxu0 0
        %3719 = vmatpush1.bf16.msra.mxu0 0
        %3720 = vmatprep.subr.bf16.mxu0 0
        %3721 = vmatpush1.bf16.msra.mxu0 0
        %3722 = vmatprep.subr.bf16.mxu0 0
        %3723 = vmatpush1.bf16.msra.mxu0 0
        %3724 = vmatprep.subr.bf16.mxu0 0
        %3725 = vmatpush1.bf16.msra.mxu0 0
        %3726 = vmatprep.subr.bf16.mxu0 0
        %3727 = vmatpush1.bf16.msra.mxu0 0
        %3728 = vmatprep.subr.bf16.mxu0 0
        %3729 = vmatpush1.bf16.msra.mxu0 0
        %3730 = vmatprep.subr.bf16.mxu0 0
        %3731 = vmatpush1.bf16.msra.mxu0 0
        %3732 = vmatprep.subr.bf16.mxu0 0
        %3733 = vmatpush1.bf16.msra.mxu0 0
        %3734 = vmatprep.subr.bf16.mxu0 0
        %3735 = vmatpush1.bf16.msra.mxu0 0
        %3736 = vmatprep.subr.bf16.mxu0 0
        %3737 = vmatpush1.bf16.msra.mxu0 0
        %3738 = vmatprep.subr.bf16.mxu0 0
        %3739 = vmatpush1.bf16.msra.mxu0 0
        %3740 = vmatprep.mubr.bf16.mxu0 0
        %3741 = vmatmul.mubr.bf16.gmra.mrb[0].mxu0 %v3703
        %v3742 = vpop.f32.mrb[0].mxu0
        %v3743 = vadd.f32 %v3697, %v3742
        %v3744 = vpop.f32.mrb[0].mxu0
        %v3745 = vpop.f32.mrb[0].mxu0
        %v3746 = vadd.f32 %v3700, %v3745
        %v3747 = vpop.f32.mrb[0].mxu0
        %3748 = vdwg.mxu0
        %v3749 = vld [vmem:[%s2856] sm:$0xe]
        %v3750 = vld [vmem:[%s313] sm:$0x3]
        %v3752 = vunpack.c.l.b16 %v3749
        %v3753 = vpack.c.b16 %v3640, %v3752
        %v3754 = vrot.slane %v3753, 1
        %v3755 = vrot.slane %v3643, 1
        %v3756 = vsel %vm318, %v3754, %v3755
        %v3758 = vsel %vm217, %v3756, 0
        %v3761 = vsel %vm221, %v3750, 0
        %3763 = vmatprep.subr.bf16.mxu0 0
        %3764 = vmatpush1.bf16.msra.mxu0 %v3761
        %3765 = vmatprep.subr.bf16.mxu0 0
        %3766 = vmatpush1.bf16.msra.mxu0 0
        %3767 = vmatprep.subr.bf16.mxu0 0
        %3768 = vmatpush1.bf16.msra.mxu0 0
        %3769 = vmatprep.subr.bf16.mxu0 0
        %3770 = vmatpush1.bf16.msra.mxu0 0
        %3771 = vmatprep.subr.bf16.mxu0 0
        %3772 = vmatpush1.bf16.msra.mxu0 0
        %3773 = vmatprep.subr.bf16.mxu0 0
        %3774 = vmatpush1.bf16.msra.mxu0 0
        %3775 = vmatprep.subr.bf16.mxu0 0
        %3776 = vmatpush1.bf16.msra.mxu0 0
        %3777 = vmatprep.subr.bf16.mxu0 0
        %3778 = vmatpush1.bf16.msra.mxu0 0
        %3779 = vmatprep.subr.bf16.mxu0 0
        %3780 = vmatpush1.bf16.msra.mxu0 0
        %3781 = vmatprep.subr.bf16.mxu0 0
        %3782 = vmatpush1.bf16.msra.mxu0 0
        %3783 = vmatprep.subr.bf16.mxu0 0
        %3784 = vmatpush1.bf16.msra.mxu0 0
        %3785 = vmatprep.subr.bf16.mxu0 0
        %3786 = vmatpush1.bf16.msra.mxu0 0
        %3787 = vmatprep.subr.bf16.mxu0 0
        %3788 = vmatpush1.bf16.msra.mxu0 0
        %3789 = vmatprep.subr.bf16.mxu0 0
        %3790 = vmatpush1.bf16.msra.mxu0 0
        %3791 = vmatprep.subr.bf16.mxu0 0
        %3792 = vmatpush1.bf16.msra.mxu0 0
        %3793 = vmatprep.subr.bf16.mxu0 0
        %3794 = vmatpush1.bf16.msra.mxu0 0
        %3795 = vmatprep.mubr.bf16.mxu0 0
        %3796 = vmatmul.mubr.bf16.gmra.mrb[0].mxu0 %v3758
        %v3797 = vpop.f32.mrb[0].mxu0
        %v3798 = vadd.f32 0.0, %v3797
        %v3799 = vpop.f32.mrb[0].mxu0
        %v3800 = vpop.f32.mrb[0].mxu0
        %v3801 = vadd.f32 0.0, %v3800
        %v3802 = vpop.f32.mrb[0].mxu0
        %3803 = vdwg.mxu0
        %v3804 = vadd.f32 %v3743, %v3798
        %v3805 = vadd.f32 %v3746, %v3801
        %v3806 = vld [vmem:[%s3426] sm:$0xf]
        %v3807 = vld [vmem:[%s3426 + $0x4] sm:$0xf]
        %v3808 = vld [vmem:[%s377] sm:$0x3]
        %v3811 = vunpack.c.l.b16 %v3806
        %v3812 = vunpack.c.l.b16 %v3807
        %v3813 = vpack.c.b16 %v3812, %v3811
        %v3815 = vsel %vm217, %v3813, 0
        %v3818 = vsel %vm221, %v3808, 0
        %3820 = vmatprep.subr.bf16.mxu0 0
        %3821 = vmatpush1.bf16.msra.mxu0 %v3818
        %3822 = vmatprep.subr.bf16.mxu0 0
        %3823 = vmatpush1.bf16.msra.mxu0 0
        %3824 = vmatprep.subr.bf16.mxu0 0
        %3825 = vmatpush1.bf16.msra.mxu0 0
        %3826 = vmatprep.subr.bf16.mxu0 0
        %3827 = vmatpush1.bf16.msra.mxu0 0
        %3828 = vmatprep.subr.bf16.mxu0 0
        %3829 = vmatpush1.bf16.msra.mxu0 0
        %3830 = vmatprep.subr.bf16.mxu0 0
        %3831 = vmatpush1.bf16.msra.mxu0 0
        %3832 = vmatprep.subr.bf16.mxu0 0
        %3833 = vmatpush1.bf16.msra.mxu0 0
        %3834 = vmatprep.subr.bf16.mxu0 0
        %3835 = vmatpush1.bf16.msra.mxu0 0
        %3836 = vmatprep.subr.bf16.mxu0 0
        %3837 = vmatpush1.bf16.msra.mxu0 0
        %3838 = vmatprep.subr.bf16.mxu0 0
        %3839 = vmatpush1.bf16.msra.mxu0 0
        %3840 = vmatprep.subr.bf16.mxu0 0
        %3841 = vmatpush1.bf16.msra.mxu0 0
        %3842 = vmatprep.subr.bf16.mxu0 0
        %3843 = vmatpush1.bf16.msra.mxu0 0
        %3844 = vmatprep.subr.bf16.mxu0 0
        %3845 = vmatpush1.bf16.msra.mxu0 0
        %3846 = vmatprep.subr.bf16.mxu0 0
        %3847 = vmatpush1.bf16.msra.mxu0 0
        %3848 = vmatprep.subr.bf16.mxu0 0
        %3849 = vmatpush1.bf16.msra.mxu0 0
        %3850 = vmatprep.subr.bf16.mxu0 0
        %3851 = vmatpush1.bf16.msra.mxu0 0
        %3852 = vmatprep.mubr.bf16.mxu0 0
        %3853 = vmatmul.mubr.bf16.gmra.mrb[0].mxu0 %v3815
        %v3854 = vpop.f32.mrb[0].mxu0
        %v3855 = vadd.f32 0.0, %v3854
        %v3856 = vpop.f32.mrb[0].mxu0
        %v3857 = vpop.f32.mrb[0].mxu0
        %v3858 = vadd.f32 0.0, %v3857
        %v3859 = vpop.f32.mrb[0].mxu0
        %3860 = vdwg.mxu0
        %v3861 = vadd.f32 %v3804, %v3855
        %v3862 = vadd.f32 %v3805, %v3858
        %v3863 = vld [vmem:[%s3426] sm:$0xf]
        %v3864 = vld [vmem:[%s3426 + $0x4] sm:$0xf]
        %v3865 = vld [vmem:[%s3426 + $0x8] sm:$0x1]
        %v3866 = vld [vmem:[%s436] sm:$0x3]
        %v3870 = vunpack.c.l.b16 %v3863
        %v3871 = vunpack.c.l.b16 %v3864
        %v3872 = vunpack.c.l.b16 %v3865
        %v3873 = vpack.c.b16 %v3871, %v3870
        %v3874 = vpack.c.b16 %v3872, %v3872
        %v3876 = vshrl.u32 %v3873, 16
        %v3878 = vshll.u32 %v3873, 16
        %v3880 = vrot.slane %v3878, 1
        %v3881 = vor.u32 %v3876, %v3880
        %v3883 = vshll.u32 %v3874, 16
        %v3885 = vrot.slane %v3883, 1
        %v3886 = vsel %vm204, %v3881, %v3885
        %v3888 = vsel %vm217, %v3886, 0
        %v3891 = vsel %vm221, %v3866, 0
        %3893 = vmatprep.subr.bf16.mxu0 0
        %3894 = vmatpush1.bf16.msra.mxu0 %v3891
        %3895 = vmatprep.subr.bf16.mxu0 0
        %3896 = vmatpush1.bf16.msra.mxu0 0
        %3897 = vmatprep.subr.bf16.mxu0 0
        %3898 = vmatpush1.bf16.msra.mxu0 0
        %3899 = vmatprep.subr.bf16.mxu0 0
        %3900 = vmatpush1.bf16.msra.mxu0 0
        %3901 = vmatprep.subr.bf16.mxu0 0
        %3902 = vmatpush1.bf16.msra.mxu0 0
        %3903 = vmatprep.subr.bf16.mxu0 0
        %3904 = vmatpush1.bf16.msra.mxu0 0
        %3905 = vmatprep.subr.bf16.mxu0 0
        %3906 = vmatpush1.bf16.msra.mxu0 0
        %3907 = vmatprep.subr.bf16.mxu0 0
        %3908 = vmatpush1.bf16.msra.mxu0 0
        %3909 = vmatprep.subr.bf16.mxu0 0
        %3910 = vmatpush1.bf16.msra.mxu0 0
        %3911 = vmatprep.subr.bf16.mxu0 0
        %3912 = vmatpush1.bf16.msra.mxu0 0
        %3913 = vmatprep.subr.bf16.mxu0 0
        %3914 = vmatpush1.bf16.msra.mxu0 0
        %3915 = vmatprep.subr.bf16.mxu0 0
        %3916 = vmatpush1.bf16.msra.mxu0 0
        %3917 = vmatprep.subr.bf16.mxu0 0
        %3918 = vmatpush1.bf16.msra.mxu0 0
        %3919 = vmatprep.subr.bf16.mxu0 0
        %3920 = vmatpush1.bf16.msra.mxu0 0
        %3921 = vmatprep.subr.bf16.mxu0 0
        %3922 = vmatpush1.bf16.msra.mxu0 0
        %3923 = vmatprep.subr.bf16.mxu0 0
        %3924 = vmatpush1.bf16.msra.mxu0 0
        %3925 = vmatprep.mubr.bf16.mxu0 0
        %3926 = vmatmul.mubr.bf16.gmra.mrb[0].mxu0 %v3888
        %v3927 = vpop.f32.mrb[0].mxu0
        %v3928 = vadd.f32 0.0, %v3927
        %v3929 = vpop.f32.mrb[0].mxu0
        %v3930 = vpop.f32.mrb[0].mxu0
        %v3931 = vadd.f32 0.0, %v3930
        %v3932 = vpop.f32.mrb[0].mxu0
        %3933 = vdwg.mxu0
        %v3934 = vadd.f32 %v3861, %v3928
        %v3935 = vadd.f32 %v3862, %v3931
        %v3936 = vld [vmem:[%s3426] sm:$0xe]
        %v3937 = vld [vmem:[%s508] sm:$0x3]
        %v3939 = vunpack.c.l.b16 %v3936
        %v3940 = vpack.c.b16 %v3871, %v3939
        %v3941 = vrot.slane %v3940, 1
        %v3942 = vrot.slane %v3874, 1
        %v3943 = vsel %vm318, %v3941, %v3942
        %v3945 = vsel %vm217, %v3943, 0
        %v3948 = vsel %vm221, %v3937, 0
        %3950 = vmatprep.subr.bf16.mxu0 0
        %3951 = vmatpush1.bf16.msra.mxu0 %v3948
        %3952 = vmatprep.subr.bf16.mxu0 0
        %3953 = vmatpush1.bf16.msra.mxu0 0
        %3954 = vmatprep.subr.bf16.mxu0 0
        %3955 = vmatpush1.bf16.msra.mxu0 0
        %3956 = vmatprep.subr.bf16.mxu0 0
        %3957 = vmatpush1.bf16.msra.mxu0 0
        %3958 = vmatprep.subr.bf16.mxu0 0
        %3959 = vmatpush1.bf16.msra.mxu0 0
        %3960 = vmatprep.subr.bf16.mxu0 0
        %3961 = vmatpush1.bf16.msra.mxu0 0
        %3962 = vmatprep.subr.bf16.mxu0 0
        %3963 = vmatpush1.bf16.msra.mxu0 0
        %3964 = vmatprep.subr.bf16.mxu0 0
        %3965 = vmatpush1.bf16.msra.mxu0 0
        %3966 = vmatprep.subr.bf16.mxu0 0
        %3967 = vmatpush1.bf16.msra.mxu0 0
        %3968 = vmatprep.subr.bf16.mxu0 0
        %3969 = vmatpush1.bf16.msra.mxu0 0
        %3970 = vmatprep.subr.bf16.mxu0 0
        %3971 = vmatpush1.bf16.msra.mxu0 0
        %3972 = vmatprep.subr.bf16.mxu0 0
        %3973 = vmatpush1.bf16.msra.mxu0 0
        %3974 = vmatprep.subr.bf16.mxu0 0
        %3975 = vmatpush1.bf16.msra.mxu0 0
        %3976 = vmatprep.subr.bf16.mxu0 0
        %3977 = vmatpush1.bf16.msra.mxu0 0
        %3978 = vmatprep.subr.bf16.mxu0 0
        %3979 = vmatpush1.bf16.msra.mxu0 0
        %3980 = vmatprep.subr.bf16.mxu0 0
        %3981 = vmatpush1.bf16.msra.mxu0 0
        %3982 = vmatprep.mubr.bf16.mxu0 0
        %3983 = vmatmul.mubr.bf16.gmra.mrb[0].mxu0 %v3945
        %v3984 = vpop.f32.mrb[0].mxu0
        %v3985 = vadd.f32 0.0, %v3984
        %v3986 = vpop.f32.mrb[0].mxu0
        %v3987 = vpop.f32.mrb[0].mxu0
        %v3988 = vadd.f32 0.0, %v3987
        %v3989 = vpop.f32.mrb[0].mxu0
        %3990 = vdwg.mxu0
        %v3991 = vadd.f32 %v3934, %v3985
        %v3992 = vadd.f32 %v3935, %v3988
        %s3993 = sadd.s32 %s186, 8
        %s3994 = smul.u32 %s3993, 3
        %s3995 = smul.addr %s3994, 4
        %s3996 = scalar_lea.vmem %s182, %s3995
        %v3997 = vld [vmem:[%s3996] sm:$0xf]
        %v3998 = vld [vmem:[%s3996 + $0x4] sm:$0xf]
        %v3999 = vld [vmem:[%s571] sm:$0x3]
        %v4002 = vunpack.c.l.b16 %v3997
        %v4003 = vunpack.c.l.b16 %v3998
        %v4004 = vpack.c.b16 %v4003, %v4002
        %v4006 = vsel %vm217, %v4004, 0
        %v4009 = vsel %vm221, %v3999, 0
        %4011 = vmatprep.subr.bf16.mxu0 0
        %4012 = vmatpush1.bf16.msra.mxu0 %v4009
        %4013 = vmatprep.subr.bf16.mxu0 0
        %4014 = vmatpush1.bf16.msra.mxu0 0
        %4015 = vmatprep.subr.bf16.mxu0 0
        %4016 = vmatpush1.bf16.msra.mxu0 0
        %4017 = vmatprep.subr.bf16.mxu0 0
        %4018 = vmatpush1.bf16.msra.mxu0 0
        %4019 = vmatprep.subr.bf16.mxu0 0
        %4020 = vmatpush1.bf16.msra.mxu0 0
        %4021 = vmatprep.subr.bf16.mxu0 0
        %4022 = vmatpush1.bf16.msra.mxu0 0
        %4023 = vmatprep.subr.bf16.mxu0 0
        %4024 = vmatpush1.bf16.msra.mxu0 0
        %4025 = vmatprep.subr.bf16.mxu0 0
        %4026 = vmatpush1.bf16.msra.mxu0 0
        %4027 = vmatprep.subr.bf16.mxu0 0
        %4028 = vmatpush1.bf16.msra.mxu0 0
        %4029 = vmatprep.subr.bf16.mxu0 0
        %4030 = vmatpush1.bf16.msra.mxu0 0
        %4031 = vmatprep.subr.bf16.mxu0 0
        %4032 = vmatpush1.bf16.msra.mxu0 0
        %4033 = vmatprep.subr.bf16.mxu0 0
        %4034 = vmatpush1.bf16.msra.mxu0 0
        %4035 = vmatprep.subr.bf16.mxu0 0
        %4036 = vmatpush1.bf16.msra.mxu0 0
        %4037 = vmatprep.subr.bf16.mxu0 0
        %4038 = vmatpush1.bf16.msra.mxu0 0
        %4039 = vmatprep.subr.bf16.mxu0 0
        %4040 = vmatpush1.bf16.msra.mxu0 0
        %4041 = vmatprep.subr.bf16.mxu0 0
        %4042 = vmatpush1.bf16.msra.mxu0 0
        %4043 = vmatprep.mubr.bf16.mxu0 0
        %4044 = vmatmul.mubr.bf16.gmra.mrb[0].mxu0 %v4006
        %v4045 = vpop.f32.mrb[0].mxu0
        %v4046 = vadd.f32 0.0, %v4045
        %v4047 = vpop.f32.mrb[0].mxu0
        %v4048 = vpop.f32.mrb[0].mxu0
        %v4049 = vadd.f32 0.0, %v4048
        %v4050 = vpop.f32.mrb[0].mxu0
        %4051 = vdwg.mxu0
        %v4052 = vadd.f32 %v3991, %v4046
        %v4053 = vadd.f32 %v3992, %v4049
        %v4054 = vld [vmem:[%s3996] sm:$0xf]
        %v4055 = vld [vmem:[%s3996 + $0x4] sm:$0xf]
        %v4056 = vld [vmem:[%s3996 + $0x8] sm:$0x1]
        %v4057 = vld [vmem:[%s630] sm:$0x3]
        %v4061 = vunpack.c.l.b16 %v4054
        %v4062 = vunpack.c.l.b16 %v4055
        %v4063 = vunpack.c.l.b16 %v4056
        %v4064 = vpack.c.b16 %v4062, %v4061
        %v4065 = vpack.c.b16 %v4063, %v4063
        %v4067 = vshrl.u32 %v4064, 16
        %v4069 = vshll.u32 %v4064, 16
        %v4071 = vrot.slane %v4069, 1
        %v4072 = vor.u32 %v4067, %v4071
        %v4074 = vshll.u32 %v4065, 16
        %v4076 = vrot.slane %v4074, 1
        %v4077 = vsel %vm204, %v4072, %v4076
        %v4079 = vsel %vm217, %v4077, 0
        %v4082 = vsel %vm221, %v4057, 0
        %4084 = vmatprep.subr.bf16.mxu0 0
        %4085 = vmatpush1.bf16.msra.mxu0 %v4082
        %4086 = vmatprep.subr.bf16.mxu0 0
        %4087 = vmatpush1.bf16.msra.mxu0 0
        %4088 = vmatprep.subr.bf16.mxu0 0
        %4089 = vmatpush1.bf16.msra.mxu0 0
        %4090 = vmatprep.subr.bf16.mxu0 0
        %4091 = vmatpush1.bf16.msra.mxu0 0
        %4092 = vmatprep.subr.bf16.mxu0 0
        %4093 = vmatpush1.bf16.msra.mxu0 0
        %4094 = vmatprep.subr.bf16.mxu0 0
        %4095 = vmatpush1.bf16.msra.mxu0 0
        %4096 = vmatprep.subr.bf16.mxu0 0
        %4097 = vmatpush1.bf16.msra.mxu0 0
        %4098 = vmatprep.subr.bf16.mxu0 0
        %4099 = vmatpush1.bf16.msra.mxu0 0
        %4100 = vmatprep.subr.bf16.mxu0 0
        %4101 = vmatpush1.bf16.msra.mxu0 0
        %4102 = vmatprep.subr.bf16.mxu0 0
        %4103 = vmatpush1.bf16.msra.mxu0 0
        %4104 = vmatprep.subr.bf16.mxu0 0
        %4105 = vmatpush1.bf16.msra.mxu0 0
        %4106 = vmatprep.subr.bf16.mxu0 0
        %4107 = vmatpush1.bf16.msra.mxu0 0
        %4108 = vmatprep.subr.bf16.mxu0 0
        %4109 = vmatpush1.bf16.msra.mxu0 0
        %4110 = vmatprep.subr.bf16.mxu0 0
        %4111 = vmatpush1.bf16.msra.mxu0 0
        %4112 = vmatprep.subr.bf16.mxu0 0
        %4113 = vmatpush1.bf16.msra.mxu0 0
        %4114 = vmatprep.subr.bf16.mxu0 0
        %4115 = vmatpush1.bf16.msra.mxu0 0
        %4116 = vmatprep.mubr.bf16.mxu0 0
        %4117 = vmatmul.mubr.bf16.gmra.mrb[0].mxu0 %v4079
        %v4118 = vpop.f32.mrb[0].mxu0
        %v4119 = vadd.f32 0.0, %v4118
        %v4120 = vpop.f32.mrb[0].mxu0
        %v4121 = vpop.f32.mrb[0].mxu0
        %v4122 = vadd.f32 0.0, %v4121
        %v4123 = vpop.f32.mrb[0].mxu0
        %4124 = vdwg.mxu0
        %v4125 = vadd.f32 %v4052, %v4119
        %v4126 = vadd.f32 %v4053, %v4122
        %v4127 = vld [vmem:[%s3996] sm:$0xe]
        %v4128 = vld [vmem:[%s702] sm:$0x3]
        %v4130 = vunpack.c.l.b16 %v4127
        %v4131 = vpack.c.b16 %v4062, %v4130
        %v4132 = vrot.slane %v4131, 1
        %v4133 = vrot.slane %v4065, 1
        %v4134 = vsel %vm318, %v4132, %v4133
        %v4136 = vsel %vm217, %v4134, 0
        %v4139 = vsel %vm221, %v4128, 0
        %4141 = vmatprep.subr.bf16.mxu0 0
        %4142 = vmatpush1.bf16.msra.mxu0 %v4139
        %4143 = vmatprep.subr.bf16.mxu0 0
        %4144 = vmatpush1.bf16.msra.mxu0 0
        %4145 = vmatprep.subr.bf16.mxu0 0
        %4146 = vmatpush1.bf16.msra.mxu0 0
        %4147 = vmatprep.subr.bf16.mxu0 0
        %4148 = vmatpush1.bf16.msra.mxu0 0
        %4149 = vmatprep.subr.bf16.mxu0 0
        %4150 = vmatpush1.bf16.msra.mxu0 0
        %4151 = vmatprep.subr.bf16.mxu0 0
        %4152 = vmatpush1.bf16.msra.mxu0 0
        %4153 = vmatprep.subr.bf16.mxu0 0
        %4154 = vmatpush1.bf16.msra.mxu0 0
        %4155 = vmatprep.subr.bf16.mxu0 0
        %4156 = vmatpush1.bf16.msra.mxu0 0
        %4157 = vmatprep.subr.bf16.mxu0 0
        %4158 = vmatpush1.bf16.msra.mxu0 0
        %4159 = vmatprep.subr.bf16.mxu0 0
        %4160 = vmatpush1.bf16.msra.mxu0 0
        %4161 = vmatprep.subr.bf16.mxu0 0
        %4162 = vmatpush1.bf16.msra.mxu0 0
        %4163 = vmatprep.subr.bf16.mxu0 0
        %4164 = vmatpush1.bf16.msra.mxu0 0
        %4165 = vmatprep.subr.bf16.mxu0 0
        %4166 = vmatpush1.bf16.msra.mxu0 0
        %4167 = vmatprep.subr.bf16.mxu0 0
        %4168 = vmatpush1.bf16.msra.mxu0 0
        %4169 = vmatprep.subr.bf16.mxu0 0
        %4170 = vmatpush1.bf16.msra.mxu0 0
        %4171 = vmatprep.subr.bf16.mxu0 0
        %4172 = vmatpush1.bf16.msra.mxu0 0
        %4173 = vmatprep.mubr.bf16.mxu0 0
        %4174 = vmatmul.mubr.bf16.gmra.mrb[0].mxu0 %v4136
        %v4175 = vpop.f32.mrb[0].mxu0
        %v4176 = vadd.f32 0.0, %v4175
        %v4177 = vpop.f32.mrb[0].mxu0
        %v4178 = vpop.f32.mrb[0].mxu0
        %v4179 = vadd.f32 0.0, %v4178
        %v4180 = vpop.f32.mrb[0].mxu0
        %4181 = vdwg.mxu0
        %v4182 = vadd.f32 %v4125, %v4176
        %v4183 = vadd.f32 %v4126, %v4179
        %v4184 = vadd.f32 %v4182, %v763
        %v4185 = vadd.f32 %v4183, %v763
        %v4186 = vmin.f32 %v4184, 0.0
        %v4187 = vmin.f32 %v4185, 0.0
        %v4188 = vmul.f32 %v4186, 1.442695
        %v4189 = vpow.pop %v4188
        %v4190 = vmul.f32 %v4187, 1.442695
        %v4191 = vpow.pop %v4190
        %v4192 = vsub.f32 %v4189, 1.0
        %v4193 = vsub.f32 %v4191, 1.0
        %vm4194 = vcmp.gt.f32.partialorder %v4184, 0.0
        %vm4195 = vcmp.gt.f32.partialorder %v4185, 0.0
        %v4196 = vsel %vm4194, %v4184, %v4192
        %v4197 = vsel %vm4195, %v4185, %v4193
        %s4198 = scalar_lea.vmem %s177, 96 [#allocation2]
        %4199 = vst [vmem:[%s4198] sm:$0xff] %v4196
        %4200 = vst [vmem:[%s4198 + $0x8] sm:$0xff] %v4197
        %v4201 = vld [vmem:[%s3426] sm:$0xf]
        %v4202 = vld [vmem:[%s3426 + $0x4] sm:$0xf]
        %v4203 = vld [vmem:[%s1] sm:$0x3]
        %v4204 = vld [vmem:[%s3426 + $0x8] sm:$0x1]
        %v4205 = vld [vmem:[%s194] sm:$0x3]
        %v4209 = vunpack.c.l.b16 %v4201
        %v4210 = vunpack.c.l.b16 %v4202
        %v4211 = vunpack.c.l.b16 %v4204
        %v4212 = vpack.c.b16 %v4210, %v4209
        %v4213 = vpack.c.b16 %v4211, %v4211
        %v4215 = vshrl.u32 %v4212, 16
        %v4217 = vshll.u32 %v4212, 16
        %v4219 = vrot.slane %v4217, 1
        %v4220 = vor.u32 %v4215, %v4219
        %v4222 = vshll.u32 %v4213, 16
        %v4224 = vrot.slane %v4222, 1
        %v4225 = vsel %vm204, %v4220, %v4224
        %v4227 = vsel %vm217, %v4225, 0
        %v4230 = vsel %vm221, %v4205, 0
        %4232 = vmatprep.subr.bf16.mxu0 0
        %4233 = vmatpush1.bf16.msra.mxu0 %v4230
        %4234 = vmatprep.subr.bf16.mxu0 0
        %4235 = vmatpush1.bf16.msra.mxu0 0
        %4236 = vmatprep.subr.bf16.mxu0 0
        %4237 = vmatpush1.bf16.msra.mxu0 0
        %4238 = vmatprep.subr.bf16.mxu0 0
        %4239 = vmatpush1.bf16.msra.mxu0 0
        %4240 = vmatprep.subr.bf16.mxu0 0
        %4241 = vmatpush1.bf16.msra.mxu0 0
        %4242 = vmatprep.subr.bf16.mxu0 0
        %4243 = vmatpush1.bf16.msra.mxu0 0
        %4244 = vmatprep.subr.bf16.mxu0 0
        %4245 = vmatpush1.bf16.msra.mxu0 0
        %4246 = vmatprep.subr.bf16.mxu0 0
        %4247 = vmatpush1.bf16.msra.mxu0 0
        %4248 = vmatprep.subr.bf16.mxu0 0
        %4249 = vmatpush1.bf16.msra.mxu0 0
        %4250 = vmatprep.subr.bf16.mxu0 0
        %4251 = vmatpush1.bf16.msra.mxu0 0
        %4252 = vmatprep.subr.bf16.mxu0 0
        %4253 = vmatpush1.bf16.msra.mxu0 0
        %4254 = vmatprep.subr.bf16.mxu0 0
        %4255 = vmatpush1.bf16.msra.mxu0 0
        %4256 = vmatprep.subr.bf16.mxu0 0
        %4257 = vmatpush1.bf16.msra.mxu0 0
        %4258 = vmatprep.subr.bf16.mxu0 0
        %4259 = vmatpush1.bf16.msra.mxu0 0
        %4260 = vmatprep.subr.bf16.mxu0 0
        %4261 = vmatpush1.bf16.msra.mxu0 0
        %4262 = vmatprep.subr.bf16.mxu0 0
        %4263 = vmatpush1.bf16.msra.mxu0 0
        %4264 = vmatprep.mubr.bf16.mxu0 0
        %4265 = vmatmul.mubr.bf16.gmra.mrb[0].mxu0 %v4227
        %v4266 = vpop.f32.mrb[0].mxu0
        %v4267 = vadd.f32 0.0, %v4266
        %v4268 = vpop.f32.mrb[0].mxu0
        %v4269 = vpop.f32.mrb[0].mxu0
        %v4270 = vadd.f32 0.0, %v4269
        %v4271 = vpop.f32.mrb[0].mxu0
        %4272 = vdwg.mxu0
        %v4273 = vsel %vm217, %v4212, 0
        %v4276 = vsel %vm221, %v4203, 0
        %4278 = vmatprep.subr.bf16.mxu0 0
        %4279 = vmatpush1.bf16.msra.mxu0 %v4276
        %4280 = vmatprep.subr.bf16.mxu0 0
        %4281 = vmatpush1.bf16.msra.mxu0 0
        %4282 = vmatprep.subr.bf16.mxu0 0
        %4283 = vmatpush1.bf16.msra.mxu0 0
        %4284 = vmatprep.subr.bf16.mxu0 0
        %4285 = vmatpush1.bf16.msra.mxu0 0
        %4286 = vmatprep.subr.bf16.mxu0 0
        %4287 = vmatpush1.bf16.msra.mxu0 0
        %4288 = vmatprep.subr.bf16.mxu0 0
        %4289 = vmatpush1.bf16.msra.mxu0 0
        %4290 = vmatprep.subr.bf16.mxu0 0
        %4291 = vmatpush1.bf16.msra.mxu0 0
        %4292 = vmatprep.subr.bf16.mxu0 0
        %4293 = vmatpush1.bf16.msra.mxu0 0
        %4294 = vmatprep.subr.bf16.mxu0 0
        %4295 = vmatpush1.bf16.msra.mxu0 0
        %4296 = vmatprep.subr.bf16.mxu0 0
        %4297 = vmatpush1.bf16.msra.mxu0 0
        %4298 = vmatprep.subr.bf16.mxu0 0
        %4299 = vmatpush1.bf16.msra.mxu0 0
        %4300 = vmatprep.subr.bf16.mxu0 0
        %4301 = vmatpush1.bf16.msra.mxu0 0
        %4302 = vmatprep.subr.bf16.mxu0 0
        %4303 = vmatpush1.bf16.msra.mxu0 0
        %4304 = vmatprep.subr.bf16.mxu0 0
        %4305 = vmatpush1.bf16.msra.mxu0 0
        %4306 = vmatprep.subr.bf16.mxu0 0
        %4307 = vmatpush1.bf16.msra.mxu0 0
        %4308 = vmatprep.subr.bf16.mxu0 0
        %4309 = vmatpush1.bf16.msra.mxu0 0
        %4310 = vmatprep.mubr.bf16.mxu0 0
        %4311 = vmatmul.mubr.bf16.gmra.mrb[0].mxu0 %v4273
        %v4312 = vpop.f32.mrb[0].mxu0
        %v4313 = vadd.f32 %v4267, %v4312
        %v4314 = vpop.f32.mrb[0].mxu0
        %v4315 = vpop.f32.mrb[0].mxu0
        %v4316 = vadd.f32 %v4270, %v4315
        %v4317 = vpop.f32.mrb[0].mxu0
        %4318 = vdwg.mxu0
        %v4319 = vld [vmem:[%s3426] sm:$0xe]
        %v4320 = vld [vmem:[%s313] sm:$0x3]
        %v4322 = vunpack.c.l.b16 %v4319
        %v4323 = vpack.c.b16 %v4210, %v4322
        %v4324 = vrot.slane %v4323, 1
        %v4325 = vrot.slane %v4213, 1
        %v4326 = vsel %vm318, %v4324, %v4325
        %v4328 = vsel %vm217, %v4326, 0
        %v4331 = vsel %vm221, %v4320, 0
        %4333 = vmatprep.subr.bf16.mxu0 0
        %4334 = vmatpush1.bf16.msra.mxu0 %v4331
        %4335 = vmatprep.subr.bf16.mxu0 0
        %4336 = vmatpush1.bf16.msra.mxu0 0
        %4337 = vmatprep.subr.bf16.mxu0 0
        %4338 = vmatpush1.bf16.msra.mxu0 0
        %4339 = vmatprep.subr.bf16.mxu0 0
        %4340 = vmatpush1.bf16.msra.mxu0 0
        %4341 = vmatprep.subr.bf16.mxu0 0
        %4342 = vmatpush1.bf16.msra.mxu0 0
        %4343 = vmatprep.subr.bf16.mxu0 0
        %4344 = vmatpush1.bf16.msra.mxu0 0
        %4345 = vmatprep.subr.bf16.mxu0 0
        %4346 = vmatpush1.bf16.msra.mxu0 0
        %4347 = vmatprep.subr.bf16.mxu0 0
        %4348 = vmatpush1.bf16.msra.mxu0 0
        %4349 = vmatprep.subr.bf16.mxu0 0
        %4350 = vmatpush1.bf16.msra.mxu0 0
        %4351 = vmatprep.subr.bf16.mxu0 0
        %4352 = vmatpush1.bf16.msra.mxu0 0
        %4353 = vmatprep.subr.bf16.mxu0 0
        %4354 = vmatpush1.bf16.msra.mxu0 0
        %4355 = vmatprep.subr.bf16.mxu0 0
        %4356 = vmatpush1.bf16.msra.mxu0 0
        %4357 = vmatprep.subr.bf16.mxu0 0
        %4358 = vmatpush1.bf16.msra.mxu0 0
        %4359 = vmatprep.subr.bf16.mxu0 0
        %4360 = vmatpush1.bf16.msra.mxu0 0
        %4361 = vmatprep.subr.bf16.mxu0 0
        %4362 = vmatpush1.bf16.msra.mxu0 0
        %4363 = vmatprep.subr.bf16.mxu0 0
        %4364 = vmatpush1.bf16.msra.mxu0 0
        %4365 = vmatprep.mubr.bf16.mxu0 0
        %4366 = vmatmul.mubr.bf16.gmra.mrb[0].mxu0 %v4328
        %v4367 = vpop.f32.mrb[0].mxu0
        %v4368 = vadd.f32 0.0, %v4367
        %v4369 = vpop.f32.mrb[0].mxu0
        %v4370 = vpop.f32.mrb[0].mxu0
        %v4371 = vadd.f32 0.0, %v4370
        %v4372 = vpop.f32.mrb[0].mxu0
        %4373 = vdwg.mxu0
        %v4374 = vadd.f32 %v4313, %v4368
        %v4375 = vadd.f32 %v4316, %v4371
        %v4376 = vld [vmem:[%s3996] sm:$0xf]
        %v4377 = vld [vmem:[%s3996 + $0x4] sm:$0xf]
        %v4378 = vld [vmem:[%s377] sm:$0x3]
        %v4381 = vunpack.c.l.b16 %v4376
        %v4382 = vunpack.c.l.b16 %v4377
        %v4383 = vpack.c.b16 %v4382, %v4381
        %v4385 = vsel %vm217, %v4383, 0
        %v4388 = vsel %vm221, %v4378, 0
        %4390 = vmatprep.subr.bf16.mxu0 0
        %4391 = vmatpush1.bf16.msra.mxu0 %v4388
        %4392 = vmatprep.subr.bf16.mxu0 0
        %4393 = vmatpush1.bf16.msra.mxu0 0
        %4394 = vmatprep.subr.bf16.mxu0 0
        %4395 = vmatpush1.bf16.msra.mxu0 0
        %4396 = vmatprep.subr.bf16.mxu0 0
        %4397 = vmatpush1.bf16.msra.mxu0 0
        %4398 = vmatprep.subr.bf16.mxu0 0
        %4399 = vmatpush1.bf16.msra.mxu0 0
        %4400 = vmatprep.subr.bf16.mxu0 0
        %4401 = vmatpush1.bf16.msra.mxu0 0
        %4402 = vmatprep.subr.bf16.mxu0 0
        %4403 = vmatpush1.bf16.msra.mxu0 0
        %4404 = vmatprep.subr.bf16.mxu0 0
        %4405 = vmatpush1.bf16.msra.mxu0 0
        %4406 = vmatprep.subr.bf16.mxu0 0
        %4407 = vmatpush1.bf16.msra.mxu0 0
        %4408 = vmatprep.subr.bf16.mxu0 0
        %4409 = vmatpush1.bf16.msra.mxu0 0
        %4410 = vmatprep.subr.bf16.mxu0 0
        %4411 = vmatpush1.bf16.msra.mxu0 0
        %4412 = vmatprep.subr.bf16.mxu0 0
        %4413 = vmatpush1.bf16.msra.mxu0 0
        %4414 = vmatprep.subr.bf16.mxu0 0
        %4415 = vmatpush1.bf16.msra.mxu0 0
        %4416 = vmatprep.subr.bf16.mxu0 0
        %4417 = vmatpush1.bf16.msra.mxu0 0
        %4418 = vmatprep.subr.bf16.mxu0 0
        %4419 = vmatpush1.bf16.msra.mxu0 0
        %4420 = vmatprep.subr.bf16.mxu0 0
        %4421 = vmatpush1.bf16.msra.mxu0 0
        %4422 = vmatprep.mubr.bf16.mxu0 0
        %4423 = vmatmul.mubr.bf16.gmra.mrb[0].mxu0 %v4385
        %v4424 = vpop.f32.mrb[0].mxu0
        %v4425 = vadd.f32 0.0, %v4424
        %v4426 = vpop.f32.mrb[0].mxu0
        %v4427 = vpop.f32.mrb[0].mxu0
        %v4428 = vadd.f32 0.0, %v4427
        %v4429 = vpop.f32.mrb[0].mxu0
        %4430 = vdwg.mxu0
        %v4431 = vadd.f32 %v4374, %v4425
        %v4432 = vadd.f32 %v4375, %v4428
        %v4433 = vld [vmem:[%s3996] sm:$0xf]
        %v4434 = vld [vmem:[%s3996 + $0x4] sm:$0xf]
        %v4435 = vld [vmem:[%s3996 + $0x8] sm:$0x1]
        %v4436 = vld [vmem:[%s436] sm:$0x3]
        %v4440 = vunpack.c.l.b16 %v4433
        %v4441 = vunpack.c.l.b16 %v4434
        %v4442 = vunpack.c.l.b16 %v4435
        %v4443 = vpack.c.b16 %v4441, %v4440
        %v4444 = vpack.c.b16 %v4442, %v4442
        %v4446 = vshrl.u32 %v4443, 16
        %v4448 = vshll.u32 %v4443, 16
        %v4450 = vrot.slane %v4448, 1
        %v4451 = vor.u32 %v4446, %v4450
        %v4453 = vshll.u32 %v4444, 16
        %v4455 = vrot.slane %v4453, 1
        %v4456 = vsel %vm204, %v4451, %v4455
        %v4458 = vsel %vm217, %v4456, 0
        %v4461 = vsel %vm221, %v4436, 0
        %4463 = vmatprep.subr.bf16.mxu0 0
        %4464 = vmatpush1.bf16.msra.mxu0 %v4461
        %4465 = vmatprep.subr.bf16.mxu0 0
        %4466 = vmatpush1.bf16.msra.mxu0 0
        %4467 = vmatprep.subr.bf16.mxu0 0
        %4468 = vmatpush1.bf16.msra.mxu0 0
        %4469 = vmatprep.subr.bf16.mxu0 0
        %4470 = vmatpush1.bf16.msra.mxu0 0
        %4471 = vmatprep.subr.bf16.mxu0 0
        %4472 = vmatpush1.bf16.msra.mxu0 0
        %4473 = vmatprep.subr.bf16.mxu0 0
        %4474 = vmatpush1.bf16.msra.mxu0 0
        %4475 = vmatprep.subr.bf16.mxu0 0
        %4476 = vmatpush1.bf16.msra.mxu0 0
        %4477 = vmatprep.subr.bf16.mxu0 0
        %4478 = vmatpush1.bf16.msra.mxu0 0
        %4479 = vmatprep.subr.bf16.mxu0 0
        %4480 = vmatpush1.bf16.msra.mxu0 0
        %4481 = vmatprep.subr.bf16.mxu0 0
        %4482 = vmatpush1.bf16.msra.mxu0 0
        %4483 = vmatprep.subr.bf16.mxu0 0
        %4484 = vmatpush1.bf16.msra.mxu0 0
        %4485 = vmatprep.subr.bf16.mxu0 0
        %4486 = vmatpush1.bf16.msra.mxu0 0
        %4487 = vmatprep.subr.bf16.mxu0 0
        %4488 = vmatpush1.bf16.msra.mxu0 0
        %4489 = vmatprep.subr.bf16.mxu0 0
        %4490 = vmatpush1.bf16.msra.mxu0 0
        %4491 = vmatprep.subr.bf16.mxu0 0
        %4492 = vmatpush1.bf16.msra.mxu0 0
        %4493 = vmatprep.subr.bf16.mxu0 0
        %4494 = vmatpush1.bf16.msra.mxu0 0
        %4495 = vmatprep.mubr.bf16.mxu0 0
        %4496 = vmatmul.mubr.bf16.gmra.mrb[0].mxu0 %v4458
        %v4497 = vpop.f32.mrb[0].mxu0
        %v4498 = vadd.f32 0.0, %v4497
        %v4499 = vpop.f32.mrb[0].mxu0
        %v4500 = vpop.f32.mrb[0].mxu0
        %v4501 = vadd.f32 0.0, %v4500
        %v4502 = vpop.f32.mrb[0].mxu0
        %4503 = vdwg.mxu0
        %v4504 = vadd.f32 %v4431, %v4498
        %v4505 = vadd.f32 %v4432, %v4501
        %v4506 = vld [vmem:[%s3996] sm:$0xe]
        %v4507 = vld [vmem:[%s508] sm:$0x3]
        %v4509 = vunpack.c.l.b16 %v4506
        %v4510 = vpack.c.b16 %v4441, %v4509
        %v4511 = vrot.slane %v4510, 1
        %v4512 = vrot.slane %v4444, 1
        %v4513 = vsel %vm318, %v4511, %v4512
        %v4515 = vsel %vm217, %v4513, 0
        %v4518 = vsel %vm221, %v4507, 0
        %4520 = vmatprep.subr.bf16.mxu0 0
        %4521 = vmatpush1.bf16.msra.mxu0 %v4518
        %4522 = vmatprep.subr.bf16.mxu0 0
        %4523 = vmatpush1.bf16.msra.mxu0 0
        %4524 = vmatprep.subr.bf16.mxu0 0
        %4525 = vmatpush1.bf16.msra.mxu0 0
        %4526 = vmatprep.subr.bf16.mxu0 0
        %4527 = vmatpush1.bf16.msra.mxu0 0
        %4528 = vmatprep.subr.bf16.mxu0 0
        %4529 = vmatpush1.bf16.msra.mxu0 0
        %4530 = vmatprep.subr.bf16.mxu0 0
        %4531 = vmatpush1.bf16.msra.mxu0 0
        %4532 = vmatprep.subr.bf16.mxu0 0
        %4533 = vmatpush1.bf16.msra.mxu0 0
        %4534 = vmatprep.subr.bf16.mxu0 0
        %4535 = vmatpush1.bf16.msra.mxu0 0
        %4536 = vmatprep.subr.bf16.mxu0 0
        %4537 = vmatpush1.bf16.msra.mxu0 0
        %4538 = vmatprep.subr.bf16.mxu0 0
        %4539 = vmatpush1.bf16.msra.mxu0 0
        %4540 = vmatprep.subr.bf16.mxu0 0
        %4541 = vmatpush1.bf16.msra.mxu0 0
        %4542 = vmatprep.subr.bf16.mxu0 0
        %4543 = vmatpush1.bf16.msra.mxu0 0
        %4544 = vmatprep.subr.bf16.mxu0 0
        %4545 = vmatpush1.bf16.msra.mxu0 0
        %4546 = vmatprep.subr.bf16.mxu0 0
        %4547 = vmatpush1.bf16.msra.mxu0 0
        %4548 = vmatprep.subr.bf16.mxu0 0
        %4549 = vmatpush1.bf16.msra.mxu0 0
        %4550 = vmatprep.subr.bf16.mxu0 0
        %4551 = vmatpush1.bf16.msra.mxu0 0
        %4552 = vmatprep.mubr.bf16.mxu0 0
        %4553 = vmatmul.mubr.bf16.gmra.mrb[0].mxu0 %v4515
        %v4554 = vpop.f32.mrb[0].mxu0
        %v4555 = vadd.f32 0.0, %v4554
        %v4556 = vpop.f32.mrb[0].mxu0
        %v4557 = vpop.f32.mrb[0].mxu0
        %v4558 = vadd.f32 0.0, %v4557
        %v4559 = vpop.f32.mrb[0].mxu0
        %4560 = vdwg.mxu0
        %v4561 = vadd.f32 %v4504, %v4555
        %v4562 = vadd.f32 %v4505, %v4558
        %s4563 = sadd.s32 %s186, 9
        %s4564 = smul.u32 %s4563, 3
        %s4565 = smul.addr %s4564, 4
        %s4566 = scalar_lea.vmem %s182, %s4565
        %v4567 = vld [vmem:[%s4566] sm:$0xf]
        %v4568 = vld [vmem:[%s4566 + $0x4] sm:$0xf]
        %v4569 = vld [vmem:[%s571] sm:$0x3]
        %v4572 = vunpack.c.l.b16 %v4567
        %v4573 = vunpack.c.l.b16 %v4568
        %v4574 = vpack.c.b16 %v4573, %v4572
        %v4576 = vsel %vm217, %v4574, 0
        %v4579 = vsel %vm221, %v4569, 0
        %4581 = vmatprep.subr.bf16.mxu0 0
        %4582 = vmatpush1.bf16.msra.mxu0 %v4579
        %4583 = vmatprep.subr.bf16.mxu0 0
        %4584 = vmatpush1.bf16.msra.mxu0 0
        %4585 = vmatprep.subr.bf16.mxu0 0
        %4586 = vmatpush1.bf16.msra.mxu0 0
        %4587 = vmatprep.subr.bf16.mxu0 0
        %4588 = vmatpush1.bf16.msra.mxu0 0
        %4589 = vmatprep.subr.bf16.mxu0 0
        %4590 = vmatpush1.bf16.msra.mxu0 0
        %4591 = vmatprep.subr.bf16.mxu0 0
        %4592 = vmatpush1.bf16.msra.mxu0 0
        %4593 = vmatprep.subr.bf16.mxu0 0
        %4594 = vmatpush1.bf16.msra.mxu0 0
        %4595 = vmatprep.subr.bf16.mxu0 0
        %4596 = vmatpush1.bf16.msra.mxu0 0
        %4597 = vmatprep.subr.bf16.mxu0 0
        %4598 = vmatpush1.bf16.msra.mxu0 0
        %4599 = vmatprep.subr.bf16.mxu0 0
        %4600 = vmatpush1.bf16.msra.mxu0 0
        %4601 = vmatprep.subr.bf16.mxu0 0
        %4602 = vmatpush1.bf16.msra.mxu0 0
        %4603 = vmatprep.subr.bf16.mxu0 0
        %4604 = vmatpush1.bf16.msra.mxu0 0
        %4605 = vmatprep.subr.bf16.mxu0 0
        %4606 = vmatpush1.bf16.msra.mxu0 0
        %4607 = vmatprep.subr.bf16.mxu0 0
        %4608 = vmatpush1.bf16.msra.mxu0 0
        %4609 = vmatprep.subr.bf16.mxu0 0
        %4610 = vmatpush1.bf16.msra.mxu0 0
        %4611 = vmatprep.subr.bf16.mxu0 0
        %4612 = vmatpush1.bf16.msra.mxu0 0
        %4613 = vmatprep.mubr.bf16.mxu0 0
        %4614 = vmatmul.mubr.bf16.gmra.mrb[0].mxu0 %v4576
        %v4615 = vpop.f32.mrb[0].mxu0
        %v4616 = vadd.f32 0.0, %v4615
        %v4617 = vpop.f32.mrb[0].mxu0
        %v4618 = vpop.f32.mrb[0].mxu0
        %v4619 = vadd.f32 0.0, %v4618
        %v4620 = vpop.f32.mrb[0].mxu0
        %4621 = vdwg.mxu0
        %v4622 = vadd.f32 %v4561, %v4616
        %v4623 = vadd.f32 %v4562, %v4619
        %v4624 = vld [vmem:[%s4566] sm:$0xf]
        %v4625 = vld [vmem:[%s4566 + $0x4] sm:$0xf]
        %v4626 = vld [vmem:[%s4566 + $0x8] sm:$0x1]
        %v4627 = vld [vmem:[%s630] sm:$0x3]
        %v4631 = vunpack.c.l.b16 %v4624
        %v4632 = vunpack.c.l.b16 %v4625
        %v4633 = vunpack.c.l.b16 %v4626
        %v4634 = vpack.c.b16 %v4632, %v4631
        %v4635 = vpack.c.b16 %v4633, %v4633
        %v4637 = vshrl.u32 %v4634, 16
        %v4639 = vshll.u32 %v4634, 16
        %v4641 = vrot.slane %v4639, 1
        %v4642 = vor.u32 %v4637, %v4641
        %v4644 = vshll.u32 %v4635, 16
        %v4646 = vrot.slane %v4644, 1
        %v4647 = vsel %vm204, %v4642, %v4646
        %v4649 = vsel %vm217, %v4647, 0
        %v4652 = vsel %vm221, %v4627, 0
        %4654 = vmatprep.subr.bf16.mxu0 0
        %4655 = vmatpush1.bf16.msra.mxu0 %v4652
        %4656 = vmatprep.subr.bf16.mxu0 0
        %4657 = vmatpush1.bf16.msra.mxu0 0
        %4658 = vmatprep.subr.bf16.mxu0 0
        %4659 = vmatpush1.bf16.msra.mxu0 0
        %4660 = vmatprep.subr.bf16.mxu0 0
        %4661 = vmatpush1.bf16.msra.mxu0 0
        %4662 = vmatprep.subr.bf16.mxu0 0
        %4663 = vmatpush1.bf16.msra.mxu0 0
        %4664 = vmatprep.subr.bf16.mxu0 0
        %4665 = vmatpush1.bf16.msra.mxu0 0
        %4666 = vmatprep.subr.bf16.mxu0 0
        %4667 = vmatpush1.bf16.msra.mxu0 0
        %4668 = vmatprep.subr.bf16.mxu0 0
        %4669 = vmatpush1.bf16.msra.mxu0 0
        %4670 = vmatprep.subr.bf16.mxu0 0
        %4671 = vmatpush1.bf16.msra.mxu0 0
        %4672 = vmatprep.subr.bf16.mxu0 0
        %4673 = vmatpush1.bf16.msra.mxu0 0
        %4674 = vmatprep.subr.bf16.mxu0 0
        %4675 = vmatpush1.bf16.msra.mxu0 0
        %4676 = vmatprep.subr.bf16.mxu0 0
        %4677 = vmatpush1.bf16.msra.mxu0 0
        %4678 = vmatprep.subr.bf16.mxu0 0
        %4679 = vmatpush1.bf16.msra.mxu0 0
        %4680 = vmatprep.subr.bf16.mxu0 0
        %4681 = vmatpush1.bf16.msra.mxu0 0
        %4682 = vmatprep.subr.bf16.mxu0 0
        %4683 = vmatpush1.bf16.msra.mxu0 0
        %4684 = vmatprep.subr.bf16.mxu0 0
        %4685 = vmatpush1.bf16.msra.mxu0 0
        %4686 = vmatprep.mubr.bf16.mxu0 0
        %4687 = vmatmul.mubr.bf16.gmra.mrb[0].mxu0 %v4649
        %v4688 = vpop.f32.mrb[0].mxu0
        %v4689 = vadd.f32 0.0, %v4688
        %v4690 = vpop.f32.mrb[0].mxu0
        %v4691 = vpop.f32.mrb[0].mxu0
        %v4692 = vadd.f32 0.0, %v4691
        %v4693 = vpop.f32.mrb[0].mxu0
        %4694 = vdwg.mxu0
        %v4695 = vadd.f32 %v4622, %v4689
        %v4696 = vadd.f32 %v4623, %v4692
        %v4697 = vld [vmem:[%s4566] sm:$0xe]
        %v4698 = vld [vmem:[%s702] sm:$0x3]
        %v4700 = vunpack.c.l.b16 %v4697
        %v4701 = vpack.c.b16 %v4632, %v4700
        %v4702 = vrot.slane %v4701, 1
        %v4703 = vrot.slane %v4635, 1
        %v4704 = vsel %vm318, %v4702, %v4703
        %v4706 = vsel %vm217, %v4704, 0
        %v4709 = vsel %vm221, %v4698, 0
        %4711 = vmatprep.subr.bf16.mxu0 0
        %4712 = vmatpush1.bf16.msra.mxu0 %v4709
        %4713 = vmatprep.subr.bf16.mxu0 0
        %4714 = vmatpush1.bf16.msra.mxu0 0
        %4715 = vmatprep.subr.bf16.mxu0 0
        %4716 = vmatpush1.bf16.msra.mxu0 0
        %4717 = vmatprep.subr.bf16.mxu0 0
        %4718 = vmatpush1.bf16.msra.mxu0 0
        %4719 = vmatprep.subr.bf16.mxu0 0
        %4720 = vmatpush1.bf16.msra.mxu0 0
        %4721 = vmatprep.subr.bf16.mxu0 0
        %4722 = vmatpush1.bf16.msra.mxu0 0
        %4723 = vmatprep.subr.bf16.mxu0 0
        %4724 = vmatpush1.bf16.msra.mxu0 0
        %4725 = vmatprep.subr.bf16.mxu0 0
        %4726 = vmatpush1.bf16.msra.mxu0 0
        %4727 = vmatprep.subr.bf16.mxu0 0
        %4728 = vmatpush1.bf16.msra.mxu0 0
        %4729 = vmatprep.subr.bf16.mxu0 0
        %4730 = vmatpush1.bf16.msra.mxu0 0
        %4731 = vmatprep.subr.bf16.mxu0 0
        %4732 = vmatpush1.bf16.msra.mxu0 0
        %4733 = vmatprep.subr.bf16.mxu0 0
        %4734 = vmatpush1.bf16.msra.mxu0 0
        %4735 = vmatprep.subr.bf16.mxu0 0
        %4736 = vmatpush1.bf16.msra.mxu0 0
        %4737 = vmatprep.subr.bf16.mxu0 0
        %4738 = vmatpush1.bf16.msra.mxu0 0
        %4739 = vmatprep.subr.bf16.mxu0 0
        %4740 = vmatpush1.bf16.msra.mxu0 0
        %4741 = vmatprep.subr.bf16.mxu0 0
        %4742 = vmatpush1.bf16.msra.mxu0 0
        %4743 = vmatprep.mubr.bf16.mxu0 0
        %4744 = vmatmul.mubr.bf16.gmra.mrb[0].mxu0 %v4706
        %v4745 = vpop.f32.mrb[0].mxu0
        %v4746 = vadd.f32 0.0, %v4745
        %v4747 = vpop.f32.mrb[0].mxu0
        %v4748 = vpop.f32.mrb[0].mxu0
        %v4749 = vadd.f32 0.0, %v4748
        %v4750 = vpop.f32.mrb[0].mxu0
        %4751 = vdwg.mxu0
        %v4752 = vadd.f32 %v4695, %v4746
        %v4753 = vadd.f32 %v4696, %v4749
        %v4754 = vadd.f32 %v4752, %v763
        %v4755 = vadd.f32 %v4753, %v763
        %v4756 = vmin.f32 %v4754, 0.0
        %v4757 = vmin.f32 %v4755, 0.0
        %v4758 = vmul.f32 %v4756, 1.442695
        %v4759 = vpow.pop %v4758
        %v4760 = vmul.f32 %v4757, 1.442695
        %v4761 = vpow.pop %v4760
        %v4762 = vsub.f32 %v4759, 1.0
        %v4763 = vsub.f32 %v4761, 1.0
        %vm4764 = vcmp.gt.f32.partialorder %v4754, 0.0
        %vm4765 = vcmp.gt.f32.partialorder %v4755, 0.0
        %v4766 = vsel %vm4764, %v4754, %v4762
        %v4767 = vsel %vm4765, %v4755, %v4763
        %s4768 = scalar_lea.vmem %s177, 112 [#allocation2]
        %4769 = vst [vmem:[%s4768] sm:$0xff] %v4766
        %4770 = vst [vmem:[%s4768 + $0x8] sm:$0xff] %v4767
        %s4771 = sand.u32 %s107, 1
        %s4772 = scalar_lea.sflag [#allocation3], %s4771
        %s4773 = sand.u32 %s107, 1
        %s4774 = smul.addr %s4773, 128
        %s4775 = scalar_lea.vmem [#allocation2], %s4774
        // Predicated region
        $region33: #{tpu_custom_call.1} parent=31 // pred_check
          %p4776 = pneg %p117
        $region34: #{tpu_custom_call.1} parent=31 // pred_check_branch
          %4778 = sbr.rel (%p4776) target = $region36
        $region35: #{tpu_custom_call.1} parent=31 // pred_region
          %s4779 = smul.u32 8, %s22
          %s4781 = ssub.s32 2048, 2048
          %4782 = vsyncadd %s4772, %s4781
          %s4783 = smul.addr %s4779, 2
          %s4784 = smul.addr %s21, 32
          %s4785 = sadd.s32 %s4783, %s4784
          %s4786 = smul.addr %s4785, 128
          %s4787 = scalar_lea.hbm %s3, %s4786
          %s4788 = sshll.u32 %s4775, 4
          %s4789 = int_to_ptr.vmem [resolvable:$true] %s4788
          %4794 = dma.vmem_to_hbm [thread:$0]  %s4789, 2048, %s4787, %s4772, 128, 128, 8
        $region36: #{tpu_custom_call.1} parent=31 // pred_fallthru
          _
      $region32: #{tpu_custom_call.1} parent=5 // pred_fallthru
        _
      %p4795 = scmp.le.s32.totalorder 2, %s12
      // Predicated region
      $region37: #{tpu_custom_call.1} parent=5 // pred_check
        %p4796 = pneg %p4795
      $region38: #{tpu_custom_call.1} parent=5 // pred_check_branch
        %4798 = sbr.rel (%p4796) target = $region40
      $region39: #{tpu_custom_call.1} parent=5 // pred_region
        %s4799 = ssub.s32 %s12, 2
        // Predicated region
        $region41: #{tpu_custom_call.1} parent=39 // pred_check
          %p4800 = pneg %p123
        $region42: #{tpu_custom_call.1} parent=39 // pred_check_branch
          %4802 = sbr.rel (%p4800) target = $region44
        $region43: #{tpu_custom_call.1} parent=39 // pred_region
          %s4803 = sand.u32 %s108, 1
          %s4804 = scalar_lea.sflag [#allocation3], %s4803
          %s4805 = sand.u32 %s108, 1
          %s4806 = smul.addr %s4805, 128
          %s4807 = scalar_lea.vmem [#allocation2], %s4806
          %4808 = dma.done %s4804, 2048
        $region44: #{tpu_custom_call.1} parent=39 // pred_fallthru
          _
      $region40: #{tpu_custom_call.1} parent=5 // pred_fallthru
        _
    $region6: #{tpu_custom_call.1} parent=1 // loop_footer
      %s16 = sadd.s32 1, %s12
    $region7: #{tpu_custom_call.1} parent=1 // loop_footer_branch
      %11 = sbr.rel target = $region3
    $region8: #{tpu_custom_call.1} parent=1 // loop_exit
      _
    %4809 = vsyncpa [#allocation3], 1
    %s4810 = scalar_lea.sflag [#allocation3], 1
    %4811 = vsyncpa %s4810, 1

</llo_original>
